<compile_context>
chip_gen: v6e
topology: v6e:2x2x1
jax: 0.10.0
libtpu: 0.0.40
codegen_flags: <defaults>
</compile_context>

<pallas_src>
import functools

import jax
import jax.numpy as jnp
from jax import lax
from jax.experimental import pallas as pl
from jax.experimental.pallas import tpu as pltpu


# ---------------------------------------------------------------------------
# The fused ANP forward kernel (one grid step = `tb` batch elements)
# ---------------------------------------------------------------------------

def _anp_fused_kernel(cxy_ref, cx_ref, tx_ref, eps_ref, *refs,
                      n_w_slabs, wmap, bias_off, tb, nc, nt,
                      n_enc, n_qk, n_dec, hid, z_dim, y_dim,
                      use_self_attention, use_deter_path):
    w_slabs = refs[:n_w_slabs]
    b_ref = refs[n_w_slabs]
    out_ref = refs[n_w_slabs + 1]

    def W(name):
        si, i = wmap[name]
        return w_slabs[si][i]                     # (in, out) f32, static index

    def Bv(name):
        off, width = bias_off[name]               # 128-aligned lane offset
        return b_ref[:, off:off + width]          # (1, width)

    def dense(x, name, relu):
        y = jnp.dot(x, W(name), preferred_element_type=jnp.float32) + Bv(name)
        return jnp.maximum(y, 0.0) if relu else y

    def attend(q, k, v):
        """'dot' attention: softmax(q k^T / sqrt(dk)) v (exact softmax)."""
        scale = 1.0 / float(q.shape[-1]) ** 0.5
        # NT-form matmul: contract last axes directly (no explicit k transpose).
        s = lax.dot_general(q, k, (((1,), (1,)), ((), ())),
                            preferred_element_type=jnp.float32) * scale
        s = s - jnp.max(s, axis=-1, keepdims=True)
        p = jnp.exp(s)
        p = p / jnp.sum(p, axis=-1, keepdims=True)
        return jnp.dot(p, v, preferred_element_type=jnp.float32)

    cxy = cxy_ref[...]                            # (tb*nc, x+y)
    cx = cx_ref[...]                              # (tb*nc, x)
    tx = tx_ref[...]                              # (tb*nt, x)
    eps = eps_ref[0]                              # (tb, z)  rsample noise

    # ---------------- Merged latent || deterministic encoder MLP ----------------
    # Layer 0 is the lane-concat of the two weight matrices; deeper layers are
    # block-diagonal, so the two streams stay independent (ReLU hidden, linear last).
    a = cxy
    for i in range(n_enc):
        a = dense(a, f"enc_{i}", relu=(i < n_enc - 1))
    h_lat = a[:, :hid]                            # (tb*nc, hid)
    h_det = a[:, hid:2 * hid]                     # (tb*nc, hid)

    # ---------------- q / k projection MLPs (cross_attention_rep='mlp') ---------
    if use_deter_path:
        q = tx
        k = cx
        for i in range(n_qk):
            relu = i < n_qk - 1
            q = dense(q, f"q_{i}", relu=relu)     # (tb*nt, hid)
            k = dense(k, f"k_{i}", relu=relu)     # (tb*nc, hid)

    # ---------------- Per-batch-element attentions (static TB-unrolled loop) ----
    s_rows = []
    rep_rows = []
    for t in range(tb):
        c0, c1 = t * nc, (t + 1) * nc
        t0, t1 = t * nt, (t + 1) * nt
        hl = h_lat[c0:c1, :]
        hl = attend(hl, hl, hl)                   # latent self-attn (always on in ref)
        s_rows.append(jnp.mean(hl, axis=0, keepdims=True))       # (1, hid)
        if use_deter_path:
            hd = h_det[c0:c1, :]
            if use_self_attention:
                hd = attend(hd, hd, hd)
            rep_rows.append(attend(q[t0:t1, :], k[c0:c1, :], hd))  # (nt, hid)
    s = jnp.concatenate(s_rows, axis=0)           # (tb, hid)
    if use_deter_path:
        rep = jnp.concatenate(rep_rows, axis=0)   # (tb*nt, hid)
    else:
        rep = jnp.zeros((tb * nt, hid), jnp.float32)

    # ---------------- Latent head -> prior -> reparameterized z -----------------
    s = dense(s, "lat_penult", relu=True)
    ms = dense(s, "lat_head", relu=False)         # merged mu || sigma head, (tb, 2z)
    prior_mu = ms[:, :z_dim]
    prior_sigma = 0.1 + 0.9 / (1.0 + jnp.exp(-ms[:, z_dim:]))     # 0.1 + 0.9*sigmoid
    z = prior_mu + prior_sigma * eps              # (tb, z)

    # z broadcast over the nt target rows of each batch element (no repeat in HBM).
    z_full = jnp.concatenate(
        [jnp.broadcast_to(z[t:t + 1, :], (nt, z_dim)) for t in range(tb)], axis=0)

    # ---------------- Decoder ----------------------------------------------------
    # First layer consumes concat(rep, z, tx) via split weight slabs.
    d = (jnp.dot(rep, W("dec0_r"), preferred_element_type=jnp.float32)
         + jnp.dot(z_full, W("dec0_z"), preferred_element_type=jnp.float32)
         + jnp.dot(tx, W("dec0_x"), preferred_element_type=jnp.float32)
         + Bv("dec0_r"))
    d = jnp.maximum(d, 0.0)
    for i in range(1, n_dec):
        d = dense(d, f"dec_{i}", relu=(i < n_dec - 1))            # (tb*nt, 2*y)

    mu = d[:, :y_dim]
    ls = d[:, y_dim:]
    softplus = jnp.maximum(ls, 0.0) + jnp.log(1.0 + jnp.exp(-jnp.abs(ls)))
    sigma = 0.1 + 0.9 * softplus

    # One packed, lane-dense store: (tb*nt, 2*y) = mu || sigma.
    out_ref[...] = jnp.concatenate([mu, sigma], axis=-1)


# ---------------------------------------------------------------------------
# Parameter init (deterministic, synthetic) — same layout as the PyTorch module
# ---------------------------------------------------------------------------

def _dense_init(key, fan_in, fan_out):
    w = jax.random.normal(key, (fan_in, fan_out), jnp.float32) / jnp.sqrt(
        jnp.float32(fan_in))
    b = jnp.zeros((fan_out,), jnp.float32)
    return (w, b)


def _mlp_init(key, dims):
    keys = jax.random.split(key, len(dims) - 1)
    return [_dense_init(k, dims[i], dims[i + 1]) for i, k in enumerate(keys)]


def init_params(key, cfg):
    x_dim, y_dim, z_dim = cfg["x_dim"], cfg["y_dim"], cfg["z_dim"]
    h = cfg["mlp_hidden_size_list"]
    hid = h[-1]
    ks = jax.random.split(key, 8)
    return {
        # LatentEncoder
        "lat_mlp": _mlp_init(ks[0], [x_dim + y_dim] + h),
        "lat_penult": _dense_init(ks[1], hid, hid),
        "lat_mu": _dense_init(ks[2], hid, z_dim),
        "lat_sigma": _dense_init(ks[3], hid, z_dim),
        # DeterministicEncoder
        "det_mlp": _mlp_init(ks[4], [x_dim + y_dim] + h),
        "det_q": _mlp_init(ks[5], [x_dim] + h),      # cross_attention_rep='mlp'
        "det_k": _mlp_init(ks[6], [x_dim] + h),
        # Decoder
        "dec_mlp": _mlp_init(ks[7], [hid + z_dim + x_dim] + h + [2 * y_dim]),
    }


# ---------------------------------------------------------------------------
# Weight repacking: merge heads, merge lat/det encoder, pack into a few slabs
# ---------------------------------------------------------------------------

def build_kernel_params(params, cfg):
    x_dim, y_dim, z_dim = cfg["x_dim"], cfg["y_dim"], cfg["z_dim"]
    hs = cfg["mlp_hidden_size_list"]
    hid = hs[-1]
    f32 = jnp.float32

    weights, biases = {}, {}

    def add(name, w, b=None):
        weights[name] = w.astype(f32)
        if b is not None:
            biases[name] = b.astype(f32)

    # Merged latent + deterministic encoder MLP (same input concat(cx, cy)):
    # layer 0 lane-concat, deeper layers block-diagonal.
    for i, ((lw, lb), (dw, db)) in enumerate(zip(params["lat_mlp"],
                                                 params["det_mlp"])):
        if i == 0:
            w = jnp.concatenate([lw, dw], axis=1)
        else:
            top = jnp.concatenate(
                [lw, jnp.zeros((lw.shape[0], dw.shape[1]), f32)], axis=1)
            bot = jnp.concatenate(
                [jnp.zeros((dw.shape[0], lw.shape[1]), f32), dw], axis=1)
            w = jnp.concatenate([top, bot], axis=0)
        add(f"enc_{i}", w, jnp.concatenate([lb, db], axis=0))

    add("lat_penult", *params["lat_penult"])
    (mw, mb), (sw, sb) = params["lat_mu"], params["lat_sigma"]
    add("lat_head", jnp.concatenate([mw, sw], axis=1),
        jnp.concatenate([mb, sb], axis=0))

    for i, (w, b) in enumerate(params["det_q"]):
        add(f"q_{i}", w, b)
    for i, (w, b) in enumerate(params["det_k"]):
        add(f"k_{i}", w, b)

    # Decoder first layer split into (representation | z | target_x) slabs.
    w0, b0 = params["dec_mlp"][0]
    add("dec0_r", w0[:hid], b0)
    add("dec0_z", w0[hid:hid + z_dim])
    add("dec0_x", w0[hid + z_dim:])
    for i, (w, b) in enumerate(params["dec_mlp"][1:], start=1):
        add(f"dec_{i}", w, b)

    # ---- pack weights: group identically-shaped matrices into stacked slabs ----
    groups = {}
    for name in sorted(weights):
        groups.setdefault(tuple(weights[name].shape), []).append(name)
    slabs, wmap = [], {}
    for si, shape in enumerate(sorted(groups)):
        names = groups[shape]
        slabs.append(jnp.stack([weights[n] for n in names], axis=0))
        for idx, n in enumerate(names):
            wmap[n] = (si, idx)

    # ---- pack biases: one lane-dense row, each bias at a 128-aligned offset ----
    segs, bias_off, off = [], {}, 0
    for name in sorted(biases):
        b = biases[name]
        width = int(b.shape[0])
        padded = -(-width // 128) * 128
        segs.append(jnp.concatenate([b, jnp.zeros((padded - width,), f32)]))
        bias_off[name] = (off, width)
        off += padded
    bias_row = jnp.concatenate(segs).reshape(1, off)

    return slabs, bias_row, wmap, bias_off


# ---------------------------------------------------------------------------
# Forward (eval mode, target_y=None)
# ---------------------------------------------------------------------------

def anp_forward(params, query, eps_key, cfg, batch_tile=None):
    """Returns (mu, sigma, None, None, None) — eval-mode ANP forward."""
    context_x, context_y, target_x = query
    B, Nt, x_dim = target_x.shape
    _, Nc, _ = context_x.shape
    y_dim, z_dim = cfg["y_dim"], cfg["z_dim"]
    hs = cfg["mlp_hidden_size_list"]
    hid = hs[-1]

    if batch_tile is None:
        # Fold several batch elements into each grid step (amortizes per-step
        # overhead, doubles matmul sublane occupancy) while keeping >= 2 grid
        # steps when possible so both v7x TensorCores get work.
        batch_tile = B // 2 if (B % 2 == 0 and B >= 2) else B
        if (batch_tile * Nc) % 8 or (batch_tile * Nt) % 8:
            batch_tile = B      # keep second-minor block dims tile-friendly
    assert B % batch_tile == 0, "batch must be divisible by batch_tile"
    tb = batch_tile
    grid = (B // tb,)

    # Wrapper-side layout plumbing only: concat(context_x, context_y), collapse
    # (B, N, F) -> (B*N, F), and draw the prior-sample noise.
    cxy = jnp.concatenate([context_x, context_y],
                          axis=-1).reshape(B * Nc, x_dim + y_dim)
    cx2 = context_x.reshape(B * Nc, x_dim)
    tx2 = target_x.reshape(B * Nt, x_dim)
    eps = jax.random.normal(eps_key, (B // tb, tb, z_dim), jnp.float32)

    w_slabs, bias_row, wmap, bias_off = build_kernel_params(params, cfg)

    data_specs = [
        pl.BlockSpec((tb * Nc, x_dim + y_dim), lambda b: (b, 0)),
        pl.BlockSpec((tb * Nc, x_dim), lambda b: (b, 0)),
        pl.BlockSpec((tb * Nt, x_dim), lambda b: (b, 0)),
        pl.BlockSpec((1, tb, z_dim), lambda b: (b, 0, 0)),
    ]
    # Weights / biases: full-block, grid-invariant — DMA'd once, VMEM-resident
    # across all grid steps.
    # TODO(synk): could request single-buffering (pipeline_mode=pl.Buffered(1))
    # for these grid-invariant blocks; default double-buffering is harmless here.
    param_specs = []
    for p in list(w_slabs) + [bias_row]:
        nd = p.ndim
        param_specs.append(pl.BlockSpec(p.shape, lambda b, _nd=nd: (0,) * _nd))

    out_shape = jax.ShapeDtypeStruct((B * Nt, 2 * y_dim), jnp.float32)
    out_spec = pl.BlockSpec((tb * Nt, 2 * y_dim), lambda b: (b, 0))

    kernel = functools.partial(
        _anp_fused_kernel,
        n_w_slabs=len(w_slabs), wmap=wmap, bias_off=bias_off,
        tb=tb, nc=Nc, nt=Nt,
        n_enc=len(hs), n_qk=len(hs), n_dec=len(hs) + 1,
        hid=hid, z_dim=z_dim, y_dim=y_dim,
        use_self_attention=cfg["use_self_attention"],
        use_deter_path=cfg["use_deter_path"])

    # TODO(synk): on v7x, pltpu.CORE_PARALLEL here would explicitly split the batch
    # axis across the 2 TensorCores; "parallel" kept for v5e/v6e portability.
    # TODO(synk): if Nc/Nt grow toward ~2k (v7x) / ~4k (v5e/v6e), switch the
    # in-kernel attentions to a KV-tiled flash-style loop on an "arbitrary" axis.
    out = pl.pallas_call(
        kernel,
        out_shape=out_shape,
        grid=grid,
        in_specs=data_specs + param_specs,
        out_specs=out_spec,
        compiler_params=pltpu.CompilerParams(
            dimension_semantics=("parallel",)),
    )(cxy, cx2, tx2, eps, *w_slabs, bias_row)

    out = out.reshape(B, Nt, 2 * y_dim)
    mu = out[..., :y_dim]
    sigma = out[..., y_dim:]
    # TODO(synk): training-mode loss / KL (anp_utils.compute_loss) not needed in eval path.
    return mu, sigma, None, None, None


# ---------------------------------------------------------------------------
# Main
# ---------------------------------------------------------------------------

if __name__ == "__main__":
    cfg = dict(
        x_dim=3,
        y_dim=1,
        z_dim=32,
        mlp_hidden_size_list=[32, 32],
        use_self_attention=True,
        use_deter_path=True,
        self_attention_type="dot",
        cross_attention_type="dot",
        cross_attention_rep="mlp",
    )
    B, Nc, Nt = 4, 8, 8

    key = jax.random.PRNGKey(0)
    k_cx, k_cy, k_tx, k_eps, k_par = jax.random.split(key, 5)
    context_x = jax.random.normal(k_cx, (B, Nc, cfg["x_dim"]), jnp.float32)
    context_y = jax.random.normal(k_cy, (B, Nc, cfg["y_dim"]), jnp.float32)
    target_x = jax.random.normal(k_tx, (B, Nt, cfg["x_dim"]), jnp.float32)

    params = init_params(k_par, cfg)

    fwd = jax.jit(lambda p, q, ek: anp_forward(p, q, ek, cfg))
    mu, sigma, log_prob, kld, loss = fwd(
        params, (context_x, context_y, target_x), k_eps)
    jax.block_until_ready((mu, sigma))

    assert mu.shape == (B, Nt, cfg["y_dim"])
    assert sigma.shape == (B, Nt, cfg["y_dim"])
    assert bool(jnp.all(sigma > 0.1)) and bool(jnp.all(jnp.isfinite(mu)))
    print("KERNEL_OK")
</pallas_src>

<mosaic_0001>
module attributes {stable_mosaic.version = 11 : i64} {
  func.func @_anp_fused_kernel(%arg0: i32, %arg1: memref<16x4xf32, #tpu.memory_space<vmem>>, %arg2: memref<16x3xf32, #tpu.memory_space<vmem>>, %arg3: memref<16x3xf32, #tpu.memory_space<vmem>>, %arg4: memref<1x2x32xf32, #tpu.memory_space<vmem>>, %arg5: memref<3x3x32xf32, #tpu.memory_space<vmem>>, %arg6: memref<1x4x64xf32, #tpu.memory_space<vmem>>, %arg7: memref<1x32x2xf32, #tpu.memory_space<vmem>>, %arg8: memref<6x32x32xf32, #tpu.memory_space<vmem>>, %arg9: memref<1x32x64xf32, #tpu.memory_space<vmem>>, %arg10: memref<1x64x64xf32, #tpu.memory_space<vmem>>, %arg11: memref<1x1408xf32, #tpu.memory_space<vmem>>, %arg12: memref<16x2xf32, #tpu.memory_space<vmem>>) attributes {dimension_semantics = [#tpu.dimension_semantics<parallel>], iteration_bounds = array<i64: 2>, scalar_prefetch = 0 : i64, scratch_operands = 0 : i64, tpu.core_type = #tpu.core_type<tc>, window_params = [{transform_indices = @transform_0, window_bounds = array<i64: 16, 4>}, {transform_indices = @transform_1, window_bounds = array<i64: 16, 3>}, {transform_indices = @transform_2, window_bounds = array<i64: 16, 3>}, {transform_indices = @transform_3, window_bounds = array<i64: 1, 2, 32>}, {pipeline_mode = #tpu.pipeline_mode<synchronous>, transform_indices = @transform_4, window_bounds = array<i64: 3, 3, 32>}, {pipeline_mode = #tpu.pipeline_mode<synchronous>, transform_indices = @transform_5, window_bounds = array<i64: 1, 4, 64>}, {pipeline_mode = #tpu.pipeline_mode<synchronous>, transform_indices = @transform_6, window_bounds = array<i64: 1, 32, 2>}, {pipeline_mode = #tpu.pipeline_mode<synchronous>, transform_indices = @transform_7, window_bounds = array<i64: 6, 32, 32>}, {pipeline_mode = #tpu.pipeline_mode<synchronous>, transform_indices = @transform_8, window_bounds = array<i64: 1, 32, 64>}, {pipeline_mode = #tpu.pipeline_mode<synchronous>, transform_indices = @transform_9, window_bounds = array<i64: 1, 64, 64>}, {pipeline_mode = #tpu.pipeline_mode<synchronous>, transform_indices = @transform_10, window_bounds = array<i64: 1, 1408>}, {transform_indices = @transform_11, window_bounds = array<i64: 16, 2>}]} {
    %c0 = arith.constant 0 : index
    %c0_0 = arith.constant 0 : index
    %0 = vector.load %arg1[%c0, %c0_0] : memref<16x4xf32, #tpu.memory_space<vmem>>, vector<16x4xf32>
    %c0_1 = arith.constant 0 : index
    %c0_2 = arith.constant 0 : index
    %1 = vector.load %arg2[%c0_1, %c0_2] : memref<16x3xf32, #tpu.memory_space<vmem>>, vector<16x3xf32>
    %c0_3 = arith.constant 0 : index
    %c0_4 = arith.constant 0 : index
    %2 = vector.load %arg3[%c0_3, %c0_4] : memref<16x3xf32, #tpu.memory_space<vmem>>, vector<16x3xf32>
    %c0_5 = arith.constant 0 : index
    %c0_6 = arith.constant 0 : index
    %c0_7 = arith.constant 0 : index
    %3 = vector.load %arg4[%c0_5, %c0_6, %c0_7] : memref<1x2x32xf32, #tpu.memory_space<vmem>>, vector<1x2x32xf32>
    %4 = vector.shape_cast %3 : vector<1x2x32xf32> to vector<2x32xf32>
    %c0_8 = arith.constant 0 : index
    %c0_9 = arith.constant 0 : index
    %c0_10 = arith.constant 0 : index
    %5 = vector.load %arg6[%c0_8, %c0_9, %c0_10] : memref<1x4x64xf32, #tpu.memory_space<vmem>>, vector<1x4x64xf32>
    %6 = vector.shape_cast %5 : vector<1x4x64xf32> to vector<4x64xf32>
    %cst = arith.constant dense<0.000000e+00> : vector<16x64xf32>
    %7 = tpu.matmul %0, %6, %cst {dimension_numbers = #tpu.dot_dimension_numbers<[1], [0], [0], [1], [0, 0, 1, 1], [], []>} : vector<16x4xf32>, vector<4x64xf32>, vector<16x64xf32> -> vector<16x64xf32>
    %c0_11 = arith.constant 0 : index
    %c384 = arith.constant 384 : index
    %8 = vector.load %arg11[%c0_11, %c384] : memref<1x1408xf32, #tpu.memory_space<vmem>>, vector<1x64xf32>
    %9 = vector.broadcast %8 : vector<1x64xf32> to vector<16x64xf32>
    %10 = arith.addf %7, %9 : vector<16x64xf32>
    %cst_12 = arith.constant 0.000000e+00 : f32
    %11 = vector.broadcast %cst_12 : f32 to vector<16x64xf32>
    %12 = arith.maximumf %10, %11 : vector<16x64xf32>
    %c0_13 = arith.constant 0 : index
    %c0_14 = arith.constant 0 : index
    %c0_15 = arith.constant 0 : index
    %13 = vector.load %arg10[%c0_13, %c0_14, %c0_15] : memref<1x64x64xf32, #tpu.memory_space<vmem>>, vector<1x64x64xf32>
    %14 = vector.shape_cast %13 : vector<1x64x64xf32> to vector<64x64xf32>
    %cst_16 = arith.constant dense<0.000000e+00> : vector<16x64xf32>
    %15 = tpu.matmul %12, %14, %cst_16 {dimension_numbers = #tpu.dot_dimension_numbers<[1], [0], [0], [1], [0, 0, 1, 1], [], []>} : vector<16x64xf32>, vector<64x64xf32>, vector<16x64xf32> -> vector<16x64xf32>
    %c0_17 = arith.constant 0 : index
    %c512 = arith.constant 512 : index
    %16 = vector.load %arg11[%c0_17, %c512] : memref<1x1408xf32, #tpu.memory_space<vmem>>, vector<1x64xf32>
    %17 = vector.broadcast %16 : vector<1x64xf32> to vector<16x64xf32>
    %18 = arith.addf %15, %17 : vector<16x64xf32>
    %19 = vector.extract_strided_slice %18 {offsets = [0, 0], sizes = [16, 32], strides = [1, 1]} : vector<16x64xf32> to vector<16x32xf32>
    %20 = vector.extract_strided_slice %18 {offsets = [0, 32], sizes = [16, 32], strides = [1, 1]} : vector<16x64xf32> to vector<16x32xf32>
    %c2 = arith.constant 2 : index
    %c0_18 = arith.constant 0 : index
    %c0_19 = arith.constant 0 : index
    %21 = vector.load %arg5[%c2, %c0_18, %c0_19] : memref<3x3x32xf32, #tpu.memory_space<vmem>>, vector<1x3x32xf32>
    %22 = vector.shape_cast %21 : vector<1x3x32xf32> to vector<3x32xf32>
    %cst_20 = arith.constant dense<0.000000e+00> : vector<16x32xf32>
    %23 = tpu.matmul %2, %22, %cst_20 {dimension_numbers = #tpu.dot_dimension_numbers<[1], [0], [0], [1], [0, 0, 1, 1], [], []>} : vector<16x3xf32>, vector<3x32xf32>, vector<16x32xf32> -> vector<16x32xf32>
    %c0_21 = arith.constant 0 : index
    %c1152 = arith.constant 1152 : index
    %24 = vector.load %arg11[%c0_21, %c1152] : memref<1x1408xf32, #tpu.memory_space<vmem>>, vector<1x32xf32>
    %25 = vector.broadcast %24 : vector<1x32xf32> to vector<16x32xf32>
    %26 = arith.addf %23, %25 : vector<16x32xf32>
    %cst_22 = arith.constant 0.000000e+00 : f32
    %27 = vector.broadcast %cst_22 : f32 to vector<16x32xf32>
    %28 = arith.maximumf %26, %27 : vector<16x32xf32>
    %c1 = arith.constant 1 : index
    %c0_23 = arith.constant 0 : index
    %c0_24 = arith.constant 0 : index
    %29 = vector.load %arg5[%c1, %c0_23, %c0_24] : memref<3x3x32xf32, #tpu.memory_space<vmem>>, vector<1x3x32xf32>
    %30 = vector.shape_cast %29 : vector<1x3x32xf32> to vector<3x32xf32>
    %cst_25 = arith.constant dense<0.000000e+00> : vector<16x32xf32>
    %31 = tpu.matmul %1, %30, %cst_25 {dimension_numbers = #tpu.dot_dimension_numbers<[1], [0], [0], [1], [0, 0, 1, 1], [], []>} : vector<16x3xf32>, vector<3x32xf32>, vector<16x32xf32> -> vector<16x32xf32>
    %c0_26 = arith.constant 0 : index
    %c640 = arith.constant 640 : index
    %32 = vector.load %arg11[%c0_26, %c640] : memref<1x1408xf32, #tpu.memory_space<vmem>>, vector<1x32xf32>
    %33 = vector.broadcast %32 : vector<1x32xf32> to vector<16x32xf32>
    %34 = arith.addf %31, %33 : vector<16x32xf32>
    %cst_27 = arith.constant 0.000000e+00 : f32
    %35 = vector.broadcast %cst_27 : f32 to vector<16x32xf32>
    %36 = arith.maximumf %34, %35 : vector<16x32xf32>
    %c5 = arith.constant 5 : index
    %c0_28 = arith.constant 0 : index
    %c0_29 = arith.constant 0 : index
    %37 = vector.load %arg8[%c5, %c0_28, %c0_29] : memref<6x32x32xf32, #tpu.memory_space<vmem>>, vector<1x32x32xf32>
    %38 = vector.shape_cast %37 : vector<1x32x32xf32> to vector<32x32xf32>
    %cst_30 = arith.constant dense<0.000000e+00> : vector<16x32xf32>
    %39 = tpu.matmul %28, %38, %cst_30 {dimension_numbers = #tpu.dot_dimension_numbers<[1], [0], [0], [1], [0, 0, 1, 1], [], []>} : vector<16x32xf32>, vector<32x32xf32>, vector<16x32xf32> -> vector<16x32xf32>
    %c0_31 = arith.constant 0 : index
    %c1280 = arith.constant 1280 : index
    %40 = vector.load %arg11[%c0_31, %c1280] : memref<1x1408xf32, #tpu.memory_space<vmem>>, vector<1x32xf32>
    %41 = vector.broadcast %40 : vector<1x32xf32> to vector<16x32xf32>
    %42 = arith.addf %39, %41 : vector<16x32xf32>
    %c3 = arith.constant 3 : index
    %c0_32 = arith.constant 0 : index
    %c0_33 = arith.constant 0 : index
    %43 = vector.load %arg8[%c3, %c0_32, %c0_33] : memref<6x32x32xf32, #tpu.memory_space<vmem>>, vector<1x32x32xf32>
    %44 = vector.shape_cast %43 : vector<1x32x32xf32> to vector<32x32xf32>
    %cst_34 = arith.constant dense<0.000000e+00> : vector<16x32xf32>
    %45 = tpu.matmul %36, %44, %cst_34 {dimension_numbers = #tpu.dot_dimension_numbers<[1], [0], [0], [1], [0, 0, 1, 1], [], []>} : vector<16x32xf32>, vector<32x32xf32>, vector<16x32xf32> -> vector<16x32xf32>
    %c0_35 = arith.constant 0 : index
    %c768 = arith.constant 768 : index
    %46 = vector.load %arg11[%c0_35, %c768] : memref<1x1408xf32, #tpu.memory_space<vmem>>, vector<1x32xf32>
    %47 = vector.broadcast %46 : vector<1x32xf32> to vector<16x32xf32>
    %48 = arith.addf %45, %47 : vector<16x32xf32>
    %49 = vector.extract_strided_slice %19 {offsets = [0, 0], sizes = [8, 32], strides = [1, 1]} : vector<16x32xf32> to vector<8x32xf32>
    %cst_36 = arith.constant dense<0.000000e+00> : vector<8x8xf32>
    %50 = tpu.matmul %49, %49, %cst_36 {dimension_numbers = #tpu.dot_dimension_numbers<[1], [1], [0], [0], [0, 0, 1, 0], [], []>} : vector<8x32xf32>, vector<8x32xf32>, vector<8x8xf32> -> vector<8x8xf32>
    %cst_37 = arith.constant 0.176776692 : f32
    %51 = vector.broadcast %cst_37 : f32 to vector<8x8xf32>
    %52 = arith.mulf %50, %51 : vector<8x8xf32>
    %cst_38 = arith.constant dense<0xFF800000> : vector<8xf32>
    %53 = vector.multi_reduction <maximumf>, %52, %cst_38 [1] : vector<8x8xf32> to vector<8xf32>
    %54 = vector.shape_cast %53 : vector<8xf32> to vector<8x1xf32>
    %55 = vector.broadcast %54 : vector<8x1xf32> to vector<8x8xf32>
    %56 = arith.subf %52, %55 : vector<8x8xf32>
    %57 = math.exp %56 : vector<8x8xf32>
    %cst_39 = arith.constant dense<0.000000e+00> : vector<8xf32>
    %58 = vector.multi_reduction <add>, %57, %cst_39 [1] : vector<8x8xf32> to vector<8xf32>
    %59 = vector.shape_cast %58 : vector<8xf32> to vector<8x1xf32>
    %60 = vector.broadcast %59 : vector<8x1xf32> to vector<8x8xf32>
    %61 = arith.divf %57, %60 : vector<8x8xf32>
    %cst_40 = arith.constant dense<0.000000e+00> : vector<8x32xf32>
    %62 = tpu.matmul %61, %49, %cst_40 {dimension_numbers = #tpu.dot_dimension_numbers<[1], [0], [0], [1], [0, 0, 1, 1], [], []>} : vector<8x8xf32>, vector<8x32xf32>, vector<8x32xf32> -> vector<8x32xf32>
    %cst_41 = arith.constant dense<0.000000e+00> : vector<32xf32>
    %63 = vector.multi_reduction <add>, %62, %cst_41 [0] : vector<8x32xf32> to vector<32xf32>
    %64 = vector.shape_cast %63 : vector<32xf32> to vector<1x32xf32>
    %cst_42 = arith.constant 8.000000e+00 : f32
    %65 = vector.broadcast %cst_42 : f32 to vector<1x32xf32>
    %66 = arith.divf %64, %65 : vector<1x32xf32>
    %67 = vector.extract_strided_slice %20 {offsets = [0, 0], sizes = [8, 32], strides = [1, 1]} : vector<16x32xf32> to vector<8x32xf32>
    %cst_43 = arith.constant dense<0.000000e+00> : vector<8x8xf32>
    %68 = tpu.matmul %67, %67, %cst_43 {dimension_numbers = #tpu.dot_dimension_numbers<[1], [1], [0], [0], [0, 0, 1, 0], [], []>} : vector<8x32xf32>, vector<8x32xf32>, vector<8x8xf32> -> vector<8x8xf32>
    %cst_44 = arith.constant 0.176776692 : f32
    %69 = vector.broadcast %cst_44 : f32 to vector<8x8xf32>
    %70 = arith.mulf %68, %69 : vector<8x8xf32>
    %cst_45 = arith.constant dense<0xFF800000> : vector<8xf32>
    %71 = vector.multi_reduction <maximumf>, %70, %cst_45 [1] : vector<8x8xf32> to vector<8xf32>
    %72 = vector.shape_cast %71 : vector<8xf32> to vector<8x1xf32>
    %73 = vector.broadcast %72 : vector<8x1xf32> to vector<8x8xf32>
    %74 = arith.subf %70, %73 : vector<8x8xf32>
    %75 = math.exp %74 : vector<8x8xf32>
    %cst_46 = arith.constant dense<0.000000e+00> : vector<8xf32>
    %76 = vector.multi_reduction <add>, %75, %cst_46 [1] : vector<8x8xf32> to vector<8xf32>
    %77 = vector.shape_cast %76 : vector<8xf32> to vector<8x1xf32>
    %78 = vector.broadcast %77 : vector<8x1xf32> to vector<8x8xf32>
    %79 = arith.divf %75, %78 : vector<8x8xf32>
    %cst_47 = arith.constant dense<0.000000e+00> : vector<8x32xf32>
    %80 = tpu.matmul %79, %67, %cst_47 {dimension_numbers = #tpu.dot_dimension_numbers<[1], [0], [0], [1], [0, 0, 1, 1], [], []>} : vector<8x8xf32>, vector<8x32xf32>, vector<8x32xf32> -> vector<8x32xf32>
    %81 = vector.extract_strided_slice %42 {offsets = [0, 0], sizes = [8, 32], strides = [1, 1]} : vector<16x32xf32> to vector<8x32xf32>
    %82 = vector.extract_strided_slice %48 {offsets = [0, 0], sizes = [8, 32], strides = [1, 1]} : vector<16x32xf32> to vector<8x32xf32>
    %cst_48 = arith.constant dense<0.000000e+00> : vector<8x8xf32>
    %83 = tpu.matmul %81, %82, %cst_48 {dimension_numbers = #tpu.dot_dimension_numbers<[1], [1], [0], [0], [0, 0, 1, 0], [], []>} : vector<8x32xf32>, vector<8x32xf32>, vector<8x8xf32> -> vector<8x8xf32>
    %cst_49 = arith.constant 0.176776692 : f32
    %84 = vector.broadcast %cst_49 : f32 to vector<8x8xf32>
    %85 = arith.mulf %83, %84 : vector<8x8xf32>
    %cst_50 = arith.constant dense<0xFF800000> : vector<8xf32>
    %86 = vector.multi_reduction <maximumf>, %85, %cst_50 [1] : vector<8x8xf32> to vector<8xf32>
    %87 = vector.shape_cast %86 : vector<8xf32> to vector<8x1xf32>
    %88 = vector.broadcast %87 : vector<8x1xf32> to vector<8x8xf32>
    %89 = arith.subf %85, %88 : vector<8x8xf32>
    %90 = math.exp %89 : vector<8x8xf32>
    %cst_51 = arith.constant dense<0.000000e+00> : vector<8xf32>
    %91 = vector.multi_reduction <add>, %90, %cst_51 [1] : vector<8x8xf32> to vector<8xf32>
    %92 = vector.shape_cast %91 : vector<8xf32> to vector<8x1xf32>
    %93 = vector.broadcast %92 : vector<8x1xf32> to vector<8x8xf32>
    %94 = arith.divf %90, %93 : vector<8x8xf32>
    %cst_52 = arith.constant dense<0.000000e+00> : vector<8x32xf32>
    %95 = tpu.matmul %94, %80, %cst_52 {dimension_numbers = #tpu.dot_dimension_numbers<[1], [0], [0], [1], [0, 0, 1, 1], [], []>} : vector<8x8xf32>, vector<8x32xf32>, vector<8x32xf32> -> vector<8x32xf32>
    %96 = vector.extract_strided_slice %19 {offsets = [8, 0], sizes = [8, 32], strides = [1, 1]} : vector<16x32xf32> to vector<8x32xf32>
    %cst_53 = arith.constant dense<0.000000e+00> : vector<8x8xf32>
    %97 = tpu.matmul %96, %96, %cst_53 {dimension_numbers = #tpu.dot_dimension_numbers<[1], [1], [0], [0], [0, 0, 1, 0], [], []>} : vector<8x32xf32>, vector<8x32xf32>, vector<8x8xf32> -> vector<8x8xf32>
    %cst_54 = arith.constant 0.176776692 : f32
    %98 = vector.broadcast %cst_54 : f32 to vector<8x8xf32>
    %99 = arith.mulf %97, %98 : vector<8x8xf32>
    %cst_55 = arith.constant dense<0xFF800000> : vector<8xf32>
    %100 = vector.multi_reduction <maximumf>, %99, %cst_55 [1] : vector<8x8xf32> to vector<8xf32>
    %101 = vector.shape_cast %100 : vector<8xf32> to vector<8x1xf32>
    %102 = vector.broadcast %101 : vector<8x1xf32> to vector<8x8xf32>
    %103 = arith.subf %99, %102 : vector<8x8xf32>
    %104 = math.exp %103 : vector<8x8xf32>
    %cst_56 = arith.constant dense<0.000000e+00> : vector<8xf32>
    %105 = vector.multi_reduction <add>, %104, %cst_56 [1] : vector<8x8xf32> to vector<8xf32>
    %106 = vector.shape_cast %105 : vector<8xf32> to vector<8x1xf32>
    %107 = vector.broadcast %106 : vector<8x1xf32> to vector<8x8xf32>
    %108 = arith.divf %104, %107 : vector<8x8xf32>
    %cst_57 = arith.constant dense<0.000000e+00> : vector<8x32xf32>
    %109 = tpu.matmul %108, %96, %cst_57 {dimension_numbers = #tpu.dot_dimension_numbers<[1], [0], [0], [1], [0, 0, 1, 1], [], []>} : vector<8x8xf32>, vector<8x32xf32>, vector<8x32xf32> -> vector<8x32xf32>
    %cst_58 = arith.constant dense<0.000000e+00> : vector<32xf32>
    %110 = vector.multi_reduction <add>, %109, %cst_58 [0] : vector<8x32xf32> to vector<32xf32>
    %111 = vector.shape_cast %110 : vector<32xf32> to vector<1x32xf32>
    %cst_59 = arith.constant 8.000000e+00 : f32
    %112 = vector.broadcast %cst_59 : f32 to vector<1x32xf32>
    %113 = arith.divf %111, %112 : vector<1x32xf32>
    %114 = vector.extract_strided_slice %20 {offsets = [8, 0], sizes = [8, 32], strides = [1, 1]} : vector<16x32xf32> to vector<8x32xf32>
    %cst_60 = arith.constant dense<0.000000e+00> : vector<8x8xf32>
    %115 = tpu.matmul %114, %114, %cst_60 {dimension_numbers = #tpu.dot_dimension_numbers<[1], [1], [0], [0], [0, 0, 1, 0], [], []>} : vector<8x32xf32>, vector<8x32xf32>, vector<8x8xf32> -> vector<8x8xf32>
    %cst_61 = arith.constant 0.176776692 : f32
    %116 = vector.broadcast %cst_61 : f32 to vector<8x8xf32>
    %117 = arith.mulf %115, %116 : vector<8x8xf32>
    %cst_62 = arith.constant dense<0xFF800000> : vector<8xf32>
    %118 = vector.multi_reduction <maximumf>, %117, %cst_62 [1] : vector<8x8xf32> to vector<8xf32>
    %119 = vector.shape_cast %118 : vector<8xf32> to vector<8x1xf32>
    %120 = vector.broadcast %119 : vector<8x1xf32> to vector<8x8xf32>
    %121 = arith.subf %117, %120 : vector<8x8xf32>
    %122 = math.exp %121 : vector<8x8xf32>
    %cst_63 = arith.constant dense<0.000000e+00> : vector<8xf32>
    %123 = vector.multi_reduction <add>, %122, %cst_63 [1] : vector<8x8xf32> to vector<8xf32>
    %124 = vector.shape_cast %123 : vector<8xf32> to vector<8x1xf32>
    %125 = vector.broadcast %124 : vector<8x1xf32> to vector<8x8xf32>
    %126 = arith.divf %122, %125 : vector<8x8xf32>
    %cst_64 = arith.constant dense<0.000000e+00> : vector<8x32xf32>
    %127 = tpu.matmul %126, %114, %cst_64 {dimension_numbers = #tpu.dot_dimension_numbers<[1], [0], [0], [1], [0, 0, 1, 1], [], []>} : vector<8x8xf32>, vector<8x32xf32>, vector<8x32xf32> -> vector<8x32xf32>
    %128 = vector.extract_strided_slice %42 {offsets = [8, 0], sizes = [8, 32], strides = [1, 1]} : vector<16x32xf32> to vector<8x32xf32>
    %129 = vector.extract_strided_slice %48 {offsets = [8, 0], sizes = [8, 32], strides = [1, 1]} : vector<16x32xf32> to vector<8x32xf32>
    %cst_65 = arith.constant dense<0.000000e+00> : vector<8x8xf32>
    %130 = tpu.matmul %128, %129, %cst_65 {dimension_numbers = #tpu.dot_dimension_numbers<[1], [1], [0], [0], [0, 0, 1, 0], [], []>} : vector<8x32xf32>, vector<8x32xf32>, vector<8x8xf32> -> vector<8x8xf32>
    %cst_66 = arith.constant 0.176776692 : f32
    %131 = vector.broadcast %cst_66 : f32 to vector<8x8xf32>
    %132 = arith.mulf %130, %131 : vector<8x8xf32>
    %cst_67 = arith.constant dense<0xFF800000> : vector<8xf32>
    %133 = vector.multi_reduction <maximumf>, %132, %cst_67 [1] : vector<8x8xf32> to vector<8xf32>
    %134 = vector.shape_cast %133 : vector<8xf32> to vector<8x1xf32>
    %135 = vector.broadcast %134 : vector<8x1xf32> to vector<8x8xf32>
    %136 = arith.subf %132, %135 : vector<8x8xf32>
    %137 = math.exp %136 : vector<8x8xf32>
    %cst_68 = arith.constant dense<0.000000e+00> : vector<8xf32>
    %138 = vector.multi_reduction <add>, %137, %cst_68 [1] : vector<8x8xf32> to vector<8xf32>
    %139 = vector.shape_cast %138 : vector<8xf32> to vector<8x1xf32>
    %140 = vector.broadcast %139 : vector<8x1xf32> to vector<8x8xf32>
    %141 = arith.divf %137, %140 : vector<8x8xf32>
    %cst_69 = arith.constant dense<0.000000e+00> : vector<8x32xf32>
    %142 = tpu.matmul %141, %127, %cst_69 {dimension_numbers = #tpu.dot_dimension_numbers<[1], [0], [0], [1], [0, 0, 1, 1], [], []>} : vector<8x8xf32>, vector<8x32xf32>, vector<8x32xf32> -> vector<8x32xf32>
    %143 = tpu.concatenate %66, %113 in 0 : vector<1x32xf32>, vector<1x32xf32> -> vector<2x32xf32>
    %144 = tpu.concatenate %95, %142 in 0 : vector<8x32xf32>, vector<8x32xf32> -> vector<16x32xf32>
    %c4 = arith.constant 4 : index
    %c0_70 = arith.constant 0 : index
    %c0_71 = arith.constant 0 : index
    %145 = vector.load %arg8[%c4, %c0_70, %c0_71] : memref<6x32x32xf32, #tpu.memory_space<vmem>>, vector<1x32x32xf32>
    %146 = vector.shape_cast %145 : vector<1x32x32xf32> to vector<32x32xf32>
    %cst_72 = arith.constant dense<0.000000e+00> : vector<2x32xf32>
    %147 = tpu.matmul %143, %146, %cst_72 {dimension_numbers = #tpu.dot_dimension_numbers<[1], [0], [0], [1], [0, 0, 1, 1], [], []>} : vector<2x32xf32>, vector<32x32xf32>, vector<2x32xf32> -> vector<2x32xf32>
    %c0_73 = arith.constant 0 : index
    %c1024 = arith.constant 1024 : index
    %148 = vector.load %arg11[%c0_73, %c1024] : memref<1x1408xf32, #tpu.memory_space<vmem>>, vector<1x32xf32>
    %149 = vector.broadcast %148 : vector<1x32xf32> to vector<2x32xf32>
    %150 = arith.addf %147, %149 : vector<2x32xf32>
    %cst_74 = arith.constant 0.000000e+00 : f32
    %151 = vector.broadcast %cst_74 : f32 to vector<2x32xf32>
    %152 = arith.maximumf %150, %151 : vector<2x32xf32>
    %c0_75 = arith.constant 0 : index
    %c0_76 = arith.constant 0 : index
    %c0_77 = arith.constant 0 : index
    %153 = vector.load %arg9[%c0_75, %c0_76, %c0_77] : memref<1x32x64xf32, #tpu.memory_space<vmem>>, vector<1x32x64xf32>
    %154 = vector.shape_cast %153 : vector<1x32x64xf32> to vector<32x64xf32>
    %cst_78 = arith.constant dense<0.000000e+00> : vector<2x64xf32>
    %155 = tpu.matmul %152, %154, %cst_78 {dimension_numbers = #tpu.dot_dimension_numbers<[1], [0], [0], [1], [0, 0, 1, 1], [], []>} : vector<2x32xf32>, vector<32x64xf32>, vector<2x64xf32> -> vector<2x64xf32>
    %c0_79 = arith.constant 0 : index
    %c896 = arith.constant 896 : index
    %156 = vector.load %arg11[%c0_79, %c896] : memref<1x1408xf32, #tpu.memory_space<vmem>>, vector<1x64xf32>
    %157 = vector.broadcast %156 : vector<1x64xf32> to vector<2x64xf32>
    %158 = arith.addf %155, %157 : vector<2x64xf32>
    %159 = vector.extract_strided_slice %158 {offsets = [0, 0], sizes = [2, 32], strides = [1, 1]} : vector<2x64xf32> to vector<2x32xf32>
    %160 = vector.extract_strided_slice %158 {offsets = [0, 32], sizes = [2, 32], strides = [1, 1]} : vector<2x64xf32> to vector<2x32xf32>
    %cst_80 = arith.constant 0.000000e+00 : f32
    %161 = vector.broadcast %cst_80 : f32 to vector<2x32xf32>
    %162 = arith.subf %161, %160 : vector<2x32xf32>
    %163 = math.exp %162 : vector<2x32xf32>
    %cst_81 = arith.constant 1.000000e+00 : f32
    %164 = vector.broadcast %cst_81 : f32 to vector<2x32xf32>
    %165 = arith.addf %164, %163 : vector<2x32xf32>
    %cst_82 = arith.constant 0.899999976 : f32
    %166 = vector.broadcast %cst_82 : f32 to vector<2x32xf32>
    %167 = arith.divf %166, %165 : vector<2x32xf32>
    %cst_83 = arith.constant 1.000000e-01 : f32
    %168 = vector.broadcast %cst_83 : f32 to vector<2x32xf32>
    %169 = arith.addf %168, %167 : vector<2x32xf32>
    %170 = arith.mulf %169, %4 : vector<2x32xf32>
    %171 = arith.addf %159, %170 : vector<2x32xf32>
    %172 = vector.extract_strided_slice %171 {offsets = [0, 0], sizes = [1, 32], strides = [1, 1]} : vector<2x32xf32> to vector<1x32xf32>
    %173 = vector.shape_cast %172 : vector<1x32xf32> to vector<1x32xf32>
    %174 = vector.broadcast %173 : vector<1x32xf32> to vector<8x32xf32>
    %175 = vector.extract_strided_slice %171 {offsets = [1, 0], sizes = [1, 32], strides = [1, 1]} : vector<2x32xf32> to vector<1x32xf32>
    %176 = vector.shape_cast %175 : vector<1x32xf32> to vector<1x32xf32>
    %177 = vector.broadcast %176 : vector<1x32xf32> to vector<8x32xf32>
    %178 = tpu.concatenate %174, %177 in 0 : vector<8x32xf32>, vector<8x32xf32> -> vector<16x32xf32>
    %c0_84 = arith.constant 0 : index
    %c0_85 = arith.constant 0 : index
    %c0_86 = arith.constant 0 : index
    %179 = vector.load %arg8[%c0_84, %c0_85, %c0_86] : memref<6x32x32xf32, #tpu.memory_space<vmem>>, vector<1x32x32xf32>
    %180 = vector.shape_cast %179 : vector<1x32x32xf32> to vector<32x32xf32>
    %cst_87 = arith.constant dense<0.000000e+00> : vector<16x32xf32>
    %181 = tpu.matmul %144, %180, %cst_87 {dimension_numbers = #tpu.dot_dimension_numbers<[1], [0], [0], [1], [0, 0, 1, 1], [], []>} : vector<16x32xf32>, vector<32x32xf32>, vector<16x32xf32> -> vector<16x32xf32>
    %c1_88 = arith.constant 1 : index
    %c0_89 = arith.constant 0 : index
    %c0_90 = arith.constant 0 : index
    %182 = vector.load %arg8[%c1_88, %c0_89, %c0_90] : memref<6x32x32xf32, #tpu.memory_space<vmem>>, vector<1x32x32xf32>
    %183 = vector.shape_cast %182 : vector<1x32x32xf32> to vector<32x32xf32>
    %cst_91 = arith.constant dense<0.000000e+00> : vector<16x32xf32>
    %184 = tpu.matmul %178, %183, %cst_91 {dimension_numbers = #tpu.dot_dimension_numbers<[1], [0], [0], [1], [0, 0, 1, 1], [], []>} : vector<16x32xf32>, vector<32x32xf32>, vector<16x32xf32> -> vector<16x32xf32>
    %185 = arith.addf %181, %184 : vector<16x32xf32>
    %c0_92 = arith.constant 0 : index
    %c0_93 = arith.constant 0 : index
    %c0_94 = arith.constant 0 : index
    %186 = vector.load %arg5[%c0_92, %c0_93, %c0_94] : memref<3x3x32xf32, #tpu.memory_space<vmem>>, vector<1x3x32xf32>
    %187 = vector.shape_cast %186 : vector<1x3x32xf32> to vector<3x32xf32>
    %cst_95 = arith.constant dense<0.000000e+00> : vector<16x32xf32>
    %188 = tpu.matmul %2, %187, %cst_95 {dimension_numbers = #tpu.dot_dimension_numbers<[1], [0], [0], [1], [0, 0, 1, 1], [], []>} : vector<16x3xf32>, vector<3x32xf32>, vector<16x32xf32> -> vector<16x32xf32>
    %189 = arith.addf %185, %188 : vector<16x32xf32>
    %c0_96 = arith.constant 0 : index
    %c0_97 = arith.constant 0 : index
    %190 = vector.load %arg11[%c0_96, %c0_97] : memref<1x1408xf32, #tpu.memory_space<vmem>>, vector<1x32xf32>
    %191 = vector.broadcast %190 : vector<1x32xf32> to vector<16x32xf32>
    %192 = arith.addf %189, %191 : vector<16x32xf32>
    %cst_98 = arith.constant 0.000000e+00 : f32
    %193 = vector.broadcast %cst_98 : f32 to vector<16x32xf32>
    %194 = arith.maximumf %192, %193 : vector<16x32xf32>
    %c2_99 = arith.constant 2 : index
    %c0_100 = arith.constant 0 : index
    %c0_101 = arith.constant 0 : index
    %195 = vector.load %arg8[%c2_99, %c0_100, %c0_101] : memref<6x32x32xf32, #tpu.memory_space<vmem>>, vector<1x32x32xf32>
    %196 = vector.shape_cast %195 : vector<1x32x32xf32> to vector<32x32xf32>
    %cst_102 = arith.constant dense<0.000000e+00> : vector<16x32xf32>
    %197 = tpu.matmul %194, %196, %cst_102 {dimension_numbers = #tpu.dot_dimension_numbers<[1], [0], [0], [1], [0, 0, 1, 1], [], []>} : vector<16x32xf32>, vector<32x32xf32>, vector<16x32xf32> -> vector<16x32xf32>
    %c0_103 = arith.constant 0 : index
    %c128 = arith.constant 128 : index
    %198 = vector.load %arg11[%c0_103, %c128] : memref<1x1408xf32, #tpu.memory_space<vmem>>, vector<1x32xf32>
    %199 = vector.broadcast %198 : vector<1x32xf32> to vector<16x32xf32>
    %200 = arith.addf %197, %199 : vector<16x32xf32>
    %cst_104 = arith.constant 0.000000e+00 : f32
    %201 = vector.broadcast %cst_104 : f32 to vector<16x32xf32>
    %202 = arith.maximumf %200, %201 : vector<16x32xf32>
    %c0_105 = arith.constant 0 : index
    %c0_106 = arith.constant 0 : index
    %c0_107 = arith.constant 0 : index
    %203 = vector.load %arg7[%c0_105, %c0_106, %c0_107] : memref<1x32x2xf32, #tpu.memory_space<vmem>>, vector<1x32x2xf32>
    %204 = vector.shape_cast %203 : vector<1x32x2xf32> to vector<32x2xf32>
    %cst_108 = arith.constant dense<0.000000e+00> : vector<16x2xf32>
    %205 = tpu.matmul %202, %204, %cst_108 {dimension_numbers = #tpu.dot_dimension_numbers<[1], [0], [0], [1], [0, 0, 1, 1], [], []>} : vector<16x32xf32>, vector<32x2xf32>, vector<16x2xf32> -> vector<16x2xf32>
    %c0_109 = arith.constant 0 : index
    %c256 = arith.constant 256 : index
    %206 = vector.load %arg11[%c0_109, %c256] : memref<1x1408xf32, #tpu.memory_space<vmem>>, vector<1x2xf32>
    %207 = vector.broadcast %206 : vector<1x2xf32> to vector<16x2xf32>
    %208 = arith.addf %205, %207 : vector<16x2xf32>
    %209 = vector.extract_strided_slice %208 {offsets = [0, 0], sizes = [16, 1], strides = [1, 1]} : vector<16x2xf32> to vector<16x1xf32>
    %210 = vector.extract_strided_slice %208 {offsets = [0, 1], sizes = [16, 1], strides = [1, 1]} : vector<16x2xf32> to vector<16x1xf32>
    %cst_110 = arith.constant 0.000000e+00 : f32
    %211 = vector.broadcast %cst_110 : f32 to vector<16x1xf32>
    %212 = arith.maximumf %210, %211 : vector<16x1xf32>
    %213 = math.absf %210 : vector<16x1xf32>
    %cst_111 = arith.constant 0.000000e+00 : f32
    %214 = vector.broadcast %cst_111 : f32 to vector<16x1xf32>
    %215 = arith.subf %214, %213 : vector<16x1xf32>
    %216 = math.exp %215 : vector<16x1xf32>
    %cst_112 = arith.constant 1.000000e+00 : f32
    %217 = vector.broadcast %cst_112 : f32 to vector<16x1xf32>
    %218 = arith.addf %217, %216 : vector<16x1xf32>
    %219 = math.log %218 : vector<16x1xf32>
    %220 = arith.addf %212, %219 : vector<16x1xf32>
    %cst_113 = arith.constant 0.899999976 : f32
    %221 = vector.broadcast %cst_113 : f32 to vector<16x1xf32>
    %222 = arith.mulf %221, %220 : vector<16x1xf32>
    %cst_114 = arith.constant 1.000000e-01 : f32
    %223 = vector.broadcast %cst_114 : f32 to vector<16x1xf32>
    %224 = arith.addf %223, %222 : vector<16x1xf32>
    %225 = tpu.concatenate %209, %224 in 1 : vector<16x1xf32>, vector<16x1xf32> -> vector<16x2xf32>
    %c0_115 = arith.constant 0 : index
    %c0_116 = arith.constant 0 : index
    %226 = vector.load %arg12[%c0_115, %c0_116] : memref<16x2xf32, #tpu.memory_space<vmem>>, vector<16x2xf32>
    tpu.vector_store %arg12[%c0_115, %c0_116], %225 {strides = array<i32>} : memref<16x2xf32, #tpu.memory_space<vmem>>, vector<16x2xf32>,
    return
  }
  func.func @transform_0(%arg0: i32) -> (i32, i32) {
    %c0_i32 = arith.constant 0 : i32
    %c0_i32_0 = arith.constant 0 : i32
    return %arg0, %c0_i32 : i32, i32
  }
  func.func @transform_1(%arg0: i32) -> (i32, i32) {
    %c0_i32 = arith.constant 0 : i32
    %c0_i32_0 = arith.constant 0 : i32
    return %arg0, %c0_i32 : i32, i32
  }
  func.func @transform_2(%arg0: i32) -> (i32, i32) {
    %c0_i32 = arith.constant 0 : i32
    %c0_i32_0 = arith.constant 0 : i32
    return %arg0, %c0_i32 : i32, i32
  }
  func.func @transform_3(%arg0: i32) -> (i32, i32, i32) {
    %c0_i32 = arith.constant 0 : i32
    %c0_i32_0 = arith.constant 0 : i32
    %c0_i32_1 = arith.constant 0 : i32
    return %arg0, %c0_i32, %c0_i32_0 : i32, i32, i32
  }
  func.func @transform_4(%arg0: i32) -> (i32, i32, i32) {
    %c0_i32 = arith.constant 0 : i32
    %c0_i32_0 = arith.constant 0 : i32
    %c0_i32_1 = arith.constant 0 : i32
    %c0_i32_2 = arith.constant 0 : i32
    return %c0_i32, %c0_i32_0, %c0_i32_1 : i32, i32, i32
  }
  func.func @transform_5(%arg0: i32) -> (i32, i32, i32) {
    %c0_i32 = arith.constant 0 : i32
    %c0_i32_0 = arith.constant 0 : i32
    %c0_i32_1 = arith.constant 0 : i32
    %c0_i32_2 = arith.constant 0 : i32
    return %c0_i32, %c0_i32_0, %c0_i32_1 : i32, i32, i32
  }
  func.func @transform_6(%arg0: i32) -> (i32, i32, i32) {
    %c0_i32 = arith.constant 0 : i32
    %c0_i32_0 = arith.constant 0 : i32
    %c0_i32_1 = arith.constant 0 : i32
    %c0_i32_2 = arith.constant 0 : i32
    return %c0_i32, %c0_i32_0, %c0_i32_1 : i32, i32, i32
  }
  func.func @transform_7(%arg0: i32) -> (i32, i32, i32) {
    %c0_i32 = arith.constant 0 : i32
    %c0_i32_0 = arith.constant 0 : i32
    %c0_i32_1 = arith.constant 0 : i32
    %c0_i32_2 = arith.constant 0 : i32
    return %c0_i32, %c0_i32_0, %c0_i32_1 : i32, i32, i32
  }
  func.func @transform_8(%arg0: i32) -> (i32, i32, i32) {
    %c0_i32 = arith.constant 0 : i32
    %c0_i32_0 = arith.constant 0 : i32
    %c0_i32_1 = arith.constant 0 : i32
    %c0_i32_2 = arith.constant 0 : i32
    return %c0_i32, %c0_i32_0, %c0_i32_1 : i32, i32, i32
  }
  func.func @transform_9(%arg0: i32) -> (i32, i32, i32) {
    %c0_i32 = arith.constant 0 : i32
    %c0_i32_0 = arith.constant 0 : i32
    %c0_i32_1 = arith.constant 0 : i32
    %c0_i32_2 = arith.constant 0 : i32
    return %c0_i32, %c0_i32_0, %c0_i32_1 : i32, i32, i32
  }
  func.func @transform_10(%arg0: i32) -> (i32, i32) {
    %c0_i32 = arith.constant 0 : i32
    %c0_i32_0 = arith.constant 0 : i32
    %c0_i32_1 = arith.constant 0 : i32
    return %c0_i32, %c0_i32_0 : i32, i32
  }
  func.func @transform_11(%arg0: i32) -> (i32, i32) {
    %c0_i32 = arith.constant 0 : i32
    %c0_i32_0 = arith.constant 0 : i32
    return %arg0, %c0_i32 : i32, i32
  }
}

</mosaic_0001>

<llo_original>
// kernel: _lambda_.1
$region0: #{_lambda_.1}
  #allocation0 [shape = 'u32[]', space=smem, size = 0x4, offset = 0x4, fixed_abs, tag = 'smem constant byte address 0x4 - core index']
  #allocation1 [shape = 'u32[144,128]{1,0:T(1,128)}', space=vmem, size = 0x12000, scoped, tag = 'internal scratch']
  %s0 = inlined_call_operand.vmem [shape: f32[32,4], index: 0, kind: input, shape index: {}]
  %s1 = inlined_call_operand.vmem [shape: f32[32,3], index: 1, kind: input, shape index: {}]
  %s2 = inlined_call_operand.vmem [shape: f32[32,3], index: 2, kind: input, shape index: {}]
  %s3 = inlined_call_operand.vmem [shape: f32[2,2,32], index: 3, kind: input, shape index: {}]
  %s4 = inlined_call_operand.vmem [shape: f32[3,3,32], index: 4, kind: input, shape index: {}]
  %s5 = inlined_call_operand.vmem [shape: f32[1,4,64], index: 5, kind: input, shape index: {}]
  %s6 = inlined_call_operand.vmem [shape: f32[1,32,2], index: 6, kind: input, shape index: {}]
  %s7 = inlined_call_operand.vmem [shape: f32[6,32,32], index: 7, kind: input, shape index: {}]
  %s8 = inlined_call_operand.vmem [shape: f32[1,32,64], index: 8, kind: input, shape index: {}]
  %s9 = inlined_call_operand.vmem [shape: f32[1,64,64], index: 9, kind: input, shape index: {}]
  %s10 = inlined_call_operand.vmem [shape: f32[1,1408], index: 10, kind: input, shape index: {}]
  %s11 = inlined_call_operand.vmem [shape: f32[32,2], index: 11, kind: output, shape index: {}]
  %s12 = sld [smem:[#allocation0]]
  $region77: #{_lambda_.1} parent=0
    _
  %s14 = ssub.s32 1, %s12
  %s15 = scalar_select 0, %s14, %s12
  loop: start=0, step=1, limit=4
  $region2: #{_lambda_.1} parent=0 // loop_pre_header
    _
  $region3: #{_lambda_.1} parent=0 // loop_header
    %s17 = sphi 0, %s21
    %p18 = scmp.ge.s32.totalorder %s17, 4
    %s27 = sphi 0, %s29
    %s30 = sphi 0, %s27
    %s31 = sphi 0, %s30
    %s47 = sphi 0, %s31
    %s53 = sphi 0, %s55
    %s56 = sphi 0, %s53
    %s57 = sphi 0, %s56
    %s73 = sphi 0, %s57
    %s79 = sphi 0, %s81
    %s82 = sphi 0, %s79
    %s83 = sphi 0, %s82
    %s99 = sphi 0, %s83
    %s105 = sphi 0, %s107
    %s108 = sphi 0, %s105
    %s109 = sphi 0, %s108
    %s125 = sphi 0, %s109
    %s129 = sphi 0, %s129
    %s131 = sphi 0, %s129
    %s132 = sphi 0, %s131
    %s146 = sphi 0, %s132
    %s150 = sphi 0, %s150
    %s152 = sphi 0, %s150
    %s153 = sphi 0, %s152
    %s167 = sphi 0, %s153
    %s171 = sphi 0, %s171
    %s173 = sphi 0, %s171
    %s174 = sphi 0, %s173
    %s188 = sphi 0, %s174
    %s192 = sphi 0, %s192
    %s194 = sphi 0, %s192
    %s195 = sphi 0, %s194
    %s209 = sphi 0, %s195
    %s213 = sphi 0, %s213
    %s215 = sphi 0, %s213
    %s216 = sphi 0, %s215
    %s230 = sphi 0, %s216
    %s234 = sphi 0, %s234
    %s236 = sphi 0, %s234
    %s237 = sphi 0, %s236
    %s251 = sphi 0, %s237
    %s255 = sphi 0, %s255
    %s257 = sphi 0, %s255
    %s258 = sphi 0, %s257
    %s272 = sphi 0, %s258
    %s278 = sphi 0, %s280
    %s281 = sphi 0, %s278
    %s282 = sphi 0, %s281
    %s298 = sphi 0, %s282
  $region4: #{_lambda_.1} parent=0 // loop_header_branch
    %20 = sbr.rel (%p18) target = $region8
  $region5: #{_lambda_.1} parent=0 // loop_body
    %s22 = ssub.s32 %s17, 1
    %s23 = ssub.s32 %s17, 2
    %s24 = sadd.s32 %s17, 1
    %s25 = ssub.s32 %s17, %s24
    %p26 = scmp.eq.s32.totalorder %s25, 0
    %s28 = sadd.s32 %s27, 1
    %s29 = scalar_select %p26, %s27, %s28
    %p32 = pneg %p26
    %p33 = scmp.eq.s32.totalorder %s17, 1
    %p34 = por %p32, %p33
    %p35 = scmp.ne.s32.totalorder %s27, %s30
    %p36 = scmp.eq.s32.totalorder %s17, 0
    %p37 = por %p35, %p36
    %p38 = scmp.ne.s32.totalorder %s27, %s30
    %p39 = scmp.eq.s32.totalorder %s22, 1
    %p40 = por %p38, %p39
    %p41 = scmp.ne.s32.totalorder %s30, %s31
    %p42 = scmp.eq.s32.totalorder %s22, 0
    %p43 = por %p41, %p42
    %p44 = scmp.ne.s32.totalorder %s30, %s31
    %p45 = scmp.eq.s32.totalorder %s23, 1
    %p46 = por %p44, %p45
    %p48 = scmp.ne.s32.totalorder %s31, %s47
    %p49 = scmp.eq.s32.totalorder %s23, 0
    %p50 = por %p48, %p49
    %s51 = ssub.s32 %s17, %s24
    %p52 = scmp.eq.s32.totalorder %s51, 0
    %s54 = sadd.s32 %s53, 1
    %s55 = scalar_select %p52, %s53, %s54
    %p58 = pneg %p52
    %p59 = scmp.eq.s32.totalorder %s17, 1
    %p60 = por %p58, %p59
    %p61 = scmp.ne.s32.totalorder %s53, %s56
    %p62 = scmp.eq.s32.totalorder %s17, 0
    %p63 = por %p61, %p62
    %p64 = scmp.ne.s32.totalorder %s53, %s56
    %p65 = scmp.eq.s32.totalorder %s22, 1
    %p66 = por %p64, %p65
    %p67 = scmp.ne.s32.totalorder %s56, %s57
    %p68 = scmp.eq.s32.totalorder %s22, 0
    %p69 = por %p67, %p68
    %p70 = scmp.ne.s32.totalorder %s56, %s57
    %p71 = scmp.eq.s32.totalorder %s23, 1
    %p72 = por %p70, %p71
    %p74 = scmp.ne.s32.totalorder %s57, %s73
    %p75 = scmp.eq.s32.totalorder %s23, 0
    %p76 = por %p74, %p75
    %s77 = ssub.s32 %s17, %s24
    %p78 = scmp.eq.s32.totalorder %s77, 0
    %s80 = sadd.s32 %s79, 1
    %s81 = scalar_select %p78, %s79, %s80
    %p84 = pneg %p78
    %p85 = scmp.eq.s32.totalorder %s17, 1
    %p86 = por %p84, %p85
    %p87 = scmp.ne.s32.totalorder %s79, %s82
    %p88 = scmp.eq.s32.totalorder %s17, 0
    %p89 = por %p87, %p88
    %p90 = scmp.ne.s32.totalorder %s79, %s82
    %p91 = scmp.eq.s32.totalorder %s22, 1
    %p92 = por %p90, %p91
    %p93 = scmp.ne.s32.totalorder %s82, %s83
    %p94 = scmp.eq.s32.totalorder %s22, 0
    %p95 = por %p93, %p94
    %p96 = scmp.ne.s32.totalorder %s82, %s83
    %p97 = scmp.eq.s32.totalorder %s23, 1
    %p98 = por %p96, %p97
    %p100 = scmp.ne.s32.totalorder %s83, %s99
    %p101 = scmp.eq.s32.totalorder %s23, 0
    %p102 = por %p100, %p101
    %s103 = ssub.s32 %s17, %s24
    %p104 = scmp.eq.s32.totalorder %s103, 0
    %s106 = sadd.s32 %s105, 1
    %s107 = scalar_select %p104, %s105, %s106
    %p110 = pneg %p104
    %p111 = scmp.eq.s32.totalorder %s17, 1
    %p112 = por %p110, %p111
    %p113 = scmp.ne.s32.totalorder %s105, %s108
    %p114 = scmp.eq.s32.totalorder %s17, 0
    %p115 = por %p113, %p114
    %p116 = scmp.ne.s32.totalorder %s105, %s108
    %p117 = scmp.eq.s32.totalorder %s22, 1
    %p118 = por %p116, %p117
    %p119 = scmp.ne.s32.totalorder %s108, %s109
    %p120 = scmp.eq.s32.totalorder %s22, 0
    %p121 = por %p119, %p120
    %p122 = scmp.ne.s32.totalorder %s108, %s109
    %p123 = scmp.eq.s32.totalorder %s23, 1
    %p124 = por %p122, %p123
    %p126 = scmp.ne.s32.totalorder %s109, %s125
    %p127 = scmp.eq.s32.totalorder %s23, 0
    %p128 = por %p126, %p127
    %s130 = sadd.s32 %s129, 1
    %p133 = scmp.eq.s32.totalorder %s17, 1
    %p134 = scmp.ne.s32.totalorder %s129, %s131
    %p135 = scmp.eq.s32.totalorder %s17, 0
    %p136 = por %p134, %p135
    %p137 = scmp.ne.s32.totalorder %s129, %s131
    %p138 = scmp.eq.s32.totalorder %s22, 1
    %p139 = por %p137, %p138
    %p140 = scmp.ne.s32.totalorder %s131, %s132
    %p141 = scmp.eq.s32.totalorder %s22, 0
    %p142 = por %p140, %p141
    %p143 = scmp.ne.s32.totalorder %s131, %s132
    %p144 = scmp.eq.s32.totalorder %s23, 1
    %p145 = por %p143, %p144
    %p147 = scmp.ne.s32.totalorder %s132, %s146
    %p148 = scmp.eq.s32.totalorder %s23, 0
    %p149 = por %p147, %p148
    %s151 = sadd.s32 %s150, 1
    %p154 = scmp.eq.s32.totalorder %s17, 1
    %p155 = scmp.ne.s32.totalorder %s150, %s152
    %p156 = scmp.eq.s32.totalorder %s17, 0
    %p157 = por %p155, %p156
    %p158 = scmp.ne.s32.totalorder %s150, %s152
    %p159 = scmp.eq.s32.totalorder %s22, 1
    %p160 = por %p158, %p159
    %p161 = scmp.ne.s32.totalorder %s152, %s153
    %p162 = scmp.eq.s32.totalorder %s22, 0
    %p163 = por %p161, %p162
    %p164 = scmp.ne.s32.totalorder %s152, %s153
    %p165 = scmp.eq.s32.totalorder %s23, 1
    %p166 = por %p164, %p165
    %p168 = scmp.ne.s32.totalorder %s153, %s167
    %p169 = scmp.eq.s32.totalorder %s23, 0
    %p170 = por %p168, %p169
    %s172 = sadd.s32 %s171, 1
    %p175 = scmp.eq.s32.totalorder %s17, 1
    %p176 = scmp.ne.s32.totalorder %s171, %s173
    %p177 = scmp.eq.s32.totalorder %s17, 0
    %p178 = por %p176, %p177
    %p179 = scmp.ne.s32.totalorder %s171, %s173
    %p180 = scmp.eq.s32.totalorder %s22, 1
    %p181 = por %p179, %p180
    %p182 = scmp.ne.s32.totalorder %s173, %s174
    %p183 = scmp.eq.s32.totalorder %s22, 0
    %p184 = por %p182, %p183
    %p185 = scmp.ne.s32.totalorder %s173, %s174
    %p186 = scmp.eq.s32.totalorder %s23, 1
    %p187 = por %p185, %p186
    %p189 = scmp.ne.s32.totalorder %s174, %s188
    %p190 = scmp.eq.s32.totalorder %s23, 0
    %p191 = por %p189, %p190
    %s193 = sadd.s32 %s192, 1
    %p196 = scmp.eq.s32.totalorder %s17, 1
    %p197 = scmp.ne.s32.totalorder %s192, %s194
    %p198 = scmp.eq.s32.totalorder %s17, 0
    %p199 = por %p197, %p198
    %p200 = scmp.ne.s32.totalorder %s192, %s194
    %p201 = scmp.eq.s32.totalorder %s22, 1
    %p202 = por %p200, %p201
    %p203 = scmp.ne.s32.totalorder %s194, %s195
    %p204 = scmp.eq.s32.totalorder %s22, 0
    %p205 = por %p203, %p204
    %p206 = scmp.ne.s32.totalorder %s194, %s195
    %p207 = scmp.eq.s32.totalorder %s23, 1
    %p208 = por %p206, %p207
    %p210 = scmp.ne.s32.totalorder %s195, %s209
    %p211 = scmp.eq.s32.totalorder %s23, 0
    %p212 = por %p210, %p211
    %s214 = sadd.s32 %s213, 1
    %p217 = scmp.eq.s32.totalorder %s17, 1
    %p218 = scmp.ne.s32.totalorder %s213, %s215
    %p219 = scmp.eq.s32.totalorder %s17, 0
    %p220 = por %p218, %p219
    %p221 = scmp.ne.s32.totalorder %s213, %s215
    %p222 = scmp.eq.s32.totalorder %s22, 1
    %p223 = por %p221, %p222
    %p224 = scmp.ne.s32.totalorder %s215, %s216
    %p225 = scmp.eq.s32.totalorder %s22, 0
    %p226 = por %p224, %p225
    %p227 = scmp.ne.s32.totalorder %s215, %s216
    %p228 = scmp.eq.s32.totalorder %s23, 1
    %p229 = por %p227, %p228
    %p231 = scmp.ne.s32.totalorder %s216, %s230
    %p232 = scmp.eq.s32.totalorder %s23, 0
    %p233 = por %p231, %p232
    %s235 = sadd.s32 %s234, 1
    %p238 = scmp.eq.s32.totalorder %s17, 1
    %p239 = scmp.ne.s32.totalorder %s234, %s236
    %p240 = scmp.eq.s32.totalorder %s17, 0
    %p241 = por %p239, %p240
    %p242 = scmp.ne.s32.totalorder %s234, %s236
    %p243 = scmp.eq.s32.totalorder %s22, 1
    %p244 = por %p242, %p243
    %p245 = scmp.ne.s32.totalorder %s236, %s237
    %p246 = scmp.eq.s32.totalorder %s22, 0
    %p247 = por %p245, %p246
    %p248 = scmp.ne.s32.totalorder %s236, %s237
    %p249 = scmp.eq.s32.totalorder %s23, 1
    %p250 = por %p248, %p249
    %p252 = scmp.ne.s32.totalorder %s237, %s251
    %p253 = scmp.eq.s32.totalorder %s23, 0
    %p254 = por %p252, %p253
    %s256 = sadd.s32 %s255, 1
    %p259 = scmp.eq.s32.totalorder %s17, 1
    %p260 = scmp.ne.s32.totalorder %s255, %s257
    %p261 = scmp.eq.s32.totalorder %s17, 0
    %p262 = por %p260, %p261
    %p263 = scmp.ne.s32.totalorder %s255, %s257
    %p264 = scmp.eq.s32.totalorder %s22, 1
    %p265 = por %p263, %p264
    %p266 = scmp.ne.s32.totalorder %s257, %s258
    %p267 = scmp.eq.s32.totalorder %s22, 0
    %p268 = por %p266, %p267
    %p269 = scmp.ne.s32.totalorder %s257, %s258
    %p270 = scmp.eq.s32.totalorder %s23, 1
    %p271 = por %p269, %p270
    %p273 = scmp.ne.s32.totalorder %s258, %s272
    %p274 = scmp.eq.s32.totalorder %s23, 0
    %p275 = por %p273, %p274
    %s276 = ssub.s32 %s17, %s24
    %p277 = scmp.eq.s32.totalorder %s276, 0
    %s279 = sadd.s32 %s278, 1
    %s280 = scalar_select %p277, %s278, %s279
    %p283 = pneg %p277
    %p284 = scmp.eq.s32.totalorder %s17, 1
    %p285 = por %p283, %p284
    %p286 = scmp.ne.s32.totalorder %s278, %s281
    %p287 = scmp.eq.s32.totalorder %s17, 0
    %p288 = por %p286, %p287
    %p289 = scmp.ne.s32.totalorder %s278, %s281
    %p290 = scmp.eq.s32.totalorder %s22, 1
    %p291 = por %p289, %p290
    %p292 = scmp.ne.s32.totalorder %s281, %s282
    %p293 = scmp.eq.s32.totalorder %s22, 0
    %p294 = por %p292, %p293
    %p295 = scmp.ne.s32.totalorder %s281, %s282
    %p296 = scmp.eq.s32.totalorder %s23, 1
    %p297 = por %p295, %p296
    %p299 = scmp.ne.s32.totalorder %s282, %s298
    %p300 = scmp.eq.s32.totalorder %s23, 0
    %p301 = por %p299, %p300
    %p302 = scmp.le.s32.totalorder 1, %s17
    %p303 = scmp.lt.s32.totalorder %s17, 3
    %p304 = pnand %p302, %p303
    %p305 = pneg %p304
    // Predicated region
    $region9: #{_lambda_.1} parent=5 // pred_check
      _
    $region10: #{_lambda_.1} parent=5 // pred_check_branch
      %307 = sbr.rel (%p304) target = $region12
    $region11: #{_lambda_.1} parent=5 // pred_region
      %s308 = ssub.s32 %s17, 1
      // Predicated region
      $region13: #{_lambda_.1} parent=11 // pred_check
        %p309 = pneg %p142
      $region14: #{_lambda_.1} parent=11 // pred_check_branch
        %311 = sbr.rel (%p309) target = $region16
      $region15: #{_lambda_.1} parent=11 // pred_region
        _
      $region16: #{_lambda_.1} parent=11 // pred_fallthru
        _
      // Predicated region
      $region17: #{_lambda_.1} parent=11 // pred_check
        %p312 = pneg %p163
      $region18: #{_lambda_.1} parent=11 // pred_check_branch
        %314 = sbr.rel (%p312) target = $region20
      $region19: #{_lambda_.1} parent=11 // pred_region
        _
      $region20: #{_lambda_.1} parent=11 // pred_fallthru
        _
      // Predicated region
      $region21: #{_lambda_.1} parent=11 // pred_check
        %p315 = pneg %p184
      $region22: #{_lambda_.1} parent=11 // pred_check_branch
        %317 = sbr.rel (%p315) target = $region24
      $region23: #{_lambda_.1} parent=11 // pred_region
        _
      $region24: #{_lambda_.1} parent=11 // pred_fallthru
        _
      // Predicated region
      $region25: #{_lambda_.1} parent=11 // pred_check
        %p318 = pneg %p205
      $region26: #{_lambda_.1} parent=11 // pred_check_branch
        %320 = sbr.rel (%p318) target = $region28
      $region27: #{_lambda_.1} parent=11 // pred_region
        _
      $region28: #{_lambda_.1} parent=11 // pred_fallthru
        _
      // Predicated region
      $region29: #{_lambda_.1} parent=11 // pred_check
        %p321 = pneg %p226
      $region30: #{_lambda_.1} parent=11 // pred_check_branch
        %323 = sbr.rel (%p321) target = $region32
      $region31: #{_lambda_.1} parent=11 // pred_region
        _
      $region32: #{_lambda_.1} parent=11 // pred_fallthru
        _
      // Predicated region
      $region33: #{_lambda_.1} parent=11 // pred_check
        %p324 = pneg %p247
      $region34: #{_lambda_.1} parent=11 // pred_check_branch
        %326 = sbr.rel (%p324) target = $region36
      $region35: #{_lambda_.1} parent=11 // pred_region
        _
      $region36: #{_lambda_.1} parent=11 // pred_fallthru
        _
      // Predicated region
      $region37: #{_lambda_.1} parent=11 // pred_check
        %p327 = pneg %p268
      $region38: #{_lambda_.1} parent=11 // pred_check_branch
        %329 = sbr.rel (%p327) target = $region40
      $region39: #{_lambda_.1} parent=11 // pred_region
        _
      $region40: #{_lambda_.1} parent=11 // pred_fallthru
        _
    $region12: #{_lambda_.1} parent=5 // pred_fallthru
      _
    %p330 = scmp.lt.s32.totalorder %s17, 2
    // Predicated region
    $region41: #{_lambda_.1} parent=5 // pred_check
      %p331 = pneg %p330
    $region42: #{_lambda_.1} parent=5 // pred_check_branch
      %333 = sbr.rel (%p331) target = $region44
    $region43: #{_lambda_.1} parent=5 // pred_region
      // Predicated region
      $region45: #{_lambda_.1} parent=43 // pred_check
        %p334 = pneg %p37
      $region46: #{_lambda_.1} parent=43 // pred_check_branch
        %336 = sbr.rel (%p334) target = $region48
      $region47: #{_lambda_.1} parent=43 // pred_region
        %s337 = smul.u32 2, %s17
        %p338 = scmp.lt.s32.totalorder %s337, 3
        %s339 = scalar_select %p338, %s337, 3
        %s340 = smul.addr %s339, 8
        %s341 = scalar_lea.vmem %s0, %s340
        %s342 = smul.u32 2, %s17
      $region48: #{_lambda_.1} parent=43 // pred_fallthru
        _
      // Predicated region
      $region49: #{_lambda_.1} parent=43 // pred_check
        %p343 = pneg %p63
      $region50: #{_lambda_.1} parent=43 // pred_check_branch
        %345 = sbr.rel (%p343) target = $region52
      $region51: #{_lambda_.1} parent=43 // pred_region
        %s346 = smul.u32 2, %s17
        %p347 = scmp.lt.s32.totalorder %s346, 3
        %s348 = scalar_select %p347, %s346, 3
        %s349 = smul.addr %s348, 8
        %s350 = scalar_lea.vmem %s1, %s349
        %s351 = smul.u32 2, %s17
      $region52: #{_lambda_.1} parent=43 // pred_fallthru
        _
      // Predicated region
      $region53: #{_lambda_.1} parent=43 // pred_check
        %p352 = pneg %p89
      $region54: #{_lambda_.1} parent=43 // pred_check_branch
        %354 = sbr.rel (%p352) target = $region56
      $region55: #{_lambda_.1} parent=43 // pred_region
        %s355 = smul.u32 2, %s17
        %p356 = scmp.lt.s32.totalorder %s355, 3
        %s357 = scalar_select %p356, %s355, 3
        %s358 = smul.addr %s357, 8
        %s359 = scalar_lea.vmem %s2, %s358
        %s360 = smul.u32 2, %s17
      $region56: #{_lambda_.1} parent=43 // pred_fallthru
        _
      // Predicated region
      $region57: #{_lambda_.1} parent=43 // pred_check
        %p361 = pneg %p115
      $region58: #{_lambda_.1} parent=43 // pred_check_branch
        %363 = sbr.rel (%p361) target = $region60
      $region59: #{_lambda_.1} parent=43 // pred_region
        %p364 = scmp.lt.s32.totalorder %s17, 1
        %s365 = scalar_select %p364, %s17, 1
        %s366 = smul.addr %s365, 2
        %s367 = scalar_lea.vmem %s3, %s366
      $region60: #{_lambda_.1} parent=43 // pred_fallthru
        _
    $region44: #{_lambda_.1} parent=5 // pred_fallthru
      _
    %p368 = scmp.le.s32.totalorder 1, %s17
    %p369 = scmp.lt.s32.totalorder %s17, 3
    %p370 = pnand %p368, %p369
    %p371 = pneg %p370
    // Predicated region
    $region61: #{_lambda_.1} parent=5 // pred_check
      _
    $region62: #{_lambda_.1} parent=5 // pred_check_branch
      %373 = sbr.rel (%p370) target = $region64
    $region63: #{_lambda_.1} parent=5 // pred_region
      %s374 = ssub.s32 %s17, 1
      %s375 = smul.u32 2, %s22
      %p376 = scmp.lt.s32.totalorder %s375, 3
      %s377 = scalar_select %p376, %s375, 3
      %s378 = smul.addr %s377, 8
      %s379 = scalar_lea.vmem %s0, %s378
      %p380 = pneg %p43
      %p381 = pneg %p40
      %s382 = smul.u32 2, %s22
      %p383 = scmp.lt.s32.totalorder %s382, 3
      %s384 = scalar_select %p383, %s382, 3
      %s385 = smul.addr %s384, 8
      %s386 = scalar_lea.vmem %s1, %s385
      %p387 = pneg %p69
      %p388 = pneg %p66
      %s389 = smul.u32 2, %s22
      %p390 = scmp.lt.s32.totalorder %s389, 3
      %s391 = scalar_select %p390, %s389, 3
      %s392 = smul.addr %s391, 8
      %s393 = scalar_lea.vmem %s2, %s392
      %p394 = pneg %p95
      %p395 = pneg %p92
      %p396 = scmp.lt.s32.totalorder %s22, 1
      %s397 = scalar_select %p396, %s22, 1
      %s398 = smul.addr %s397, 2
      %s399 = scalar_lea.vmem %s3, %s398
      %p400 = pneg %p121
      %p401 = pneg %p118
      %p402 = pneg %p142
      %p403 = pneg %p139
      %p404 = pneg %p163
      %p405 = pneg %p160
      %p406 = pneg %p184
      %p407 = pneg %p181
      %p408 = pneg %p205
      %p409 = pneg %p202
      %p410 = pneg %p226
      %p411 = pneg %p223
      %p412 = pneg %p247
      %p413 = pneg %p244
      %p414 = pneg %p268
      %p415 = pneg %p265
      %p416 = pneg %p294
      %p417 = pneg %p291
      %s418 = smul.u32 2, %s22
      %p419 = scmp.lt.s32.totalorder %s418, 3
      %s420 = scalar_select %p419, %s418, 3
      %s421 = smul.addr %s420, 8
      %s422 = scalar_lea.vmem %s11, %s421
      %s423 = smul.u32 2, %s22
      %p424 = scmp.lt.s32.totalorder %s423, 3
      %s425 = scalar_select %p424, %s423, 3
      %s426 = smul.addr %s425, 8
      %s427 = scalar_lea.vmem %s0, %s426
      %s428 = smul.u32 2, %s22
      %s429 = smul.u32 2, %s22
      %p430 = scmp.lt.s32.totalorder %s429, 3
      %s431 = scalar_select %p430, %s429, 3
      %s432 = smul.addr %s431, 8
      %s433 = scalar_lea.vmem %s1, %s432
      %s434 = smul.u32 2, %s22
      %s435 = smul.u32 2, %s22
      %p436 = scmp.lt.s32.totalorder %s435, 3
      %s437 = scalar_select %p436, %s435, 3
      %s438 = smul.addr %s437, 8
      %s439 = scalar_lea.vmem %s2, %s438
      %s440 = smul.u32 2, %s22
      %p441 = scmp.lt.s32.totalorder %s22, 1
      %s442 = scalar_select %p441, %s22, 1
      %s443 = smul.addr %s442, 2
      %s444 = scalar_lea.vmem %s3, %s443
      %s445 = smul.u32 2, %s22
      %p446 = scmp.lt.s32.totalorder %s445, 3
      %s447 = scalar_select %p446, %s445, 3
      %s448 = smul.addr %s447, 8
      %s449 = scalar_lea.vmem %s11, %s448
      %s450 = smul.u32 2, %s22
      %v451 = vld [vmem:[%s427] sm:$0xff]
      %v452 = vld [vmem:[%s427 + $0x8] sm:$0xff]
      %v453 = vld [vmem:[%s433] sm:$0xff]
      %v454 = vld [vmem:[%s433 + $0x8] sm:$0xff]
      %v455 = vld [vmem:[%s439] sm:$0xff]
      %v456 = vld [vmem:[%s439 + $0x8] sm:$0xff]
      %v457 = vld [vmem:[%s444] sm:$0x3]
      %v458 = vld [vmem:[%s5] sm:$0xf]
      %v459 = vld [vmem:[%s10 + $0x3] sm:$0x1]
      %v461 = vlaneseq
      %v462 = vshrl.u32 %v461, 7
      %v463 = vsub.s32 0, %v462
      %v464 = vrot.slane %v459, %v463
      %vm466 = vcmask 31744
      %v468 = vsel %vm466, %v451, 0
      %v471 = vsel %vm466, %v452, 0
      %vm473 = vcmask 1043456
      %v475 = vsel %vm473, %v458, 0
      %477 = vmatprep.subr.mxu0 0.0
      %478 = vmatpush1.msra.mxu0 0.0
      %479 = vmatprep.subr.mxu0 0.0
      %480 = vmatpush1.msra.mxu0 0.0
      %481 = vmatprep.subr.mxu0 0.0
      %482 = vmatpush1.msra.mxu0 0.0
      %483 = vmatprep.subr.mxu0 0.0
      %484 = vmatpush1.msra.mxu0 0.0
      %485 = vmatprep.subr.mxu0 0.0
      %486 = vmatpush1.msra.mxu0 0.0
      %487 = vmatprep.subr.mxu0 0.0
      %488 = vmatpush1.msra.mxu0 0.0
      %489 = vmatprep.subr.mxu0 0.0
      %490 = vmatpush1.msra.mxu0 0.0
      %491 = vmatprep.subr.mxu0 0.0
      %492 = vmatpush1.msra.mxu0 0.0
      %493 = vmatprep.subr.mxu0 0.0
      %494 = vmatpush1.msra.mxu0 0.0
      %495 = vmatprep.subr.mxu0 0.0
      %496 = vmatpush1.msra.mxu0 0.0
      %497 = vmatprep.subr.mxu0 0.0
      %498 = vmatpush1.msra.mxu0 0.0
      %499 = vmatprep.subr.mxu0 0.0
      %500 = vmatpush1.msra.mxu0 0.0
      %501 = vmatprep.subr.mxu0 0.0
      %502 = vmatpush1.msra.mxu0 0.0
      %503 = vmatprep.subr.mxu0 0.0
      %504 = vmatpush1.msra.mxu0 0.0
      %505 = vmatprep.subr.mxu0 0.0
      %506 = vmatpush1.msra.mxu0 0.0
      %507 = vmatprep.subr.mxu0 0.0
      %508 = vmatpush1.msra.mxu0 %v475
      %509 = vmatprep.subr.mxu0 0.0
      %510 = vmatpush2.msra.mxu0 0.0
      %511 = vmatprep.subr.mxu0 0.0
      %512 = vmatpush2.msra.mxu0 0.0
      %513 = vmatprep.subr.mxu0 0.0
      %514 = vmatpush2.msra.mxu0 0.0
      %515 = vmatprep.subr.mxu0 0.0
      %516 = vmatpush2.msra.mxu0 0.0
      %517 = vmatprep.subr.mxu0 0.0
      %518 = vmatpush2.msra.mxu0 0.0
      %519 = vmatprep.subr.mxu0 0.0
      %520 = vmatpush2.msra.mxu0 0.0
      %521 = vmatprep.subr.mxu0 0.0
      %522 = vmatpush2.msra.mxu0 0.0
      %523 = vmatprep.subr.mxu0 0.0
      %524 = vmatpush2.msra.mxu0 0.0
      %525 = vmatprep.subr.mxu0 0.0
      %526 = vmatpush2.msra.mxu0 0.0
      %527 = vmatprep.subr.mxu0 0.0
      %528 = vmatpush2.msra.mxu0 0.0
      %529 = vmatprep.subr.mxu0 0.0
      %530 = vmatpush2.msra.mxu0 0.0
      %531 = vmatprep.subr.mxu0 0.0
      %532 = vmatpush2.msra.mxu0 0.0
      %533 = vmatprep.subr.mxu0 0.0
      %534 = vmatpush2.msra.mxu0 0.0
      %535 = vmatprep.subr.mxu0 0.0
      %536 = vmatpush2.msra.mxu0 0.0
      %537 = vmatprep.subr.mxu0 0.0
      %538 = vmatpush2.msra.mxu0 0.0
      %539 = vmatprep.subr.mxu0 0.0
      %540 = vmatpush2.msra.mxu0 0.0
      %541 = vmatprep.mubr.f32.mxu0 0.0
      %542 = vmatmul.mubr.f32.gmra.mxu0 %v468
      %v543 = vpop.f32.mrf.mxu0
      %v544 = vadd.f32 %v464, %v543
      %v545 = vpop.f32.mrf.mxu0
      %546 = vmatprep.mubr.f32.mxu0 0.0
      %547 = vmatmul.mubr.f32.gmra.mxu0 %v471
      %v548 = vpop.f32.mrf.mxu0
      %v549 = vadd.f32 %v464, %v548
      %v550 = vpop.f32.mrf.mxu0
      %551 = vdwg.mxu0
      %v552 = vmax.f32 %v544, 0.0
      %v553 = vmax.f32 %v549, 0.0
      %v554 = vld [vmem:[%s9] sm:$0xff]
      %v555 = vld [vmem:[%s9 + $0x8] sm:$0xff]
      %v556 = vld [vmem:[%s9 + $0x10] sm:$0xff]
      %v557 = vld [vmem:[%s9 + $0x18] sm:$0xff]
      %v558 = vld [vmem:[%s9 + $0x20] sm:$0xff]
      %v559 = vld [vmem:[%s9 + $0x28] sm:$0xff]
      %v560 = vld [vmem:[%s9 + $0x30] sm:$0xff]
      %v561 = vld [vmem:[%s9 + $0x38] sm:$0xff]
      %v562 = vld [vmem:[%s10 + $0x4] sm:$0x1]
      %v564 = vlaneseq
      %v565 = vshrl.u32 %v564, 7
      %v566 = vsub.s32 0, %v565
      %v567 = vrot.slane %v562, %v566
      %vm569 = vcmask 523264
      %v571 = vsel %vm569, %v552, 0
      %v574 = vsel %vm569, %v553, 0
      %576 = vmatprep.subr.mxu0 0.0
      %577 = vmatpush1.msra.mxu0 0.0
      %578 = vmatprep.subr.mxu0 0.0
      %579 = vmatpush1.msra.mxu0 0.0
      %580 = vmatprep.subr.mxu0 0.0
      %581 = vmatpush1.msra.mxu0 0.0
      %582 = vmatprep.subr.mxu0 0.0
      %583 = vmatpush1.msra.mxu0 0.0
      %584 = vmatprep.subr.mxu0 0.0
      %585 = vmatpush1.msra.mxu0 0.0
      %586 = vmatprep.subr.mxu0 0.0
      %587 = vmatpush1.msra.mxu0 0.0
      %588 = vmatprep.subr.mxu0 0.0
      %589 = vmatpush1.msra.mxu0 0.0
      %590 = vmatprep.subr.mxu0 0.0
      %591 = vmatpush1.msra.mxu0 0.0
      %592 = vmatprep.subr.mxu0 0.0
      %593 = vmatpush1.msra.mxu0 %v561
      %594 = vmatprep.subr.mxu0 0.0
      %595 = vmatpush1.msra.mxu0 %v560
      %596 = vmatprep.subr.mxu0 0.0
      %597 = vmatpush1.msra.mxu0 %v559
      %598 = vmatprep.subr.mxu0 0.0
      %599 = vmatpush1.msra.mxu0 %v558
      %600 = vmatprep.subr.mxu0 0.0
      %601 = vmatpush1.msra.mxu0 %v557
      %602 = vmatprep.subr.mxu0 0.0
      %603 = vmatpush1.msra.mxu0 %v556
      %604 = vmatprep.subr.mxu0 0.0
      %605 = vmatpush1.msra.mxu0 %v555
      %606 = vmatprep.subr.mxu0 0.0
      %607 = vmatpush1.msra.mxu0 %v554
      %608 = vmatprep.subr.mxu0 0.0
      %609 = vmatpush2.msra.mxu0 0.0
      %610 = vmatprep.subr.mxu0 0.0
      %611 = vmatpush2.msra.mxu0 0.0
      %612 = vmatprep.subr.mxu0 0.0
      %613 = vmatpush2.msra.mxu0 0.0
      %614 = vmatprep.subr.mxu0 0.0
      %615 = vmatpush2.msra.mxu0 0.0
      %616 = vmatprep.subr.mxu0 0.0
      %617 = vmatpush2.msra.mxu0 0.0
      %618 = vmatprep.subr.mxu0 0.0
      %619 = vmatpush2.msra.mxu0 0.0
      %620 = vmatprep.subr.mxu0 0.0
      %621 = vmatpush2.msra.mxu0 0.0
      %622 = vmatprep.subr.mxu0 0.0
      %623 = vmatpush2.msra.mxu0 0.0
      %624 = vmatprep.subr.mxu0 0.0
      %625 = vmatpush2.msra.mxu0 0.0
      %626 = vmatprep.subr.mxu0 0.0
      %627 = vmatpush2.msra.mxu0 0.0
      %628 = vmatprep.subr.mxu0 0.0
      %629 = vmatpush2.msra.mxu0 0.0
      %630 = vmatprep.subr.mxu0 0.0
      %631 = vmatpush2.msra.mxu0 0.0
      %632 = vmatprep.subr.mxu0 0.0
      %633 = vmatpush2.msra.mxu0 0.0
      %634 = vmatprep.subr.mxu0 0.0
      %635 = vmatpush2.msra.mxu0 0.0
      %636 = vmatprep.subr.mxu0 0.0
      %637 = vmatpush2.msra.mxu0 0.0
      %638 = vmatprep.subr.mxu0 0.0
      %639 = vmatpush2.msra.mxu0 0.0
      %640 = vmatprep.mubr.f32.mxu0 0.0
      %641 = vmatmul.mubr.f32.gmra.mxu0 %v571
      %v642 = vpop.f32.mrf.mxu0
      %v643 = vadd.f32 %v567, %v642
      %v644 = vpop.f32.mrf.mxu0
      %645 = vmatprep.mubr.f32.mxu0 0.0
      %646 = vmatmul.mubr.f32.gmra.mxu0 %v574
      %v647 = vpop.f32.mrf.mxu0
      %v648 = vadd.f32 %v567, %v647
      %v649 = vpop.f32.mrf.mxu0
      %650 = vdwg.mxu0
      %s651 = scalar_lea.vmem %s4, 8
      %v652 = vld [vmem:[%s651] sm:$0x7]
      %v653 = vld [vmem:[%s10 + $0x9] sm:$0x1]
      %v655 = vlaneseq
      %v656 = vshrl.u32 %v655, 7
      %v657 = vsub.s32 0, %v656
      %v658 = vrot.slane %v653, %v657
      %vm660 = vcmask 23552
      %v662 = vsel %vm660, %v455, 0
      %v665 = vsel %vm660, %v456, 0
      %vm667 = vcmask 1042432
      %v669 = vsel %vm667, %v652, 0
      %671 = vmatprep.subr.mxu0 0.0
      %672 = vmatpush1.msra.mxu0 0.0
      %673 = vmatprep.subr.mxu0 0.0
      %674 = vmatpush1.msra.mxu0 0.0
      %675 = vmatprep.subr.mxu0 0.0
      %676 = vmatpush1.msra.mxu0 0.0
      %677 = vmatprep.subr.mxu0 0.0
      %678 = vmatpush1.msra.mxu0 0.0
      %679 = vmatprep.subr.mxu0 0.0
      %680 = vmatpush1.msra.mxu0 0.0
      %681 = vmatprep.subr.mxu0 0.0
      %682 = vmatpush1.msra.mxu0 0.0
      %683 = vmatprep.subr.mxu0 0.0
      %684 = vmatpush1.msra.mxu0 0.0
      %685 = vmatprep.subr.mxu0 0.0
      %686 = vmatpush1.msra.mxu0 0.0
      %687 = vmatprep.subr.mxu0 0.0
      %688 = vmatpush1.msra.mxu0 0.0
      %689 = vmatprep.subr.mxu0 0.0
      %690 = vmatpush1.msra.mxu0 0.0
      %691 = vmatprep.subr.mxu0 0.0
      %692 = vmatpush1.msra.mxu0 0.0
      %693 = vmatprep.subr.mxu0 0.0
      %694 = vmatpush1.msra.mxu0 0.0
      %695 = vmatprep.subr.mxu0 0.0
      %696 = vmatpush1.msra.mxu0 0.0
      %697 = vmatprep.subr.mxu0 0.0
      %698 = vmatpush1.msra.mxu0 0.0
      %699 = vmatprep.subr.mxu0 0.0
      %700 = vmatpush1.msra.mxu0 0.0
      %701 = vmatprep.subr.mxu0 0.0
      %702 = vmatpush1.msra.mxu0 %v669
      %703 = vmatprep.subr.mxu0 0.0
      %704 = vmatpush2.msra.mxu0 0.0
      %705 = vmatprep.subr.mxu0 0.0
      %706 = vmatpush2.msra.mxu0 0.0
      %707 = vmatprep.subr.mxu0 0.0
      %708 = vmatpush2.msra.mxu0 0.0
      %709 = vmatprep.subr.mxu0 0.0
      %710 = vmatpush2.msra.mxu0 0.0
      %711 = vmatprep.subr.mxu0 0.0
      %712 = vmatpush2.msra.mxu0 0.0
      %713 = vmatprep.subr.mxu0 0.0
      %714 = vmatpush2.msra.mxu0 0.0
      %715 = vmatprep.subr.mxu0 0.0
      %716 = vmatpush2.msra.mxu0 0.0
      %717 = vmatprep.subr.mxu0 0.0
      %718 = vmatpush2.msra.mxu0 0.0
      %719 = vmatprep.subr.mxu0 0.0
      %720 = vmatpush2.msra.mxu0 0.0
      %721 = vmatprep.subr.mxu0 0.0
      %722 = vmatpush2.msra.mxu0 0.0
      %723 = vmatprep.subr.mxu0 0.0
      %724 = vmatpush2.msra.mxu0 0.0
      %725 = vmatprep.subr.mxu0 0.0
      %726 = vmatpush2.msra.mxu0 0.0
      %727 = vmatprep.subr.mxu0 0.0
      %728 = vmatpush2.msra.mxu0 0.0
      %729 = vmatprep.subr.mxu0 0.0
      %730 = vmatpush2.msra.mxu0 0.0
      %731 = vmatprep.subr.mxu0 0.0
      %732 = vmatpush2.msra.mxu0 0.0
      %733 = vmatprep.subr.mxu0 0.0
      %734 = vmatpush2.msra.mxu0 0.0
      %735 = vmatprep.mubr.f32.mxu0 0.0
      %736 = vmatmul.mubr.f32.gmra.mxu0 %v662
      %v737 = vpop.f32.mrf.mxu0
      %v738 = vadd.f32 %v658, %v737
      %v739 = vpop.f32.mrf.mxu0
      %740 = vmatprep.mubr.f32.mxu0 0.0
      %741 = vmatmul.mubr.f32.gmra.mxu0 %v665
      %v742 = vpop.f32.mrf.mxu0
      %v743 = vadd.f32 %v658, %v742
      %v744 = vpop.f32.mrf.mxu0
      %745 = vdwg.mxu0
      %v746 = vmax.f32 %v738, 0.0
      %v747 = vmax.f32 %v743, 0.0
      %s748 = scalar_lea.vmem %s4, 4
      %v749 = vld [vmem:[%s748] sm:$0x7]
      %v750 = vld [vmem:[%s10 + $0x5] sm:$0x1]
      %v752 = vlaneseq
      %v753 = vshrl.u32 %v752, 7
      %v754 = vsub.s32 0, %v753
      %v755 = vrot.slane %v750, %v754
      %v758 = vsel %vm660, %v453, 0
      %v761 = vsel %vm660, %v454, 0
      %v764 = vsel %vm667, %v749, 0
      %766 = vmatprep.subr.mxu0 0.0
      %767 = vmatpush1.msra.mxu0 0.0
      %768 = vmatprep.subr.mxu0 0.0
      %769 = vmatpush1.msra.mxu0 0.0
      %770 = vmatprep.subr.mxu0 0.0
      %771 = vmatpush1.msra.mxu0 0.0
      %772 = vmatprep.subr.mxu0 0.0
      %773 = vmatpush1.msra.mxu0 0.0
      %774 = vmatprep.subr.mxu0 0.0
      %775 = vmatpush1.msra.mxu0 0.0
      %776 = vmatprep.subr.mxu0 0.0
      %777 = vmatpush1.msra.mxu0 0.0
      %778 = vmatprep.subr.mxu0 0.0
      %779 = vmatpush1.msra.mxu0 0.0
      %780 = vmatprep.subr.mxu0 0.0
      %781 = vmatpush1.msra.mxu0 0.0
      %782 = vmatprep.subr.mxu0 0.0
      %783 = vmatpush1.msra.mxu0 0.0
      %784 = vmatprep.subr.mxu0 0.0
      %785 = vmatpush1.msra.mxu0 0.0
      %786 = vmatprep.subr.mxu0 0.0
      %787 = vmatpush1.msra.mxu0 0.0
      %788 = vmatprep.subr.mxu0 0.0
      %789 = vmatpush1.msra.mxu0 0.0
      %790 = vmatprep.subr.mxu0 0.0
      %791 = vmatpush1.msra.mxu0 0.0
      %792 = vmatprep.subr.mxu0 0.0
      %793 = vmatpush1.msra.mxu0 0.0
      %794 = vmatprep.subr.mxu0 0.0
      %795 = vmatpush1.msra.mxu0 0.0
      %796 = vmatprep.subr.mxu0 0.0
      %797 = vmatpush1.msra.mxu0 %v764
      %798 = vmatprep.subr.mxu0 0.0
      %799 = vmatpush2.msra.mxu0 0.0
      %800 = vmatprep.subr.mxu0 0.0
      %801 = vmatpush2.msra.mxu0 0.0
      %802 = vmatprep.subr.mxu0 0.0
      %803 = vmatpush2.msra.mxu0 0.0
      %804 = vmatprep.subr.mxu0 0.0
      %805 = vmatpush2.msra.mxu0 0.0
      %806 = vmatprep.subr.mxu0 0.0
      %807 = vmatpush2.msra.mxu0 0.0
      %808 = vmatprep.subr.mxu0 0.0
      %809 = vmatpush2.msra.mxu0 0.0
      %810 = vmatprep.subr.mxu0 0.0
      %811 = vmatpush2.msra.mxu0 0.0
      %812 = vmatprep.subr.mxu0 0.0
      %813 = vmatpush2.msra.mxu0 0.0
      %814 = vmatprep.subr.mxu0 0.0
      %815 = vmatpush2.msra.mxu0 0.0
      %816 = vmatprep.subr.mxu0 0.0
      %817 = vmatpush2.msra.mxu0 0.0
      %818 = vmatprep.subr.mxu0 0.0
      %819 = vmatpush2.msra.mxu0 0.0
      %820 = vmatprep.subr.mxu0 0.0
      %821 = vmatpush2.msra.mxu0 0.0
      %822 = vmatprep.subr.mxu0 0.0
      %823 = vmatpush2.msra.mxu0 0.0
      %824 = vmatprep.subr.mxu0 0.0
      %825 = vmatpush2.msra.mxu0 0.0
      %826 = vmatprep.subr.mxu0 0.0
      %827 = vmatpush2.msra.mxu0 0.0
      %828 = vmatprep.subr.mxu0 0.0
      %829 = vmatpush2.msra.mxu0 0.0
      %830 = vmatprep.mubr.f32.mxu0 0.0
      %831 = vmatmul.mubr.f32.gmra.mxu0 %v758
      %v832 = vpop.f32.mrf.mxu0
      %v833 = vadd.f32 %v755, %v832
      %v834 = vpop.f32.mrf.mxu0
      %835 = vmatprep.mubr.f32.mxu0 0.0
      %836 = vmatmul.mubr.f32.gmra.mxu0 %v761
      %v837 = vpop.f32.mrf.mxu0
      %v838 = vadd.f32 %v755, %v837
      %v839 = vpop.f32.mrf.mxu0
      %840 = vdwg.mxu0
      %v841 = vmax.f32 %v833, 0.0
      %v842 = vmax.f32 %v838, 0.0
      %s843 = scalar_lea.vmem %s7, 160
      %v844 = vld [vmem:[%s843] sm:$0xff]
      %v845 = vld [vmem:[%s843 + $0x8] sm:$0xff]
      %v846 = vld [vmem:[%s843 + $0x10] sm:$0xff]
      %v847 = vld [vmem:[%s843 + $0x18] sm:$0xff]
      %v848 = vld [vmem:[%s10 + $0xa] sm:$0x1]
      %v850 = vlaneseq
      %v851 = vshrl.u32 %v850, 7
      %v852 = vsub.s32 0, %v851
      %v853 = vrot.slane %v848, %v852
      %vm855 = vcmask 261120
      %v857 = vsel %vm855, %v746, 0
      %v860 = vsel %vm855, %v747, 0
      %862 = vmatprep.subr.mxu0 0.0
      %863 = vmatpush1.msra.mxu0 0.0
      %864 = vmatprep.subr.mxu0 0.0
      %865 = vmatpush1.msra.mxu0 0.0
      %866 = vmatprep.subr.mxu0 0.0
      %867 = vmatpush1.msra.mxu0 0.0
      %868 = vmatprep.subr.mxu0 0.0
      %869 = vmatpush1.msra.mxu0 0.0
      %870 = vmatprep.subr.mxu0 0.0
      %871 = vmatpush1.msra.mxu0 0.0
      %872 = vmatprep.subr.mxu0 0.0
      %873 = vmatpush1.msra.mxu0 0.0
      %874 = vmatprep.subr.mxu0 0.0
      %875 = vmatpush1.msra.mxu0 0.0
      %876 = vmatprep.subr.mxu0 0.0
      %877 = vmatpush1.msra.mxu0 0.0
      %878 = vmatprep.subr.mxu0 0.0
      %879 = vmatpush1.msra.mxu0 0.0
      %880 = vmatprep.subr.mxu0 0.0
      %881 = vmatpush1.msra.mxu0 0.0
      %882 = vmatprep.subr.mxu0 0.0
      %883 = vmatpush1.msra.mxu0 0.0
      %884 = vmatprep.subr.mxu0 0.0
      %885 = vmatpush1.msra.mxu0 0.0
      %886 = vmatprep.subr.mxu0 0.0
      %887 = vmatpush1.msra.mxu0 %v847
      %888 = vmatprep.subr.mxu0 0.0
      %889 = vmatpush1.msra.mxu0 %v846
      %890 = vmatprep.subr.mxu0 0.0
      %891 = vmatpush1.msra.mxu0 %v845
      %892 = vmatprep.subr.mxu0 0.0
      %893 = vmatpush1.msra.mxu0 %v844
      %894 = vmatprep.subr.mxu0 0.0
      %895 = vmatpush2.msra.mxu0 0.0
      %896 = vmatprep.subr.mxu0 0.0
      %897 = vmatpush2.msra.mxu0 0.0
      %898 = vmatprep.subr.mxu0 0.0
      %899 = vmatpush2.msra.mxu0 0.0
      %900 = vmatprep.subr.mxu0 0.0
      %901 = vmatpush2.msra.mxu0 0.0
      %902 = vmatprep.subr.mxu0 0.0
      %903 = vmatpush2.msra.mxu0 0.0
      %904 = vmatprep.subr.mxu0 0.0
      %905 = vmatpush2.msra.mxu0 0.0
      %906 = vmatprep.subr.mxu0 0.0
      %907 = vmatpush2.msra.mxu0 0.0
      %908 = vmatprep.subr.mxu0 0.0
      %909 = vmatpush2.msra.mxu0 0.0
      %910 = vmatprep.subr.mxu0 0.0
      %911 = vmatpush2.msra.mxu0 0.0
      %912 = vmatprep.subr.mxu0 0.0
      %913 = vmatpush2.msra.mxu0 0.0
      %914 = vmatprep.subr.mxu0 0.0
      %915 = vmatpush2.msra.mxu0 0.0
      %916 = vmatprep.subr.mxu0 0.0
      %917 = vmatpush2.msra.mxu0 0.0
      %918 = vmatprep.subr.mxu0 0.0
      %919 = vmatpush2.msra.mxu0 0.0
      %920 = vmatprep.subr.mxu0 0.0
      %921 = vmatpush2.msra.mxu0 0.0
      %922 = vmatprep.subr.mxu0 0.0
      %923 = vmatpush2.msra.mxu0 0.0
      %924 = vmatprep.subr.mxu0 0.0
      %925 = vmatpush2.msra.mxu0 0.0
      %926 = vmatprep.mubr.f32.mxu0 0.0
      %927 = vmatmul.mubr.f32.gmra.mxu0 %v857
      %v928 = vpop.f32.mrf.mxu0
      %v929 = vadd.f32 %v853, %v928
      %v930 = vpop.f32.mrf.mxu0
      %931 = vmatprep.mubr.f32.mxu0 0.0
      %932 = vmatmul.mubr.f32.gmra.mxu0 %v860
      %v933 = vpop.f32.mrf.mxu0
      %v934 = vadd.f32 %v853, %v933
      %v935 = vpop.f32.mrf.mxu0
      %936 = vdwg.mxu0
      %s937 = scalar_lea.vmem %s7, 96
      %v938 = vld [vmem:[%s937] sm:$0xff]
      %v939 = vld [vmem:[%s937 + $0x8] sm:$0xff]
      %v940 = vld [vmem:[%s937 + $0x10] sm:$0xff]
      %v941 = vld [vmem:[%s937 + $0x18] sm:$0xff]
      %v942 = vld [vmem:[%s10 + $0x6] sm:$0x1]
      %v944 = vlaneseq
      %v945 = vshrl.u32 %v944, 7
      %v946 = vsub.s32 0, %v945
      %v947 = vrot.slane %v942, %v946
      %v950 = vsel %vm855, %v841, 0
      %v953 = vsel %vm855, %v842, 0
      %955 = vmatprep.subr.mxu0 0.0
      %956 = vmatpush1.msra.mxu0 0.0
      %957 = vmatprep.subr.mxu0 0.0
      %958 = vmatpush1.msra.mxu0 0.0
      %959 = vmatprep.subr.mxu0 0.0
      %960 = vmatpush1.msra.mxu0 0.0
      %961 = vmatprep.subr.mxu0 0.0
      %962 = vmatpush1.msra.mxu0 0.0
      %963 = vmatprep.subr.mxu0 0.0
      %964 = vmatpush1.msra.mxu0 0.0
      %965 = vmatprep.subr.mxu0 0.0
      %966 = vmatpush1.msra.mxu0 0.0
      %967 = vmatprep.subr.mxu0 0.0
      %968 = vmatpush1.msra.mxu0 0.0
      %969 = vmatprep.subr.mxu0 0.0
      %970 = vmatpush1.msra.mxu0 0.0
      %971 = vmatprep.subr.mxu0 0.0
      %972 = vmatpush1.msra.mxu0 0.0
      %973 = vmatprep.subr.mxu0 0.0
      %974 = vmatpush1.msra.mxu0 0.0
      %975 = vmatprep.subr.mxu0 0.0
      %976 = vmatpush1.msra.mxu0 0.0
      %977 = vmatprep.subr.mxu0 0.0
      %978 = vmatpush1.msra.mxu0 0.0
      %979 = vmatprep.subr.mxu0 0.0
      %980 = vmatpush1.msra.mxu0 %v941
      %981 = vmatprep.subr.mxu0 0.0
      %982 = vmatpush1.msra.mxu0 %v940
      %983 = vmatprep.subr.mxu0 0.0
      %984 = vmatpush1.msra.mxu0 %v939
      %985 = vmatprep.subr.mxu0 0.0
      %986 = vmatpush1.msra.mxu0 %v938
      %987 = vmatprep.subr.mxu0 0.0
      %988 = vmatpush2.msra.mxu0 0.0
      %989 = vmatprep.subr.mxu0 0.0
      %990 = vmatpush2.msra.mxu0 0.0
      %991 = vmatprep.subr.mxu0 0.0
      %992 = vmatpush2.msra.mxu0 0.0
      %993 = vmatprep.subr.mxu0 0.0
      %994 = vmatpush2.msra.mxu0 0.0
      %995 = vmatprep.subr.mxu0 0.0
      %996 = vmatpush2.msra.mxu0 0.0
      %997 = vmatprep.subr.mxu0 0.0
      %998 = vmatpush2.msra.mxu0 0.0
      %999 = vmatprep.subr.mxu0 0.0
      %1000 = vmatpush2.msra.mxu0 0.0
      %1001 = vmatprep.subr.mxu0 0.0
      %1002 = vmatpush2.msra.mxu0 0.0
      %1003 = vmatprep.subr.mxu0 0.0
      %1004 = vmatpush2.msra.mxu0 0.0
      %1005 = vmatprep.subr.mxu0 0.0
      %1006 = vmatpush2.msra.mxu0 0.0
      %1007 = vmatprep.subr.mxu0 0.0
      %1008 = vmatpush2.msra.mxu0 0.0
      %1009 = vmatprep.subr.mxu0 0.0
      %1010 = vmatpush2.msra.mxu0 0.0
      %1011 = vmatprep.subr.mxu0 0.0
      %1012 = vmatpush2.msra.mxu0 0.0
      %1013 = vmatprep.subr.mxu0 0.0
      %1014 = vmatpush2.msra.mxu0 0.0
      %1015 = vmatprep.subr.mxu0 0.0
      %1016 = vmatpush2.msra.mxu0 0.0
      %1017 = vmatprep.subr.mxu0 0.0
      %1018 = vmatpush2.msra.mxu0 0.0
      %1019 = vmatprep.mubr.f32.mxu0 0.0
      %1020 = vmatmul.mubr.f32.gmra.mxu0 %v950
      %v1021 = vpop.f32.mrf.mxu0
      %v1022 = vadd.f32 %v947, %v1021
      %v1023 = vpop.f32.mrf.mxu0
      %1024 = vmatprep.mubr.f32.mxu0 0.0
      %1025 = vmatmul.mubr.f32.gmra.mxu0 %v953
      %v1026 = vpop.f32.mrf.mxu0
      %v1027 = vadd.f32 %v947, %v1026
      %v1028 = vpop.f32.mrf.mxu0
      %1029 = vdwg.mxu0
      %v1031 = vsel %vm855, %v643, 0
      %1033 = vmatprep.subr.mxu0 0.0
      %1034 = vmatpush1.xpose.msra.mxu0 0.0
      %1035 = vmatprep.subr.mxu0 0.0
      %1036 = vmatpush1.xpose.msra.mxu0 0.0
      %1037 = vmatprep.subr.mxu0 0.0
      %1038 = vmatpush1.xpose.msra.mxu0 0.0
      %1039 = vmatprep.subr.mxu0 0.0
      %1040 = vmatpush1.xpose.msra.mxu0 0.0
      %1041 = vmatprep.subr.mxu0 0.0
      %1042 = vmatpush1.xpose.msra.mxu0 0.0
      %1043 = vmatprep.subr.mxu0 0.0
      %1044 = vmatpush1.xpose.msra.mxu0 0.0
      %1045 = vmatprep.subr.mxu0 0.0
      %1046 = vmatpush1.xpose.msra.mxu0 0.0
      %1047 = vmatprep.subr.mxu0 0.0
      %1048 = vmatpush1.xpose.msra.mxu0 0.0
      %1049 = vmatprep.subr.mxu0 0.0
      %1050 = vmatpush1.xpose.msra.mxu0 0.0
      %1051 = vmatprep.subr.mxu0 0.0
      %1052 = vmatpush1.xpose.msra.mxu0 0.0
      %1053 = vmatprep.subr.mxu0 0.0
      %1054 = vmatpush1.xpose.msra.mxu0 0.0
      %1055 = vmatprep.subr.mxu0 0.0
      %1056 = vmatpush1.xpose.msra.mxu0 0.0
      %1057 = vmatprep.subr.mxu0 0.0
      %1058 = vmatpush1.xpose.msra.mxu0 0.0
      %1059 = vmatprep.subr.mxu0 0.0
      %1060 = vmatpush1.xpose.msra.mxu0 0.0
      %1061 = vmatprep.subr.mxu0 0.0
      %1062 = vmatpush1.xpose.msra.mxu0 0.0
      %1063 = vmatprep.subr.mxu0 0.0
      %1064 = vmatpush1.xpose.msra.mxu0 %v1031
      %1065 = vmatprep.subr.mxu0 0.0
      %1066 = vmatpush2.xpose.msra.mxu0 0.0
      %1067 = vmatprep.subr.mxu0 0.0
      %1068 = vmatpush2.xpose.msra.mxu0 0.0
      %1069 = vmatprep.subr.mxu0 0.0
      %1070 = vmatpush2.xpose.msra.mxu0 0.0
      %1071 = vmatprep.subr.mxu0 0.0
      %1072 = vmatpush2.xpose.msra.mxu0 0.0
      %1073 = vmatprep.subr.mxu0 0.0
      %1074 = vmatpush2.xpose.msra.mxu0 0.0
      %1075 = vmatprep.subr.mxu0 0.0
      %1076 = vmatpush2.xpose.msra.mxu0 0.0
      %1077 = vmatprep.subr.mxu0 0.0
      %1078 = vmatpush2.xpose.msra.mxu0 0.0
      %1079 = vmatprep.subr.mxu0 0.0
      %1080 = vmatpush2.xpose.msra.mxu0 0.0
      %1081 = vmatprep.subr.mxu0 0.0
      %1082 = vmatpush2.xpose.msra.mxu0 0.0
      %1083 = vmatprep.subr.mxu0 0.0
      %1084 = vmatpush2.xpose.msra.mxu0 0.0
      %1085 = vmatprep.subr.mxu0 0.0
      %1086 = vmatpush2.xpose.msra.mxu0 0.0
      %1087 = vmatprep.subr.mxu0 0.0
      %1088 = vmatpush2.xpose.msra.mxu0 0.0
      %1089 = vmatprep.subr.mxu0 0.0
      %1090 = vmatpush2.xpose.msra.mxu0 0.0
      %1091 = vmatprep.subr.mxu0 0.0
      %1092 = vmatpush2.xpose.msra.mxu0 0.0
      %1093 = vmatprep.subr.mxu0 0.0
      %1094 = vmatpush2.xpose.msra.mxu0 0.0
      %1095 = vmatprep.subr.mxu0 0.0
      %1096 = vmatpush2.xpose.msra.mxu0 0.0
      %1097 = vmatprep.mubr.f32.mxu0 0.0
      %1098 = vmatmul.mubr.f32.gmra.mxu0 %v1031
      %v1099 = vpop.f32.mrf.mxu0
      %v1100 = vadd.f32 0.0, %v1099
      %v1101 = vpop.f32.mrf.mxu0
      %1102 = vdwg.mxu0
      %v1103 = vmul.f32 %v1100, 0.17677669
      %vm1104 = vcmask 64512
      %v1105 = vsel %vm1104, %v1103, -inf
      %1106 = vmax.xlane.f32.xlu0 %v1105
      %v1107 = vpop.xlane.xlu0 %1106
      %v1108 = vsub.f32 %v1103, %v1107
      %v1109 = vmul.f32 %v1108, 1.442695
      %v1110 = vpow.pop %v1109
      %v1111 = vsel %vm1104, %v1110, 0.0
      %1112 = vadd.xlane.f32.xlu0 %v1111
      %v1113 = vpop.xlane.xlu0 %1112
      %v1114 = vrcp.pop %v1113
      %v1115 = vmul.f32 %v1110, %v1114
      %v1117 = vsel %vm1104, %v1115, 0
      %1119 = vmatprep.subr.mxu0 0.0
      %1120 = vmatpush1.msra.mxu0 0.0
      %1121 = vmatprep.subr.mxu0 0.0
      %1122 = vmatpush1.msra.mxu0 0.0
      %1123 = vmatprep.subr.mxu0 0.0
      %1124 = vmatpush1.msra.mxu0 0.0
      %1125 = vmatprep.subr.mxu0 0.0
      %1126 = vmatpush1.msra.mxu0 0.0
      %1127 = vmatprep.subr.mxu0 0.0
      %1128 = vmatpush1.msra.mxu0 0.0
      %1129 = vmatprep.subr.mxu0 0.0
      %1130 = vmatpush1.msra.mxu0 0.0
      %1131 = vmatprep.subr.mxu0 0.0
      %1132 = vmatpush1.msra.mxu0 0.0
      %1133 = vmatprep.subr.mxu0 0.0
      %1134 = vmatpush1.msra.mxu0 0.0
      %1135 = vmatprep.subr.mxu0 0.0
      %1136 = vmatpush1.msra.mxu0 0.0
      %1137 = vmatprep.subr.mxu0 0.0
      %1138 = vmatpush1.msra.mxu0 0.0
      %1139 = vmatprep.subr.mxu0 0.0
      %1140 = vmatpush1.msra.mxu0 0.0
      %1141 = vmatprep.subr.mxu0 0.0
      %1142 = vmatpush1.msra.mxu0 0.0
      %1143 = vmatprep.subr.mxu0 0.0
      %1144 = vmatpush1.msra.mxu0 0.0
      %1145 = vmatprep.subr.mxu0 0.0
      %1146 = vmatpush1.msra.mxu0 0.0
      %1147 = vmatprep.subr.mxu0 0.0
      %1148 = vmatpush1.msra.mxu0 0.0
      %1149 = vmatprep.subr.mxu0 0.0
      %1150 = vmatpush1.msra.mxu0 %v643
      %1151 = vmatprep.subr.mxu0 0.0
      %1152 = vmatpush2.msra.mxu0 0.0
      %1153 = vmatprep.subr.mxu0 0.0
      %1154 = vmatpush2.msra.mxu0 0.0
      %1155 = vmatprep.subr.mxu0 0.0
      %1156 = vmatpush2.msra.mxu0 0.0
      %1157 = vmatprep.subr.mxu0 0.0
      %1158 = vmatpush2.msra.mxu0 0.0
      %1159 = vmatprep.subr.mxu0 0.0
      %1160 = vmatpush2.msra.mxu0 0.0
      %1161 = vmatprep.subr.mxu0 0.0
      %1162 = vmatpush2.msra.mxu0 0.0
      %1163 = vmatprep.subr.mxu0 0.0
      %1164 = vmatpush2.msra.mxu0 0.0
      %1165 = vmatprep.subr.mxu0 0.0
      %1166 = vmatpush2.msra.mxu0 0.0
      %1167 = vmatprep.subr.mxu0 0.0
      %1168 = vmatpush2.msra.mxu0 0.0
      %1169 = vmatprep.subr.mxu0 0.0
      %1170 = vmatpush2.msra.mxu0 0.0
      %1171 = vmatprep.subr.mxu0 0.0
      %1172 = vmatpush2.msra.mxu0 0.0
      %1173 = vmatprep.subr.mxu0 0.0
      %1174 = vmatpush2.msra.mxu0 0.0
      %1175 = vmatprep.subr.mxu0 0.0
      %1176 = vmatpush2.msra.mxu0 0.0
      %1177 = vmatprep.subr.mxu0 0.0
      %1178 = vmatpush2.msra.mxu0 0.0
      %1179 = vmatprep.subr.mxu0 0.0
      %1180 = vmatpush2.msra.mxu0 0.0
      %1181 = vmatprep.subr.mxu0 0.0
      %1182 = vmatpush2.msra.mxu0 0.0
      %1183 = vmatprep.mubr.f32.mxu0 0.0
      %1184 = vmatmul.mubr.f32.gmra.mxu0 %v1117
      %v1185 = vpop.f32.mrf.mxu0
      %v1186 = vadd.f32 0.0, %v1185
      %v1187 = vpop.f32.mrf.mxu0
      %1188 = vdwg.mxu0
      %v1189 = vsel %vm855, %v1186, 0.0
      %v1190 = vrot.slane %v1189, 4
      %v1191 = vadd.f32 %v1189, %v1190
      %v1192 = vrot.slane %v1191, 2
      %v1193 = vadd.f32 %v1191, %v1192
      %v1194 = vrot.slane %v1193, 1
      %v1195 = vadd.f32 %v1193, %v1194
      %v1196 = vrcp.pop 8.0
      %v1197 = vmul.f32 %v1195, %v1196
      %1198 = vrot.lane.b32.xlu0 %v643, 96
      %v1199 = vpop.permute.xlu0 %1198
      %v1200 = vsel %vm855, %v1199, 0
      %1202 = vmatprep.subr.mxu0 0.0
      %1203 = vmatpush1.xpose.msra.mxu0 0.0
      %1204 = vmatprep.subr.mxu0 0.0
      %1205 = vmatpush1.xpose.msra.mxu0 0.0
      %1206 = vmatprep.subr.mxu0 0.0
      %1207 = vmatpush1.xpose.msra.mxu0 0.0
      %1208 = vmatprep.subr.mxu0 0.0
      %1209 = vmatpush1.xpose.msra.mxu0 0.0
      %1210 = vmatprep.subr.mxu0 0.0
      %1211 = vmatpush1.xpose.msra.mxu0 0.0
      %1212 = vmatprep.subr.mxu0 0.0
      %1213 = vmatpush1.xpose.msra.mxu0 0.0
      %1214 = vmatprep.subr.mxu0 0.0
      %1215 = vmatpush1.xpose.msra.mxu0 0.0
      %1216 = vmatprep.subr.mxu0 0.0
      %1217 = vmatpush1.xpose.msra.mxu0 0.0
      %1218 = vmatprep.subr.mxu0 0.0
      %1219 = vmatpush1.xpose.msra.mxu0 0.0
      %1220 = vmatprep.subr.mxu0 0.0
      %1221 = vmatpush1.xpose.msra.mxu0 0.0
      %1222 = vmatprep.subr.mxu0 0.0
      %1223 = vmatpush1.xpose.msra.mxu0 0.0
      %1224 = vmatprep.subr.mxu0 0.0
      %1225 = vmatpush1.xpose.msra.mxu0 0.0
      %1226 = vmatprep.subr.mxu0 0.0
      %1227 = vmatpush1.xpose.msra.mxu0 0.0
      %1228 = vmatprep.subr.mxu0 0.0
      %1229 = vmatpush1.xpose.msra.mxu0 0.0
      %1230 = vmatprep.subr.mxu0 0.0
      %1231 = vmatpush1.xpose.msra.mxu0 0.0
      %1232 = vmatprep.subr.mxu0 0.0
      %1233 = vmatpush1.xpose.msra.mxu0 %v1200
      %1234 = vmatprep.subr.mxu0 0.0
      %1235 = vmatpush2.xpose.msra.mxu0 0.0
      %1236 = vmatprep.subr.mxu0 0.0
      %1237 = vmatpush2.xpose.msra.mxu0 0.0
      %1238 = vmatprep.subr.mxu0 0.0
      %1239 = vmatpush2.xpose.msra.mxu0 0.0
      %1240 = vmatprep.subr.mxu0 0.0
      %1241 = vmatpush2.xpose.msra.mxu0 0.0
      %1242 = vmatprep.subr.mxu0 0.0
      %1243 = vmatpush2.xpose.msra.mxu0 0.0
      %1244 = vmatprep.subr.mxu0 0.0
      %1245 = vmatpush2.xpose.msra.mxu0 0.0
      %1246 = vmatprep.subr.mxu0 0.0
      %1247 = vmatpush2.xpose.msra.mxu0 0.0
      %1248 = vmatprep.subr.mxu0 0.0
      %1249 = vmatpush2.xpose.msra.mxu0 0.0
      %1250 = vmatprep.subr.mxu0 0.0
      %1251 = vmatpush2.xpose.msra.mxu0 0.0
      %1252 = vmatprep.subr.mxu0 0.0
      %1253 = vmatpush2.xpose.msra.mxu0 0.0
      %1254 = vmatprep.subr.mxu0 0.0
      %1255 = vmatpush2.xpose.msra.mxu0 0.0
      %1256 = vmatprep.subr.mxu0 0.0
      %1257 = vmatpush2.xpose.msra.mxu0 0.0
      %1258 = vmatprep.subr.mxu0 0.0
      %1259 = vmatpush2.xpose.msra.mxu0 0.0
      %1260 = vmatprep.subr.mxu0 0.0
      %1261 = vmatpush2.xpose.msra.mxu0 0.0
      %1262 = vmatprep.subr.mxu0 0.0
      %1263 = vmatpush2.xpose.msra.mxu0 0.0
      %1264 = vmatprep.subr.mxu0 0.0
      %1265 = vmatpush2.xpose.msra.mxu0 0.0
      %1266 = vmatprep.mubr.f32.mxu0 0.0
      %1267 = vmatmul.mubr.f32.gmra.mxu0 %v1200
      %v1268 = vpop.f32.mrf.mxu0
      %v1269 = vadd.f32 0.0, %v1268
      %v1270 = vpop.f32.mrf.mxu0
      %1271 = vdwg.mxu0
      %v1272 = vmul.f32 %v1269, 0.17677669
      %v1273 = vsel %vm1104, %v1272, -inf
      %1274 = vmax.xlane.f32.xlu0 %v1273
      %v1275 = vpop.xlane.xlu0 %1274
      %v1276 = vsub.f32 %v1272, %v1275
      %v1277 = vmul.f32 %v1276, 1.442695
      %v1278 = vpow.pop %v1277
      %v1279 = vsel %vm1104, %v1278, 0.0
      %1280 = vadd.xlane.f32.xlu0 %v1279
      %v1281 = vpop.xlane.xlu0 %1280
      %v1282 = vrcp.pop %v1281
      %v1283 = vmul.f32 %v1278, %v1282
      %v1286 = vsel %vm1104, %v1283, 0
      %1288 = vmatprep.subr.mxu0 0.0
      %1289 = vmatpush1.msra.mxu0 0.0
      %1290 = vmatprep.subr.mxu0 0.0
      %1291 = vmatpush1.msra.mxu0 0.0
      %1292 = vmatprep.subr.mxu0 0.0
      %1293 = vmatpush1.msra.mxu0 0.0
      %1294 = vmatprep.subr.mxu0 0.0
      %1295 = vmatpush1.msra.mxu0 0.0
      %1296 = vmatprep.subr.mxu0 0.0
      %1297 = vmatpush1.msra.mxu0 0.0
      %1298 = vmatprep.subr.mxu0 0.0
      %1299 = vmatpush1.msra.mxu0 0.0
      %1300 = vmatprep.subr.mxu0 0.0
      %1301 = vmatpush1.msra.mxu0 0.0
      %1302 = vmatprep.subr.mxu0 0.0
      %1303 = vmatpush1.msra.mxu0 0.0
      %1304 = vmatprep.subr.mxu0 0.0
      %1305 = vmatpush1.msra.mxu0 0.0
      %1306 = vmatprep.subr.mxu0 0.0
      %1307 = vmatpush1.msra.mxu0 0.0
      %1308 = vmatprep.subr.mxu0 0.0
      %1309 = vmatpush1.msra.mxu0 0.0
      %1310 = vmatprep.subr.mxu0 0.0
      %1311 = vmatpush1.msra.mxu0 0.0
      %1312 = vmatprep.subr.mxu0 0.0
      %1313 = vmatpush1.msra.mxu0 0.0
      %1314 = vmatprep.subr.mxu0 0.0
      %1315 = vmatpush1.msra.mxu0 0.0
      %1316 = vmatprep.subr.mxu0 0.0
      %1317 = vmatpush1.msra.mxu0 0.0
      %1318 = vmatprep.subr.mxu0 0.0
      %1319 = vmatpush1.msra.mxu0 %v1199
      %1320 = vmatprep.subr.mxu0 0.0
      %1321 = vmatpush2.msra.mxu0 0.0
      %1322 = vmatprep.subr.mxu0 0.0
      %1323 = vmatpush2.msra.mxu0 0.0
      %1324 = vmatprep.subr.mxu0 0.0
      %1325 = vmatpush2.msra.mxu0 0.0
      %1326 = vmatprep.subr.mxu0 0.0
      %1327 = vmatpush2.msra.mxu0 0.0
      %1328 = vmatprep.subr.mxu0 0.0
      %1329 = vmatpush2.msra.mxu0 0.0
      %1330 = vmatprep.subr.mxu0 0.0
      %1331 = vmatpush2.msra.mxu0 0.0
      %1332 = vmatprep.subr.mxu0 0.0
      %1333 = vmatpush2.msra.mxu0 0.0
      %1334 = vmatprep.subr.mxu0 0.0
      %1335 = vmatpush2.msra.mxu0 0.0
      %1336 = vmatprep.subr.mxu0 0.0
      %1337 = vmatpush2.msra.mxu0 0.0
      %1338 = vmatprep.subr.mxu0 0.0
      %1339 = vmatpush2.msra.mxu0 0.0
      %1340 = vmatprep.subr.mxu0 0.0
      %1341 = vmatpush2.msra.mxu0 0.0
      %1342 = vmatprep.subr.mxu0 0.0
      %1343 = vmatpush2.msra.mxu0 0.0
      %1344 = vmatprep.subr.mxu0 0.0
      %1345 = vmatpush2.msra.mxu0 0.0
      %1346 = vmatprep.subr.mxu0 0.0
      %1347 = vmatpush2.msra.mxu0 0.0
      %1348 = vmatprep.subr.mxu0 0.0
      %1349 = vmatpush2.msra.mxu0 0.0
      %1350 = vmatprep.subr.mxu0 0.0
      %1351 = vmatpush2.msra.mxu0 0.0
      %1352 = vmatprep.mubr.f32.mxu0 0.0
      %1353 = vmatmul.mubr.f32.gmra.mxu0 %v1286
      %v1354 = vpop.f32.mrf.mxu0
      %v1355 = vadd.f32 0.0, %v1354
      %v1356 = vpop.f32.mrf.mxu0
      %1357 = vdwg.mxu0
      %v1359 = vsel %vm855, %v929, 0
      %v1362 = vsel %vm855, %v1022, 0
      %1364 = vmatprep.subr.mxu0 0.0
      %1365 = vmatpush1.xpose.msra.mxu0 0.0
      %1366 = vmatprep.subr.mxu0 0.0
      %1367 = vmatpush1.xpose.msra.mxu0 0.0
      %1368 = vmatprep.subr.mxu0 0.0
      %1369 = vmatpush1.xpose.msra.mxu0 0.0
      %1370 = vmatprep.subr.mxu0 0.0
      %1371 = vmatpush1.xpose.msra.mxu0 0.0
      %1372 = vmatprep.subr.mxu0 0.0
      %1373 = vmatpush1.xpose.msra.mxu0 0.0
      %1374 = vmatprep.subr.mxu0 0.0
      %1375 = vmatpush1.xpose.msra.mxu0 0.0
      %1376 = vmatprep.subr.mxu0 0.0
      %1377 = vmatpush1.xpose.msra.mxu0 0.0
      %1378 = vmatprep.subr.mxu0 0.0
      %1379 = vmatpush1.xpose.msra.mxu0 0.0
      %1380 = vmatprep.subr.mxu0 0.0
      %1381 = vmatpush1.xpose.msra.mxu0 0.0
      %1382 = vmatprep.subr.mxu0 0.0
      %1383 = vmatpush1.xpose.msra.mxu0 0.0
      %1384 = vmatprep.subr.mxu0 0.0
      %1385 = vmatpush1.xpose.msra.mxu0 0.0
      %1386 = vmatprep.subr.mxu0 0.0
      %1387 = vmatpush1.xpose.msra.mxu0 0.0
      %1388 = vmatprep.subr.mxu0 0.0
      %1389 = vmatpush1.xpose.msra.mxu0 0.0
      %1390 = vmatprep.subr.mxu0 0.0
      %1391 = vmatpush1.xpose.msra.mxu0 0.0
      %1392 = vmatprep.subr.mxu0 0.0
      %1393 = vmatpush1.xpose.msra.mxu0 0.0
      %1394 = vmatprep.subr.mxu0 0.0
      %1395 = vmatpush1.xpose.msra.mxu0 %v1362
      %1396 = vmatprep.subr.mxu0 0.0
      %1397 = vmatpush2.xpose.msra.mxu0 0.0
      %1398 = vmatprep.subr.mxu0 0.0
      %1399 = vmatpush2.xpose.msra.mxu0 0.0
      %1400 = vmatprep.subr.mxu0 0.0
      %1401 = vmatpush2.xpose.msra.mxu0 0.0
      %1402 = vmatprep.subr.mxu0 0.0
      %1403 = vmatpush2.xpose.msra.mxu0 0.0
      %1404 = vmatprep.subr.mxu0 0.0
      %1405 = vmatpush2.xpose.msra.mxu0 0.0
      %1406 = vmatprep.subr.mxu0 0.0
      %1407 = vmatpush2.xpose.msra.mxu0 0.0
      %1408 = vmatprep.subr.mxu0 0.0
      %1409 = vmatpush2.xpose.msra.mxu0 0.0
      %1410 = vmatprep.subr.mxu0 0.0
      %1411 = vmatpush2.xpose.msra.mxu0 0.0
      %1412 = vmatprep.subr.mxu0 0.0
      %1413 = vmatpush2.xpose.msra.mxu0 0.0
      %1414 = vmatprep.subr.mxu0 0.0
      %1415 = vmatpush2.xpose.msra.mxu0 0.0
      %1416 = vmatprep.subr.mxu0 0.0
      %1417 = vmatpush2.xpose.msra.mxu0 0.0
      %1418 = vmatprep.subr.mxu0 0.0
      %1419 = vmatpush2.xpose.msra.mxu0 0.0
      %1420 = vmatprep.subr.mxu0 0.0
      %1421 = vmatpush2.xpose.msra.mxu0 0.0
      %1422 = vmatprep.subr.mxu0 0.0
      %1423 = vmatpush2.xpose.msra.mxu0 0.0
      %1424 = vmatprep.subr.mxu0 0.0
      %1425 = vmatpush2.xpose.msra.mxu0 0.0
      %1426 = vmatprep.subr.mxu0 0.0
      %1427 = vmatpush2.xpose.msra.mxu0 0.0
      %1428 = vmatprep.mubr.f32.mxu0 0.0
      %1429 = vmatmul.mubr.f32.gmra.mxu0 %v1359
      %v1430 = vpop.f32.mrf.mxu0
      %v1431 = vadd.f32 0.0, %v1430
      %v1432 = vpop.f32.mrf.mxu0
      %1433 = vdwg.mxu0
      %v1434 = vmul.f32 %v1431, 0.17677669
      %v1435 = vsel %vm1104, %v1434, -inf
      %1436 = vmax.xlane.f32.xlu0 %v1435
      %v1437 = vpop.xlane.xlu0 %1436
      %v1438 = vsub.f32 %v1434, %v1437
      %v1439 = vmul.f32 %v1438, 1.442695
      %v1440 = vpow.pop %v1439
      %v1441 = vsel %vm1104, %v1440, 0.0
      %1442 = vadd.xlane.f32.xlu0 %v1441
      %v1443 = vpop.xlane.xlu0 %1442
      %v1444 = vrcp.pop %v1443
      %v1445 = vmul.f32 %v1440, %v1444
      %v1447 = vsel %vm1104, %v1445, 0
      %1449 = vmatprep.subr.mxu0 0.0
      %1450 = vmatpush1.msra.mxu0 0.0
      %1451 = vmatprep.subr.mxu0 0.0
      %1452 = vmatpush1.msra.mxu0 0.0
      %1453 = vmatprep.subr.mxu0 0.0
      %1454 = vmatpush1.msra.mxu0 0.0
      %1455 = vmatprep.subr.mxu0 0.0
      %1456 = vmatpush1.msra.mxu0 0.0
      %1457 = vmatprep.subr.mxu0 0.0
      %1458 = vmatpush1.msra.mxu0 0.0
      %1459 = vmatprep.subr.mxu0 0.0
      %1460 = vmatpush1.msra.mxu0 0.0
      %1461 = vmatprep.subr.mxu0 0.0
      %1462 = vmatpush1.msra.mxu0 0.0
      %1463 = vmatprep.subr.mxu0 0.0
      %1464 = vmatpush1.msra.mxu0 0.0
      %1465 = vmatprep.subr.mxu0 0.0
      %1466 = vmatpush1.msra.mxu0 0.0
      %1467 = vmatprep.subr.mxu0 0.0
      %1468 = vmatpush1.msra.mxu0 0.0
      %1469 = vmatprep.subr.mxu0 0.0
      %1470 = vmatpush1.msra.mxu0 0.0
      %1471 = vmatprep.subr.mxu0 0.0
      %1472 = vmatpush1.msra.mxu0 0.0
      %1473 = vmatprep.subr.mxu0 0.0
      %1474 = vmatpush1.msra.mxu0 0.0
      %1475 = vmatprep.subr.mxu0 0.0
      %1476 = vmatpush1.msra.mxu0 0.0
      %1477 = vmatprep.subr.mxu0 0.0
      %1478 = vmatpush1.msra.mxu0 0.0
      %1479 = vmatprep.subr.mxu0 0.0
      %1480 = vmatpush1.msra.mxu0 %v1355
      %1481 = vmatprep.subr.mxu0 0.0
      %1482 = vmatpush2.msra.mxu0 0.0
      %1483 = vmatprep.subr.mxu0 0.0
      %1484 = vmatpush2.msra.mxu0 0.0
      %1485 = vmatprep.subr.mxu0 0.0
      %1486 = vmatpush2.msra.mxu0 0.0
      %1487 = vmatprep.subr.mxu0 0.0
      %1488 = vmatpush2.msra.mxu0 0.0
      %1489 = vmatprep.subr.mxu0 0.0
      %1490 = vmatpush2.msra.mxu0 0.0
      %1491 = vmatprep.subr.mxu0 0.0
      %1492 = vmatpush2.msra.mxu0 0.0
      %1493 = vmatprep.subr.mxu0 0.0
      %1494 = vmatpush2.msra.mxu0 0.0
      %1495 = vmatprep.subr.mxu0 0.0
      %1496 = vmatpush2.msra.mxu0 0.0
      %1497 = vmatprep.subr.mxu0 0.0
      %1498 = vmatpush2.msra.mxu0 0.0
      %1499 = vmatprep.subr.mxu0 0.0
      %1500 = vmatpush2.msra.mxu0 0.0
      %1501 = vmatprep.subr.mxu0 0.0
      %1502 = vmatpush2.msra.mxu0 0.0
      %1503 = vmatprep.subr.mxu0 0.0
      %1504 = vmatpush2.msra.mxu0 0.0
      %1505 = vmatprep.subr.mxu0 0.0
      %1506 = vmatpush2.msra.mxu0 0.0
      %1507 = vmatprep.subr.mxu0 0.0
      %1508 = vmatpush2.msra.mxu0 0.0
      %1509 = vmatprep.subr.mxu0 0.0
      %1510 = vmatpush2.msra.mxu0 0.0
      %1511 = vmatprep.subr.mxu0 0.0
      %1512 = vmatpush2.msra.mxu0 0.0
      %1513 = vmatprep.mubr.f32.mxu0 0.0
      %1514 = vmatmul.mubr.f32.gmra.mxu0 %v1447
      %v1515 = vpop.f32.mrf.mxu0
      %v1516 = vadd.f32 0.0, %v1515
      %v1517 = vpop.f32.mrf.mxu0
      %1518 = vdwg.mxu0
      %v1520 = vsel %vm855, %v648, 0
      %1522 = vmatprep.subr.mxu0 0.0
      %1523 = vmatpush1.xpose.msra.mxu0 0.0
      %1524 = vmatprep.subr.mxu0 0.0
      %1525 = vmatpush1.xpose.msra.mxu0 0.0
      %1526 = vmatprep.subr.mxu0 0.0
      %1527 = vmatpush1.xpose.msra.mxu0 0.0
      %1528 = vmatprep.subr.mxu0 0.0
      %1529 = vmatpush1.xpose.msra.mxu0 0.0
      %1530 = vmatprep.subr.mxu0 0.0
      %1531 = vmatpush1.xpose.msra.mxu0 0.0
      %1532 = vmatprep.subr.mxu0 0.0
      %1533 = vmatpush1.xpose.msra.mxu0 0.0
      %1534 = vmatprep.subr.mxu0 0.0
      %1535 = vmatpush1.xpose.msra.mxu0 0.0
      %1536 = vmatprep.subr.mxu0 0.0
      %1537 = vmatpush1.xpose.msra.mxu0 0.0
      %1538 = vmatprep.subr.mxu0 0.0
      %1539 = vmatpush1.xpose.msra.mxu0 0.0
      %1540 = vmatprep.subr.mxu0 0.0
      %1541 = vmatpush1.xpose.msra.mxu0 0.0
      %1542 = vmatprep.subr.mxu0 0.0
      %1543 = vmatpush1.xpose.msra.mxu0 0.0
      %1544 = vmatprep.subr.mxu0 0.0
      %1545 = vmatpush1.xpose.msra.mxu0 0.0
      %1546 = vmatprep.subr.mxu0 0.0
      %1547 = vmatpush1.xpose.msra.mxu0 0.0
      %1548 = vmatprep.subr.mxu0 0.0
      %1549 = vmatpush1.xpose.msra.mxu0 0.0
      %1550 = vmatprep.subr.mxu0 0.0
      %1551 = vmatpush1.xpose.msra.mxu0 0.0
      %1552 = vmatprep.subr.mxu0 0.0
      %1553 = vmatpush1.xpose.msra.mxu0 %v1520
      %1554 = vmatprep.subr.mxu0 0.0
      %1555 = vmatpush2.xpose.msra.mxu0 0.0
      %1556 = vmatprep.subr.mxu0 0.0
      %1557 = vmatpush2.xpose.msra.mxu0 0.0
      %1558 = vmatprep.subr.mxu0 0.0
      %1559 = vmatpush2.xpose.msra.mxu0 0.0
      %1560 = vmatprep.subr.mxu0 0.0
      %1561 = vmatpush2.xpose.msra.mxu0 0.0
      %1562 = vmatprep.subr.mxu0 0.0
      %1563 = vmatpush2.xpose.msra.mxu0 0.0
      %1564 = vmatprep.subr.mxu0 0.0
      %1565 = vmatpush2.xpose.msra.mxu0 0.0
      %1566 = vmatprep.subr.mxu0 0.0
      %1567 = vmatpush2.xpose.msra.mxu0 0.0
      %1568 = vmatprep.subr.mxu0 0.0
      %1569 = vmatpush2.xpose.msra.mxu0 0.0
      %1570 = vmatprep.subr.mxu0 0.0
      %1571 = vmatpush2.xpose.msra.mxu0 0.0
      %1572 = vmatprep.subr.mxu0 0.0
      %1573 = vmatpush2.xpose.msra.mxu0 0.0
      %1574 = vmatprep.subr.mxu0 0.0
      %1575 = vmatpush2.xpose.msra.mxu0 0.0
      %1576 = vmatprep.subr.mxu0 0.0
      %1577 = vmatpush2.xpose.msra.mxu0 0.0
      %1578 = vmatprep.subr.mxu0 0.0
      %1579 = vmatpush2.xpose.msra.mxu0 0.0
      %1580 = vmatprep.subr.mxu0 0.0
      %1581 = vmatpush2.xpose.msra.mxu0 0.0
      %1582 = vmatprep.subr.mxu0 0.0
      %1583 = vmatpush2.xpose.msra.mxu0 0.0
      %1584 = vmatprep.subr.mxu0 0.0
      %1585 = vmatpush2.xpose.msra.mxu0 0.0
      %1586 = vmatprep.mubr.f32.mxu0 0.0
      %1587 = vmatmul.mubr.f32.gmra.mxu0 %v1520
      %v1588 = vpop.f32.mrf.mxu0
      %v1589 = vadd.f32 0.0, %v1588
      %v1590 = vpop.f32.mrf.mxu0
      %1591 = vdwg.mxu0
      %v1592 = vmul.f32 %v1589, 0.17677669
      %v1593 = vsel %vm1104, %v1592, -inf
      %1594 = vmax.xlane.f32.xlu0 %v1593
      %v1595 = vpop.xlane.xlu0 %1594
      %v1596 = vsub.f32 %v1592, %v1595
      %v1597 = vmul.f32 %v1596, 1.442695
      %v1598 = vpow.pop %v1597
      %v1599 = vsel %vm1104, %v1598, 0.0
      %1600 = vadd.xlane.f32.xlu0 %v1599
      %v1601 = vpop.xlane.xlu0 %1600
      %v1602 = vrcp.pop %v1601
      %v1603 = vmul.f32 %v1598, %v1602
      %v1605 = vsel %vm1104, %v1603, 0
      %1607 = vmatprep.subr.mxu0 0.0
      %1608 = vmatpush1.msra.mxu0 0.0
      %1609 = vmatprep.subr.mxu0 0.0
      %1610 = vmatpush1.msra.mxu0 0.0
      %1611 = vmatprep.subr.mxu0 0.0
      %1612 = vmatpush1.msra.mxu0 0.0
      %1613 = vmatprep.subr.mxu0 0.0
      %1614 = vmatpush1.msra.mxu0 0.0
      %1615 = vmatprep.subr.mxu0 0.0
      %1616 = vmatpush1.msra.mxu0 0.0
      %1617 = vmatprep.subr.mxu0 0.0
      %1618 = vmatpush1.msra.mxu0 0.0
      %1619 = vmatprep.subr.mxu0 0.0
      %1620 = vmatpush1.msra.mxu0 0.0
      %1621 = vmatprep.subr.mxu0 0.0
      %1622 = vmatpush1.msra.mxu0 0.0
      %1623 = vmatprep.subr.mxu0 0.0
      %1624 = vmatpush1.msra.mxu0 0.0
      %1625 = vmatprep.subr.mxu0 0.0
      %1626 = vmatpush1.msra.mxu0 0.0
      %1627 = vmatprep.subr.mxu0 0.0
      %1628 = vmatpush1.msra.mxu0 0.0
      %1629 = vmatprep.subr.mxu0 0.0
      %1630 = vmatpush1.msra.mxu0 0.0
      %1631 = vmatprep.subr.mxu0 0.0
      %1632 = vmatpush1.msra.mxu0 0.0
      %1633 = vmatprep.subr.mxu0 0.0
      %1634 = vmatpush1.msra.mxu0 0.0
      %1635 = vmatprep.subr.mxu0 0.0
      %1636 = vmatpush1.msra.mxu0 0.0
      %1637 = vmatprep.subr.mxu0 0.0
      %1638 = vmatpush1.msra.mxu0 %v648
      %1639 = vmatprep.subr.mxu0 0.0
      %1640 = vmatpush2.msra.mxu0 0.0
      %1641 = vmatprep.subr.mxu0 0.0
      %1642 = vmatpush2.msra.mxu0 0.0
      %1643 = vmatprep.subr.mxu0 0.0
      %1644 = vmatpush2.msra.mxu0 0.0
      %1645 = vmatprep.subr.mxu0 0.0
      %1646 = vmatpush2.msra.mxu0 0.0
      %1647 = vmatprep.subr.mxu0 0.0
      %1648 = vmatpush2.msra.mxu0 0.0
      %1649 = vmatprep.subr.mxu0 0.0
      %1650 = vmatpush2.msra.mxu0 0.0
      %1651 = vmatprep.subr.mxu0 0.0
      %1652 = vmatpush2.msra.mxu0 0.0
      %1653 = vmatprep.subr.mxu0 0.0
      %1654 = vmatpush2.msra.mxu0 0.0
      %1655 = vmatprep.subr.mxu0 0.0
      %1656 = vmatpush2.msra.mxu0 0.0
      %1657 = vmatprep.subr.mxu0 0.0
      %1658 = vmatpush2.msra.mxu0 0.0
      %1659 = vmatprep.subr.mxu0 0.0
      %1660 = vmatpush2.msra.mxu0 0.0
      %1661 = vmatprep.subr.mxu0 0.0
      %1662 = vmatpush2.msra.mxu0 0.0
      %1663 = vmatprep.subr.mxu0 0.0
      %1664 = vmatpush2.msra.mxu0 0.0
      %1665 = vmatprep.subr.mxu0 0.0
      %1666 = vmatpush2.msra.mxu0 0.0
      %1667 = vmatprep.subr.mxu0 0.0
      %1668 = vmatpush2.msra.mxu0 0.0
      %1669 = vmatprep.subr.mxu0 0.0
      %1670 = vmatpush2.msra.mxu0 0.0
      %1671 = vmatprep.mubr.f32.mxu0 0.0
      %1672 = vmatmul.mubr.f32.gmra.mxu0 %v1605
      %v1673 = vpop.f32.mrf.mxu0
      %v1674 = vadd.f32 0.0, %v1673
      %v1675 = vpop.f32.mrf.mxu0
      %1676 = vdwg.mxu0
      %v1677 = vsel %vm855, %v1674, 0.0
      %v1678 = vrot.slane %v1677, 4
      %v1679 = vadd.f32 %v1677, %v1678
      %v1680 = vrot.slane %v1679, 2
      %v1681 = vadd.f32 %v1679, %v1680
      %v1682 = vrot.slane %v1681, 1
      %v1683 = vadd.f32 %v1681, %v1682
      %v1684 = vmul.f32 %v1683, %v1196
      %1685 = vrot.lane.b32.xlu0 %v648, 96
      %v1686 = vpop.permute.xlu0 %1685
      %v1687 = vsel %vm855, %v1686, 0
      %1689 = vmatprep.subr.mxu0 0.0
      %1690 = vmatpush1.xpose.msra.mxu0 0.0
      %1691 = vmatprep.subr.mxu0 0.0
      %1692 = vmatpush1.xpose.msra.mxu0 0.0
      %1693 = vmatprep.subr.mxu0 0.0
      %1694 = vmatpush1.xpose.msra.mxu0 0.0
      %1695 = vmatprep.subr.mxu0 0.0
      %1696 = vmatpush1.xpose.msra.mxu0 0.0
      %1697 = vmatprep.subr.mxu0 0.0
      %1698 = vmatpush1.xpose.msra.mxu0 0.0
      %1699 = vmatprep.subr.mxu0 0.0
      %1700 = vmatpush1.xpose.msra.mxu0 0.0
      %1701 = vmatprep.subr.mxu0 0.0
      %1702 = vmatpush1.xpose.msra.mxu0 0.0
      %1703 = vmatprep.subr.mxu0 0.0
      %1704 = vmatpush1.xpose.msra.mxu0 0.0
      %1705 = vmatprep.subr.mxu0 0.0
      %1706 = vmatpush1.xpose.msra.mxu0 0.0
      %1707 = vmatprep.subr.mxu0 0.0
      %1708 = vmatpush1.xpose.msra.mxu0 0.0
      %1709 = vmatprep.subr.mxu0 0.0
      %1710 = vmatpush1.xpose.msra.mxu0 0.0
      %1711 = vmatprep.subr.mxu0 0.0
      %1712 = vmatpush1.xpose.msra.mxu0 0.0
      %1713 = vmatprep.subr.mxu0 0.0
      %1714 = vmatpush1.xpose.msra.mxu0 0.0
      %1715 = vmatprep.subr.mxu0 0.0
      %1716 = vmatpush1.xpose.msra.mxu0 0.0
      %1717 = vmatprep.subr.mxu0 0.0
      %1718 = vmatpush1.xpose.msra.mxu0 0.0
      %1719 = vmatprep.subr.mxu0 0.0
      %1720 = vmatpush1.xpose.msra.mxu0 %v1687
      %1721 = vmatprep.subr.mxu0 0.0
      %1722 = vmatpush2.xpose.msra.mxu0 0.0
      %1723 = vmatprep.subr.mxu0 0.0
      %1724 = vmatpush2.xpose.msra.mxu0 0.0
      %1725 = vmatprep.subr.mxu0 0.0
      %1726 = vmatpush2.xpose.msra.mxu0 0.0
      %1727 = vmatprep.subr.mxu0 0.0
      %1728 = vmatpush2.xpose.msra.mxu0 0.0
      %1729 = vmatprep.subr.mxu0 0.0
      %1730 = vmatpush2.xpose.msra.mxu0 0.0
      %1731 = vmatprep.subr.mxu0 0.0
      %1732 = vmatpush2.xpose.msra.mxu0 0.0
      %1733 = vmatprep.subr.mxu0 0.0
      %1734 = vmatpush2.xpose.msra.mxu0 0.0
      %1735 = vmatprep.subr.mxu0 0.0
      %1736 = vmatpush2.xpose.msra.mxu0 0.0
      %1737 = vmatprep.subr.mxu0 0.0
      %1738 = vmatpush2.xpose.msra.mxu0 0.0
      %1739 = vmatprep.subr.mxu0 0.0
      %1740 = vmatpush2.xpose.msra.mxu0 0.0
      %1741 = vmatprep.subr.mxu0 0.0
      %1742 = vmatpush2.xpose.msra.mxu0 0.0
      %1743 = vmatprep.subr.mxu0 0.0
      %1744 = vmatpush2.xpose.msra.mxu0 0.0
      %1745 = vmatprep.subr.mxu0 0.0
      %1746 = vmatpush2.xpose.msra.mxu0 0.0
      %1747 = vmatprep.subr.mxu0 0.0
      %1748 = vmatpush2.xpose.msra.mxu0 0.0
      %1749 = vmatprep.subr.mxu0 0.0
      %1750 = vmatpush2.xpose.msra.mxu0 0.0
      %1751 = vmatprep.subr.mxu0 0.0
      %1752 = vmatpush2.xpose.msra.mxu0 0.0
      %1753 = vmatprep.mubr.f32.mxu0 0.0
      %1754 = vmatmul.mubr.f32.gmra.mxu0 %v1687
      %v1755 = vpop.f32.mrf.mxu0
      %v1756 = vadd.f32 0.0, %v1755
      %v1757 = vpop.f32.mrf.mxu0
      %1758 = vdwg.mxu0
      %v1759 = vmul.f32 %v1756, 0.17677669
      %v1760 = vsel %vm1104, %v1759, -inf
      %1761 = vmax.xlane.f32.xlu0 %v1760
      %v1762 = vpop.xlane.xlu0 %1761
      %v1763 = vsub.f32 %v1759, %v1762
      %v1764 = vmul.f32 %v1763, 1.442695
      %v1765 = vpow.pop %v1764
      %v1766 = vsel %vm1104, %v1765, 0.0
      %1767 = vadd.xlane.f32.xlu0 %v1766
      %v1768 = vpop.xlane.xlu0 %1767
      %v1769 = vrcp.pop %v1768
      %v1770 = vmul.f32 %v1765, %v1769
      %v1773 = vsel %vm1104, %v1770, 0
      %1775 = vmatprep.subr.mxu0 0.0
      %1776 = vmatpush1.msra.mxu0 0.0
      %1777 = vmatprep.subr.mxu0 0.0
      %1778 = vmatpush1.msra.mxu0 0.0
      %1779 = vmatprep.subr.mxu0 0.0
      %1780 = vmatpush1.msra.mxu0 0.0
      %1781 = vmatprep.subr.mxu0 0.0
      %1782 = vmatpush1.msra.mxu0 0.0
      %1783 = vmatprep.subr.mxu0 0.0
      %1784 = vmatpush1.msra.mxu0 0.0
      %1785 = vmatprep.subr.mxu0 0.0
      %1786 = vmatpush1.msra.mxu0 0.0
      %1787 = vmatprep.subr.mxu0 0.0
      %1788 = vmatpush1.msra.mxu0 0.0
      %1789 = vmatprep.subr.mxu0 0.0
      %1790 = vmatpush1.msra.mxu0 0.0
      %1791 = vmatprep.subr.mxu0 0.0
      %1792 = vmatpush1.msra.mxu0 0.0
      %1793 = vmatprep.subr.mxu0 0.0
      %1794 = vmatpush1.msra.mxu0 0.0
      %1795 = vmatprep.subr.mxu0 0.0
      %1796 = vmatpush1.msra.mxu0 0.0
      %1797 = vmatprep.subr.mxu0 0.0
      %1798 = vmatpush1.msra.mxu0 0.0
      %1799 = vmatprep.subr.mxu0 0.0
      %1800 = vmatpush1.msra.mxu0 0.0
      %1801 = vmatprep.subr.mxu0 0.0
      %1802 = vmatpush1.msra.mxu0 0.0
      %1803 = vmatprep.subr.mxu0 0.0
      %1804 = vmatpush1.msra.mxu0 0.0
      %1805 = vmatprep.subr.mxu0 0.0
      %1806 = vmatpush1.msra.mxu0 %v1686
      %1807 = vmatprep.subr.mxu0 0.0
      %1808 = vmatpush2.msra.mxu0 0.0
      %1809 = vmatprep.subr.mxu0 0.0
      %1810 = vmatpush2.msra.mxu0 0.0
      %1811 = vmatprep.subr.mxu0 0.0
      %1812 = vmatpush2.msra.mxu0 0.0
      %1813 = vmatprep.subr.mxu0 0.0
      %1814 = vmatpush2.msra.mxu0 0.0
      %1815 = vmatprep.subr.mxu0 0.0
      %1816 = vmatpush2.msra.mxu0 0.0
      %1817 = vmatprep.subr.mxu0 0.0
      %1818 = vmatpush2.msra.mxu0 0.0
      %1819 = vmatprep.subr.mxu0 0.0
      %1820 = vmatpush2.msra.mxu0 0.0
      %1821 = vmatprep.subr.mxu0 0.0
      %1822 = vmatpush2.msra.mxu0 0.0
      %1823 = vmatprep.subr.mxu0 0.0
      %1824 = vmatpush2.msra.mxu0 0.0
      %1825 = vmatprep.subr.mxu0 0.0
      %1826 = vmatpush2.msra.mxu0 0.0
      %1827 = vmatprep.subr.mxu0 0.0
      %1828 = vmatpush2.msra.mxu0 0.0
      %1829 = vmatprep.subr.mxu0 0.0
      %1830 = vmatpush2.msra.mxu0 0.0
      %1831 = vmatprep.subr.mxu0 0.0
      %1832 = vmatpush2.msra.mxu0 0.0
      %1833 = vmatprep.subr.mxu0 0.0
      %1834 = vmatpush2.msra.mxu0 0.0
      %1835 = vmatprep.subr.mxu0 0.0
      %1836 = vmatpush2.msra.mxu0 0.0
      %1837 = vmatprep.subr.mxu0 0.0
      %1838 = vmatpush2.msra.mxu0 0.0
      %1839 = vmatprep.mubr.f32.mxu0 0.0
      %1840 = vmatmul.mubr.f32.gmra.mxu0 %v1773
      %v1841 = vpop.f32.mrf.mxu0
      %v1842 = vadd.f32 0.0, %v1841
      %v1843 = vpop.f32.mrf.mxu0
      %1844 = vdwg.mxu0
      %v1846 = vsel %vm855, %v934, 0
      %v1849 = vsel %vm855, %v1027, 0
      %1851 = vmatprep.subr.mxu0 0.0
      %1852 = vmatpush1.xpose.msra.mxu0 0.0
      %1853 = vmatprep.subr.mxu0 0.0
      %1854 = vmatpush1.xpose.msra.mxu0 0.0
      %1855 = vmatprep.subr.mxu0 0.0
      %1856 = vmatpush1.xpose.msra.mxu0 0.0
      %1857 = vmatprep.subr.mxu0 0.0
      %1858 = vmatpush1.xpose.msra.mxu0 0.0
      %1859 = vmatprep.subr.mxu0 0.0
      %1860 = vmatpush1.xpose.msra.mxu0 0.0
      %1861 = vmatprep.subr.mxu0 0.0
      %1862 = vmatpush1.xpose.msra.mxu0 0.0
      %1863 = vmatprep.subr.mxu0 0.0
      %1864 = vmatpush1.xpose.msra.mxu0 0.0
      %1865 = vmatprep.subr.mxu0 0.0
      %1866 = vmatpush1.xpose.msra.mxu0 0.0
      %1867 = vmatprep.subr.mxu0 0.0
      %1868 = vmatpush1.xpose.msra.mxu0 0.0
      %1869 = vmatprep.subr.mxu0 0.0
      %1870 = vmatpush1.xpose.msra.mxu0 0.0
      %1871 = vmatprep.subr.mxu0 0.0
      %1872 = vmatpush1.xpose.msra.mxu0 0.0
      %1873 = vmatprep.subr.mxu0 0.0
      %1874 = vmatpush1.xpose.msra.mxu0 0.0
      %1875 = vmatprep.subr.mxu0 0.0
      %1876 = vmatpush1.xpose.msra.mxu0 0.0
      %1877 = vmatprep.subr.mxu0 0.0
      %1878 = vmatpush1.xpose.msra.mxu0 0.0
      %1879 = vmatprep.subr.mxu0 0.0
      %1880 = vmatpush1.xpose.msra.mxu0 0.0
      %1881 = vmatprep.subr.mxu0 0.0
      %1882 = vmatpush1.xpose.msra.mxu0 %v1849
      %1883 = vmatprep.subr.mxu0 0.0
      %1884 = vmatpush2.xpose.msra.mxu0 0.0
      %1885 = vmatprep.subr.mxu0 0.0
      %1886 = vmatpush2.xpose.msra.mxu0 0.0
      %1887 = vmatprep.subr.mxu0 0.0
      %1888 = vmatpush2.xpose.msra.mxu0 0.0
      %1889 = vmatprep.subr.mxu0 0.0
      %1890 = vmatpush2.xpose.msra.mxu0 0.0
      %1891 = vmatprep.subr.mxu0 0.0
      %1892 = vmatpush2.xpose.msra.mxu0 0.0
      %1893 = vmatprep.subr.mxu0 0.0
      %1894 = vmatpush2.xpose.msra.mxu0 0.0
      %1895 = vmatprep.subr.mxu0 0.0
      %1896 = vmatpush2.xpose.msra.mxu0 0.0
      %1897 = vmatprep.subr.mxu0 0.0
      %1898 = vmatpush2.xpose.msra.mxu0 0.0
      %1899 = vmatprep.subr.mxu0 0.0
      %1900 = vmatpush2.xpose.msra.mxu0 0.0
      %1901 = vmatprep.subr.mxu0 0.0
      %1902 = vmatpush2.xpose.msra.mxu0 0.0
      %1903 = vmatprep.subr.mxu0 0.0
      %1904 = vmatpush2.xpose.msra.mxu0 0.0
      %1905 = vmatprep.subr.mxu0 0.0
      %1906 = vmatpush2.xpose.msra.mxu0 0.0
      %1907 = vmatprep.subr.mxu0 0.0
      %1908 = vmatpush2.xpose.msra.mxu0 0.0
      %1909 = vmatprep.subr.mxu0 0.0
      %1910 = vmatpush2.xpose.msra.mxu0 0.0
      %1911 = vmatprep.subr.mxu0 0.0
      %1912 = vmatpush2.xpose.msra.mxu0 0.0
      %1913 = vmatprep.subr.mxu0 0.0
      %1914 = vmatpush2.xpose.msra.mxu0 0.0
      %1915 = vmatprep.mubr.f32.mxu0 0.0
      %1916 = vmatmul.mubr.f32.gmra.mxu0 %v1846
      %v1917 = vpop.f32.mrf.mxu0
      %v1918 = vadd.f32 0.0, %v1917
      %v1919 = vpop.f32.mrf.mxu0
      %1920 = vdwg.mxu0
      %v1921 = vmul.f32 %v1918, 0.17677669
      %v1922 = vsel %vm1104, %v1921, -inf
      %1923 = vmax.xlane.f32.xlu0 %v1922
      %v1924 = vpop.xlane.xlu0 %1923
      %v1925 = vsub.f32 %v1921, %v1924
      %v1926 = vmul.f32 %v1925, 1.442695
      %v1927 = vpow.pop %v1926
      %v1928 = vsel %vm1104, %v1927, 0.0
      %1929 = vadd.xlane.f32.xlu0 %v1928
      %v1930 = vpop.xlane.xlu0 %1929
      %v1931 = vrcp.pop %v1930
      %v1932 = vmul.f32 %v1927, %v1931
      %v1934 = vsel %vm1104, %v1932, 0
      %1936 = vmatprep.subr.mxu0 0.0
      %1937 = vmatpush1.msra.mxu0 0.0
      %1938 = vmatprep.subr.mxu0 0.0
      %1939 = vmatpush1.msra.mxu0 0.0
      %1940 = vmatprep.subr.mxu0 0.0
      %1941 = vmatpush1.msra.mxu0 0.0
      %1942 = vmatprep.subr.mxu0 0.0
      %1943 = vmatpush1.msra.mxu0 0.0
      %1944 = vmatprep.subr.mxu0 0.0
      %1945 = vmatpush1.msra.mxu0 0.0
      %1946 = vmatprep.subr.mxu0 0.0
      %1947 = vmatpush1.msra.mxu0 0.0
      %1948 = vmatprep.subr.mxu0 0.0
      %1949 = vmatpush1.msra.mxu0 0.0
      %1950 = vmatprep.subr.mxu0 0.0
      %1951 = vmatpush1.msra.mxu0 0.0
      %1952 = vmatprep.subr.mxu0 0.0
      %1953 = vmatpush1.msra.mxu0 0.0
      %1954 = vmatprep.subr.mxu0 0.0
      %1955 = vmatpush1.msra.mxu0 0.0
      %1956 = vmatprep.subr.mxu0 0.0
      %1957 = vmatpush1.msra.mxu0 0.0
      %1958 = vmatprep.subr.mxu0 0.0
      %1959 = vmatpush1.msra.mxu0 0.0
      %1960 = vmatprep.subr.mxu0 0.0
      %1961 = vmatpush1.msra.mxu0 0.0
      %1962 = vmatprep.subr.mxu0 0.0
      %1963 = vmatpush1.msra.mxu0 0.0
      %1964 = vmatprep.subr.mxu0 0.0
      %1965 = vmatpush1.msra.mxu0 0.0
      %1966 = vmatprep.subr.mxu0 0.0
      %1967 = vmatpush1.msra.mxu0 %v1842
      %1968 = vmatprep.subr.mxu0 0.0
      %1969 = vmatpush2.msra.mxu0 0.0
      %1970 = vmatprep.subr.mxu0 0.0
      %1971 = vmatpush2.msra.mxu0 0.0
      %1972 = vmatprep.subr.mxu0 0.0
      %1973 = vmatpush2.msra.mxu0 0.0
      %1974 = vmatprep.subr.mxu0 0.0
      %1975 = vmatpush2.msra.mxu0 0.0
      %1976 = vmatprep.subr.mxu0 0.0
      %1977 = vmatpush2.msra.mxu0 0.0
      %1978 = vmatprep.subr.mxu0 0.0
      %1979 = vmatpush2.msra.mxu0 0.0
      %1980 = vmatprep.subr.mxu0 0.0
      %1981 = vmatpush2.msra.mxu0 0.0
      %1982 = vmatprep.subr.mxu0 0.0
      %1983 = vmatpush2.msra.mxu0 0.0
      %1984 = vmatprep.subr.mxu0 0.0
      %1985 = vmatpush2.msra.mxu0 0.0
      %1986 = vmatprep.subr.mxu0 0.0
      %1987 = vmatpush2.msra.mxu0 0.0
      %1988 = vmatprep.subr.mxu0 0.0
      %1989 = vmatpush2.msra.mxu0 0.0
      %1990 = vmatprep.subr.mxu0 0.0
      %1991 = vmatpush2.msra.mxu0 0.0
      %1992 = vmatprep.subr.mxu0 0.0
      %1993 = vmatpush2.msra.mxu0 0.0
      %1994 = vmatprep.subr.mxu0 0.0
      %1995 = vmatpush2.msra.mxu0 0.0
      %1996 = vmatprep.subr.mxu0 0.0
      %1997 = vmatpush2.msra.mxu0 0.0
      %1998 = vmatprep.subr.mxu0 0.0
      %1999 = vmatpush2.msra.mxu0 0.0
      %2000 = vmatprep.mubr.f32.mxu0 0.0
      %2001 = vmatmul.mubr.f32.gmra.mxu0 %v1934
      %v2002 = vpop.f32.mrf.mxu0
      %v2003 = vadd.f32 0.0, %v2002
      %v2004 = vpop.f32.mrf.mxu0
      %2005 = vdwg.mxu0
      %vm2006 = vcmask 1040384
      %v2007 = vsel %vm2006, %v1197, %v1684
      %s2008 = scalar_lea.vmem %s7, 128
      %v2009 = vld [vmem:[%s2008] sm:$0xff]
      %v2010 = vld [vmem:[%s2008 + $0x8] sm:$0xff]
      %v2011 = vld [vmem:[%s2008 + $0x10] sm:$0xff]
      %v2012 = vld [vmem:[%s2008 + $0x18] sm:$0xff]
      %v2013 = vld [vmem:[%s10 + $0x8] sm:$0x1]
      %v2015 = vlaneseq
      %v2016 = vshrl.u32 %v2015, 7
      %v2017 = vsub.s32 0, %v2016
      %v2018 = vrot.slane %v2013, %v2017
      %v2021 = vsel %vm855, %v2007, 0
      %2023 = vmatprep.subr.mxu0 0.0
      %2024 = vmatpush1.msra.mxu0 0.0
      %2025 = vmatprep.subr.mxu0 0.0
      %2026 = vmatpush1.msra.mxu0 0.0
      %2027 = vmatprep.subr.mxu0 0.0
      %2028 = vmatpush1.msra.mxu0 0.0
      %2029 = vmatprep.subr.mxu0 0.0
      %2030 = vmatpush1.msra.mxu0 0.0
      %2031 = vmatprep.subr.mxu0 0.0
      %2032 = vmatpush1.msra.mxu0 0.0
      %2033 = vmatprep.subr.mxu0 0.0
      %2034 = vmatpush1.msra.mxu0 0.0
      %2035 = vmatprep.subr.mxu0 0.0
      %2036 = vmatpush1.msra.mxu0 0.0
      %2037 = vmatprep.subr.mxu0 0.0
      %2038 = vmatpush1.msra.mxu0 0.0
      %2039 = vmatprep.subr.mxu0 0.0
      %2040 = vmatpush1.msra.mxu0 0.0
      %2041 = vmatprep.subr.mxu0 0.0
      %2042 = vmatpush1.msra.mxu0 0.0
      %2043 = vmatprep.subr.mxu0 0.0
      %2044 = vmatpush1.msra.mxu0 0.0
      %2045 = vmatprep.subr.mxu0 0.0
      %2046 = vmatpush1.msra.mxu0 0.0
      %2047 = vmatprep.subr.mxu0 0.0
      %2048 = vmatpush1.msra.mxu0 %v2012
      %2049 = vmatprep.subr.mxu0 0.0
      %2050 = vmatpush1.msra.mxu0 %v2011
      %2051 = vmatprep.subr.mxu0 0.0
      %2052 = vmatpush1.msra.mxu0 %v2010
      %2053 = vmatprep.subr.mxu0 0.0
      %2054 = vmatpush1.msra.mxu0 %v2009
      %2055 = vmatprep.subr.mxu0 0.0
      %2056 = vmatpush2.msra.mxu0 0.0
      %2057 = vmatprep.subr.mxu0 0.0
      %2058 = vmatpush2.msra.mxu0 0.0
      %2059 = vmatprep.subr.mxu0 0.0
      %2060 = vmatpush2.msra.mxu0 0.0
      %2061 = vmatprep.subr.mxu0 0.0
      %2062 = vmatpush2.msra.mxu0 0.0
      %2063 = vmatprep.subr.mxu0 0.0
      %2064 = vmatpush2.msra.mxu0 0.0
      %2065 = vmatprep.subr.mxu0 0.0
      %2066 = vmatpush2.msra.mxu0 0.0
      %2067 = vmatprep.subr.mxu0 0.0
      %2068 = vmatpush2.msra.mxu0 0.0
      %2069 = vmatprep.subr.mxu0 0.0
      %2070 = vmatpush2.msra.mxu0 0.0
      %2071 = vmatprep.subr.mxu0 0.0
      %2072 = vmatpush2.msra.mxu0 0.0
      %2073 = vmatprep.subr.mxu0 0.0
      %2074 = vmatpush2.msra.mxu0 0.0
      %2075 = vmatprep.subr.mxu0 0.0
      %2076 = vmatpush2.msra.mxu0 0.0
      %2077 = vmatprep.subr.mxu0 0.0
      %2078 = vmatpush2.msra.mxu0 0.0
      %2079 = vmatprep.subr.mxu0 0.0
      %2080 = vmatpush2.msra.mxu0 0.0
      %2081 = vmatprep.subr.mxu0 0.0
      %2082 = vmatpush2.msra.mxu0 0.0
      %2083 = vmatprep.subr.mxu0 0.0
      %2084 = vmatpush2.msra.mxu0 0.0
      %2085 = vmatprep.subr.mxu0 0.0
      %2086 = vmatpush2.msra.mxu0 0.0
      %2087 = vmatprep.mubr.f32.mxu0 0.0
      %2088 = vmatmul.mubr.f32.gmra.mxu0 %v2021
      %v2089 = vpop.f32.mrf.mxu0
      %v2090 = vadd.f32 %v2018, %v2089
      %v2091 = vpop.f32.mrf.mxu0
      %2092 = vdwg.mxu0
      %v2093 = vmax.f32 %v2090, 0.0
      %v2094 = vld [vmem:[%s8] sm:$0xff]
      %v2095 = vld [vmem:[%s8 + $0x8] sm:$0xff]
      %v2096 = vld [vmem:[%s8 + $0x10] sm:$0xff]
      %v2097 = vld [vmem:[%s8 + $0x18] sm:$0xff]
      %v2098 = vld [vmem:[%s10 + $0x7] sm:$0x1]
      %v2100 = vlaneseq
      %v2101 = vshrl.u32 %v2100, 7
      %v2102 = vsub.s32 0, %v2101
      %v2103 = vrot.slane %v2098, %v2102
      %v2106 = vsel %vm855, %v2093, 0
      %2108 = vmatprep.subr.mxu0 0.0
      %2109 = vmatpush1.msra.mxu0 0.0
      %2110 = vmatprep.subr.mxu0 0.0
      %2111 = vmatpush1.msra.mxu0 0.0
      %2112 = vmatprep.subr.mxu0 0.0
      %2113 = vmatpush1.msra.mxu0 0.0
      %2114 = vmatprep.subr.mxu0 0.0
      %2115 = vmatpush1.msra.mxu0 0.0
      %2116 = vmatprep.subr.mxu0 0.0
      %2117 = vmatpush1.msra.mxu0 0.0
      %2118 = vmatprep.subr.mxu0 0.0
      %2119 = vmatpush1.msra.mxu0 0.0
      %2120 = vmatprep.subr.mxu0 0.0
      %2121 = vmatpush1.msra.mxu0 0.0
      %2122 = vmatprep.subr.mxu0 0.0
      %2123 = vmatpush1.msra.mxu0 0.0
      %2124 = vmatprep.subr.mxu0 0.0
      %2125 = vmatpush1.msra.mxu0 0.0
      %2126 = vmatprep.subr.mxu0 0.0
      %2127 = vmatpush1.msra.mxu0 0.0
      %2128 = vmatprep.subr.mxu0 0.0
      %2129 = vmatpush1.msra.mxu0 0.0
      %2130 = vmatprep.subr.mxu0 0.0
      %2131 = vmatpush1.msra.mxu0 0.0
      %2132 = vmatprep.subr.mxu0 0.0
      %2133 = vmatpush1.msra.mxu0 %v2097
      %2134 = vmatprep.subr.mxu0 0.0
      %2135 = vmatpush1.msra.mxu0 %v2096
      %2136 = vmatprep.subr.mxu0 0.0
      %2137 = vmatpush1.msra.mxu0 %v2095
      %2138 = vmatprep.subr.mxu0 0.0
      %2139 = vmatpush1.msra.mxu0 %v2094
      %2140 = vmatprep.subr.mxu0 0.0
      %2141 = vmatpush2.msra.mxu0 0.0
      %2142 = vmatprep.subr.mxu0 0.0
      %2143 = vmatpush2.msra.mxu0 0.0
      %2144 = vmatprep.subr.mxu0 0.0
      %2145 = vmatpush2.msra.mxu0 0.0
      %2146 = vmatprep.subr.mxu0 0.0
      %2147 = vmatpush2.msra.mxu0 0.0
      %2148 = vmatprep.subr.mxu0 0.0
      %2149 = vmatpush2.msra.mxu0 0.0
      %2150 = vmatprep.subr.mxu0 0.0
      %2151 = vmatpush2.msra.mxu0 0.0
      %2152 = vmatprep.subr.mxu0 0.0
      %2153 = vmatpush2.msra.mxu0 0.0
      %2154 = vmatprep.subr.mxu0 0.0
      %2155 = vmatpush2.msra.mxu0 0.0
      %2156 = vmatprep.subr.mxu0 0.0
      %2157 = vmatpush2.msra.mxu0 0.0
      %2158 = vmatprep.subr.mxu0 0.0
      %2159 = vmatpush2.msra.mxu0 0.0
      %2160 = vmatprep.subr.mxu0 0.0
      %2161 = vmatpush2.msra.mxu0 0.0
      %2162 = vmatprep.subr.mxu0 0.0
      %2163 = vmatpush2.msra.mxu0 0.0
      %2164 = vmatprep.subr.mxu0 0.0
      %2165 = vmatpush2.msra.mxu0 0.0
      %2166 = vmatprep.subr.mxu0 0.0
      %2167 = vmatpush2.msra.mxu0 0.0
      %2168 = vmatprep.subr.mxu0 0.0
      %2169 = vmatpush2.msra.mxu0 0.0
      %2170 = vmatprep.subr.mxu0 0.0
      %2171 = vmatpush2.msra.mxu0 0.0
      %2172 = vmatprep.mubr.f32.mxu0 0.0
      %2173 = vmatmul.mubr.f32.gmra.mxu0 %v2106
      %v2174 = vpop.f32.mrf.mxu0
      %v2175 = vadd.f32 %v2103, %v2174
      %v2176 = vpop.f32.mrf.mxu0
      %2177 = vdwg.mxu0
      %v2178 = vsub.f32 0.0, %v2175
      %v2179 = vmul.f32 %v2178, 1.442695
      %v2180 = vpow.pop %v2179
      %v2181 = vadd.f32 %v2180, 1.0
      %v2182 = vrcp.pop %v2181
      %v2183 = vmul.f32 0.9, %v2182
      %v2184 = vadd.f32 %v2183, 0.1
      %2186 = vrot.lane.b32.xlu0 %v457, 32
      %v2187 = vpop.permute.xlu0 %2186
      %v2189 = vmul.f32 %v2184, %v2187
      %2191 = vrot.lane.b32.xlu0 %v2189, 96
      %v2192 = vpop.permute.xlu0 %2191
      %v2194 = vadd.f32 %v2175, %v2192
      %v2195 = vlaneseq
      %v2196 = vshrl.u32 %v2195, 7
      %v2197 = vsub.s32 0, %v2196
      %v2198 = vrot.slane %v2194, %v2197
      %v2199 = vlaneseq
      %v2200 = vshrl.u32 %v2199, 7
      %v2201 = vsub.s32 1, %v2200
      %v2202 = vrot.slane %v2194, %v2201
      %v2203 = vld [vmem:[%s7] sm:$0xff]
      %v2204 = vld [vmem:[%s7 + $0x8] sm:$0xff]
      %v2205 = vld [vmem:[%s7 + $0x10] sm:$0xff]
      %v2206 = vld [vmem:[%s7 + $0x18] sm:$0xff]
      %s2207 = scalar_lea.vmem %s7, 32
      %v2208 = vld [vmem:[%s2207] sm:$0xff]
      %v2209 = vld [vmem:[%s2207 + $0x8] sm:$0xff]
      %v2210 = vld [vmem:[%s2207 + $0x10] sm:$0xff]
      %v2211 = vld [vmem:[%s2207 + $0x18] sm:$0xff]
      %v2213 = vsel %vm855, %v2198, 0
      %v2216 = vsel %vm855, %v2202, 0
      %2218 = vmatprep.subr.mxu0 0.0
      %2219 = vmatpush1.msra.mxu0 0.0
      %2220 = vmatprep.subr.mxu0 0.0
      %2221 = vmatpush1.msra.mxu0 0.0
      %2222 = vmatprep.subr.mxu0 0.0
      %2223 = vmatpush1.msra.mxu0 0.0
      %2224 = vmatprep.subr.mxu0 0.0
      %2225 = vmatpush1.msra.mxu0 0.0
      %2226 = vmatprep.subr.mxu0 0.0
      %2227 = vmatpush1.msra.mxu0 0.0
      %2228 = vmatprep.subr.mxu0 0.0
      %2229 = vmatpush1.msra.mxu0 0.0
      %2230 = vmatprep.subr.mxu0 0.0
      %2231 = vmatpush1.msra.mxu0 0.0
      %2232 = vmatprep.subr.mxu0 0.0
      %2233 = vmatpush1.msra.mxu0 0.0
      %2234 = vmatprep.subr.mxu0 0.0
      %2235 = vmatpush1.msra.mxu0 0.0
      %2236 = vmatprep.subr.mxu0 0.0
      %2237 = vmatpush1.msra.mxu0 0.0
      %2238 = vmatprep.subr.mxu0 0.0
      %2239 = vmatpush1.msra.mxu0 0.0
      %2240 = vmatprep.subr.mxu0 0.0
      %2241 = vmatpush1.msra.mxu0 0.0
      %2242 = vmatprep.subr.mxu0 0.0
      %2243 = vmatpush1.msra.mxu0 %v2211
      %2244 = vmatprep.subr.mxu0 0.0
      %2245 = vmatpush1.msra.mxu0 %v2210
      %2246 = vmatprep.subr.mxu0 0.0
      %2247 = vmatpush1.msra.mxu0 %v2209
      %2248 = vmatprep.subr.mxu0 0.0
      %2249 = vmatpush1.msra.mxu0 %v2208
      %2250 = vmatprep.subr.mxu0 0.0
      %2251 = vmatpush2.msra.mxu0 0.0
      %2252 = vmatprep.subr.mxu0 0.0
      %2253 = vmatpush2.msra.mxu0 0.0
      %2254 = vmatprep.subr.mxu0 0.0
      %2255 = vmatpush2.msra.mxu0 0.0
      %2256 = vmatprep.subr.mxu0 0.0
      %2257 = vmatpush2.msra.mxu0 0.0
      %2258 = vmatprep.subr.mxu0 0.0
      %2259 = vmatpush2.msra.mxu0 0.0
      %2260 = vmatprep.subr.mxu0 0.0
      %2261 = vmatpush2.msra.mxu0 0.0
      %2262 = vmatprep.subr.mxu0 0.0
      %2263 = vmatpush2.msra.mxu0 0.0
      %2264 = vmatprep.subr.mxu0 0.0
      %2265 = vmatpush2.msra.mxu0 0.0
      %2266 = vmatprep.subr.mxu0 0.0
      %2267 = vmatpush2.msra.mxu0 0.0
      %2268 = vmatprep.subr.mxu0 0.0
      %2269 = vmatpush2.msra.mxu0 0.0
      %2270 = vmatprep.subr.mxu0 0.0
      %2271 = vmatpush2.msra.mxu0 0.0
      %2272 = vmatprep.subr.mxu0 0.0
      %2273 = vmatpush2.msra.mxu0 0.0
      %2274 = vmatprep.subr.mxu0 0.0
      %2275 = vmatpush2.msra.mxu0 0.0
      %2276 = vmatprep.subr.mxu0 0.0
      %2277 = vmatpush2.msra.mxu0 0.0
      %2278 = vmatprep.subr.mxu0 0.0
      %2279 = vmatpush2.msra.mxu0 0.0
      %2280 = vmatprep.subr.mxu0 0.0
      %2281 = vmatpush2.msra.mxu0 0.0
      %2282 = vmatprep.mubr.f32.mxu0 0.0
      %2283 = vmatmul.mubr.f32.gmra.mxu0 %v2213
      %v2284 = vpop.f32.mrf.mxu0
      %v2285 = vadd.f32 0.0, %v2284
      %v2286 = vpop.f32.mrf.mxu0
      %2287 = vmatprep.mubr.f32.mxu0 0.0
      %2288 = vmatmul.mubr.f32.gmra.mxu0 %v2216
      %v2289 = vpop.f32.mrf.mxu0
      %v2290 = vadd.f32 0.0, %v2289
      %v2291 = vpop.f32.mrf.mxu0
      %2292 = vdwg.mxu0
      %v2294 = vsel %vm855, %v1516, 0
      %v2297 = vsel %vm855, %v2003, 0
      %2299 = vmatprep.subr.mxu0 0.0
      %2300 = vmatpush1.msra.mxu0 0.0
      %2301 = vmatprep.subr.mxu0 0.0
      %2302 = vmatpush1.msra.mxu0 0.0
      %2303 = vmatprep.subr.mxu0 0.0
      %2304 = vmatpush1.msra.mxu0 0.0
      %2305 = vmatprep.subr.mxu0 0.0
      %2306 = vmatpush1.msra.mxu0 0.0
      %2307 = vmatprep.subr.mxu0 0.0
      %2308 = vmatpush1.msra.mxu0 0.0
      %2309 = vmatprep.subr.mxu0 0.0
      %2310 = vmatpush1.msra.mxu0 0.0
      %2311 = vmatprep.subr.mxu0 0.0
      %2312 = vmatpush1.msra.mxu0 0.0
      %2313 = vmatprep.subr.mxu0 0.0
      %2314 = vmatpush1.msra.mxu0 0.0
      %2315 = vmatprep.subr.mxu0 0.0
      %2316 = vmatpush1.msra.mxu0 0.0
      %2317 = vmatprep.subr.mxu0 0.0
      %2318 = vmatpush1.msra.mxu0 0.0
      %2319 = vmatprep.subr.mxu0 0.0
      %2320 = vmatpush1.msra.mxu0 0.0
      %2321 = vmatprep.subr.mxu0 0.0
      %2322 = vmatpush1.msra.mxu0 0.0
      %2323 = vmatprep.subr.mxu0 0.0
      %2324 = vmatpush1.msra.mxu0 %v2206
      %2325 = vmatprep.subr.mxu0 0.0
      %2326 = vmatpush1.msra.mxu0 %v2205
      %2327 = vmatprep.subr.mxu0 0.0
      %2328 = vmatpush1.msra.mxu0 %v2204
      %2329 = vmatprep.subr.mxu0 0.0
      %2330 = vmatpush1.msra.mxu0 %v2203
      %2331 = vmatprep.subr.mxu0 0.0
      %2332 = vmatpush2.msra.mxu0 0.0
      %2333 = vmatprep.subr.mxu0 0.0
      %2334 = vmatpush2.msra.mxu0 0.0
      %2335 = vmatprep.subr.mxu0 0.0
      %2336 = vmatpush2.msra.mxu0 0.0
      %2337 = vmatprep.subr.mxu0 0.0
      %2338 = vmatpush2.msra.mxu0 0.0
      %2339 = vmatprep.subr.mxu0 0.0
      %2340 = vmatpush2.msra.mxu0 0.0
      %2341 = vmatprep.subr.mxu0 0.0
      %2342 = vmatpush2.msra.mxu0 0.0
      %2343 = vmatprep.subr.mxu0 0.0
      %2344 = vmatpush2.msra.mxu0 0.0
      %2345 = vmatprep.subr.mxu0 0.0
      %2346 = vmatpush2.msra.mxu0 0.0
      %2347 = vmatprep.subr.mxu0 0.0
      %2348 = vmatpush2.msra.mxu0 0.0
      %2349 = vmatprep.subr.mxu0 0.0
      %2350 = vmatpush2.msra.mxu0 0.0
      %2351 = vmatprep.subr.mxu0 0.0
      %2352 = vmatpush2.msra.mxu0 0.0
      %2353 = vmatprep.subr.mxu0 0.0
      %2354 = vmatpush2.msra.mxu0 0.0
      %2355 = vmatprep.subr.mxu0 0.0
      %2356 = vmatpush2.msra.mxu0 0.0
      %2357 = vmatprep.subr.mxu0 0.0
      %2358 = vmatpush2.msra.mxu0 0.0
      %2359 = vmatprep.subr.mxu0 0.0
      %2360 = vmatpush2.msra.mxu0 0.0
      %2361 = vmatprep.subr.mxu0 0.0
      %2362 = vmatpush2.msra.mxu0 0.0
      %2363 = vmatprep.mubr.f32.mxu0 0.0
      %2364 = vmatmul.mubr.f32.gmra.mxu0 %v2294
      %v2365 = vpop.f32.mrf.mxu0
      %v2366 = vadd.f32 %v2285, %v2365
      %v2367 = vpop.f32.mrf.mxu0
      %2368 = vmatprep.mubr.f32.mxu0 0.0
      %2369 = vmatmul.mubr.f32.gmra.mxu0 %v2297
      %v2370 = vpop.f32.mrf.mxu0
      %v2371 = vadd.f32 %v2290, %v2370
      %v2372 = vpop.f32.mrf.mxu0
      %2373 = vdwg.mxu0
      %v2374 = vld [vmem:[%s4] sm:$0x7]
      %v2376 = vsel %vm667, %v2374, 0
      %2378 = vmatprep.subr.mxu0 0.0
      %2379 = vmatpush1.msra.mxu0 0.0
      %2380 = vmatprep.subr.mxu0 0.0
      %2381 = vmatpush1.msra.mxu0 0.0
      %2382 = vmatprep.subr.mxu0 0.0
      %2383 = vmatpush1.msra.mxu0 0.0
      %2384 = vmatprep.subr.mxu0 0.0
      %2385 = vmatpush1.msra.mxu0 0.0
      %2386 = vmatprep.subr.mxu0 0.0
      %2387 = vmatpush1.msra.mxu0 0.0
      %2388 = vmatprep.subr.mxu0 0.0
      %2389 = vmatpush1.msra.mxu0 0.0
      %2390 = vmatprep.subr.mxu0 0.0
      %2391 = vmatpush1.msra.mxu0 0.0
      %2392 = vmatprep.subr.mxu0 0.0
      %2393 = vmatpush1.msra.mxu0 0.0
      %2394 = vmatprep.subr.mxu0 0.0
      %2395 = vmatpush1.msra.mxu0 0.0
      %2396 = vmatprep.subr.mxu0 0.0
      %2397 = vmatpush1.msra.mxu0 0.0
      %2398 = vmatprep.subr.mxu0 0.0
      %2399 = vmatpush1.msra.mxu0 0.0
      %2400 = vmatprep.subr.mxu0 0.0
      %2401 = vmatpush1.msra.mxu0 0.0
      %2402 = vmatprep.subr.mxu0 0.0
      %2403 = vmatpush1.msra.mxu0 0.0
      %2404 = vmatprep.subr.mxu0 0.0
      %2405 = vmatpush1.msra.mxu0 0.0
      %2406 = vmatprep.subr.mxu0 0.0
      %2407 = vmatpush1.msra.mxu0 0.0
      %2408 = vmatprep.subr.mxu0 0.0
      %2409 = vmatpush1.msra.mxu0 %v2376
      %2410 = vmatprep.subr.mxu0 0.0
      %2411 = vmatpush2.msra.mxu0 0.0
      %2412 = vmatprep.subr.mxu0 0.0
      %2413 = vmatpush2.msra.mxu0 0.0
      %2414 = vmatprep.subr.mxu0 0.0
      %2415 = vmatpush2.msra.mxu0 0.0
      %2416 = vmatprep.subr.mxu0 0.0
      %2417 = vmatpush2.msra.mxu0 0.0
      %2418 = vmatprep.subr.mxu0 0.0
      %2419 = vmatpush2.msra.mxu0 0.0
      %2420 = vmatprep.subr.mxu0 0.0
      %2421 = vmatpush2.msra.mxu0 0.0
      %2422 = vmatprep.subr.mxu0 0.0
      %2423 = vmatpush2.msra.mxu0 0.0
      %2424 = vmatprep.subr.mxu0 0.0
      %2425 = vmatpush2.msra.mxu0 0.0
      %2426 = vmatprep.subr.mxu0 0.0
      %2427 = vmatpush2.msra.mxu0 0.0
      %2428 = vmatprep.subr.mxu0 0.0
      %2429 = vmatpush2.msra.mxu0 0.0
      %2430 = vmatprep.subr.mxu0 0.0
      %2431 = vmatpush2.msra.mxu0 0.0
      %2432 = vmatprep.subr.mxu0 0.0
      %2433 = vmatpush2.msra.mxu0 0.0
      %2434 = vmatprep.subr.mxu0 0.0
      %2435 = vmatpush2.msra.mxu0 0.0
      %2436 = vmatprep.subr.mxu0 0.0
      %2437 = vmatpush2.msra.mxu0 0.0
      %2438 = vmatprep.subr.mxu0 0.0
      %2439 = vmatpush2.msra.mxu0 0.0
      %2440 = vmatprep.subr.mxu0 0.0
      %2441 = vmatpush2.msra.mxu0 0.0
      %2442 = vmatprep.mubr.f32.mxu0 0.0
      %2443 = vmatmul.mubr.f32.gmra.mxu0 %v662
      %v2444 = vpop.f32.mrf.mxu0
      %v2445 = vadd.f32 0.0, %v2444
      %v2446 = vpop.f32.mrf.mxu0
      %2447 = vmatprep.mubr.f32.mxu0 0.0
      %2448 = vmatmul.mubr.f32.gmra.mxu0 %v665
      %v2449 = vpop.f32.mrf.mxu0
      %v2450 = vadd.f32 0.0, %v2449
      %v2451 = vpop.f32.mrf.mxu0
      %2452 = vdwg.mxu0
      %v2453 = vadd.f32 %v2366, %v2445
      %v2454 = vadd.f32 %v2371, %v2450
      %v2455 = vld [vmem:[%s10] sm:$0x1]
      %v2457 = vlaneseq
      %v2458 = vshrl.u32 %v2457, 7
      %v2459 = vsub.s32 0, %v2458
      %v2460 = vrot.slane %v2455, %v2459
      %v2462 = vadd.f32 %v2453, %v2460
      %v2463 = vadd.f32 %v2454, %v2460
      %v2464 = vmax.f32 %v2462, 0.0
      %v2465 = vmax.f32 %v2463, 0.0
      %s2466 = scalar_lea.vmem %s7, 64
      %v2467 = vld [vmem:[%s2466] sm:$0xff]
      %v2468 = vld [vmem:[%s2466 + $0x8] sm:$0xff]
      %v2469 = vld [vmem:[%s2466 + $0x10] sm:$0xff]
      %v2470 = vld [vmem:[%s2466 + $0x18] sm:$0xff]
      %v2471 = vld [vmem:[%s10 + $0x1] sm:$0x1]
      %v2473 = vlaneseq
      %v2474 = vshrl.u32 %v2473, 7
      %v2475 = vsub.s32 0, %v2474
      %v2476 = vrot.slane %v2471, %v2475
      %v2479 = vsel %vm855, %v2464, 0
      %v2482 = vsel %vm855, %v2465, 0
      %2484 = vmatprep.subr.mxu0 0.0
      %2485 = vmatpush1.msra.mxu0 0.0
      %2486 = vmatprep.subr.mxu0 0.0
      %2487 = vmatpush1.msra.mxu0 0.0
      %2488 = vmatprep.subr.mxu0 0.0
      %2489 = vmatpush1.msra.mxu0 0.0
      %2490 = vmatprep.subr.mxu0 0.0
      %2491 = vmatpush1.msra.mxu0 0.0
      %2492 = vmatprep.subr.mxu0 0.0
      %2493 = vmatpush1.msra.mxu0 0.0
      %2494 = vmatprep.subr.mxu0 0.0
      %2495 = vmatpush1.msra.mxu0 0.0
      %2496 = vmatprep.subr.mxu0 0.0
      %2497 = vmatpush1.msra.mxu0 0.0
      %2498 = vmatprep.subr.mxu0 0.0
      %2499 = vmatpush1.msra.mxu0 0.0
      %2500 = vmatprep.subr.mxu0 0.0
      %2501 = vmatpush1.msra.mxu0 0.0
      %2502 = vmatprep.subr.mxu0 0.0
      %2503 = vmatpush1.msra.mxu0 0.0
      %2504 = vmatprep.subr.mxu0 0.0
      %2505 = vmatpush1.msra.mxu0 0.0
      %2506 = vmatprep.subr.mxu0 0.0
      %2507 = vmatpush1.msra.mxu0 0.0
      %2508 = vmatprep.subr.mxu0 0.0
      %2509 = vmatpush1.msra.mxu0 %v2470
      %2510 = vmatprep.subr.mxu0 0.0
      %2511 = vmatpush1.msra.mxu0 %v2469
      %2512 = vmatprep.subr.mxu0 0.0
      %2513 = vmatpush1.msra.mxu0 %v2468
      %2514 = vmatprep.subr.mxu0 0.0
      %2515 = vmatpush1.msra.mxu0 %v2467
      %2516 = vmatprep.subr.mxu0 0.0
      %2517 = vmatpush2.msra.mxu0 0.0
      %2518 = vmatprep.subr.mxu0 0.0
      %2519 = vmatpush2.msra.mxu0 0.0
      %2520 = vmatprep.subr.mxu0 0.0
      %2521 = vmatpush2.msra.mxu0 0.0
      %2522 = vmatprep.subr.mxu0 0.0
      %2523 = vmatpush2.msra.mxu0 0.0
      %2524 = vmatprep.subr.mxu0 0.0
      %2525 = vmatpush2.msra.mxu0 0.0
      %2526 = vmatprep.subr.mxu0 0.0
      %2527 = vmatpush2.msra.mxu0 0.0
      %2528 = vmatprep.subr.mxu0 0.0
      %2529 = vmatpush2.msra.mxu0 0.0
      %2530 = vmatprep.subr.mxu0 0.0
      %2531 = vmatpush2.msra.mxu0 0.0
      %2532 = vmatprep.subr.mxu0 0.0
      %2533 = vmatpush2.msra.mxu0 0.0
      %2534 = vmatprep.subr.mxu0 0.0
      %2535 = vmatpush2.msra.mxu0 0.0
      %2536 = vmatprep.subr.mxu0 0.0
      %2537 = vmatpush2.msra.mxu0 0.0
      %2538 = vmatprep.subr.mxu0 0.0
      %2539 = vmatpush2.msra.mxu0 0.0
      %2540 = vmatprep.subr.mxu0 0.0
      %2541 = vmatpush2.msra.mxu0 0.0
      %2542 = vmatprep.subr.mxu0 0.0
      %2543 = vmatpush2.msra.mxu0 0.0
      %2544 = vmatprep.subr.mxu0 0.0
      %2545 = vmatpush2.msra.mxu0 0.0
      %2546 = vmatprep.subr.mxu0 0.0
      %2547 = vmatpush2.msra.mxu0 0.0
      %2548 = vmatprep.mubr.f32.mxu0 0.0
      %2549 = vmatmul.mubr.f32.gmra.mxu0 %v2479
      %v2550 = vpop.f32.mrf.mxu0
      %v2551 = vadd.f32 %v2476, %v2550
      %v2552 = vpop.f32.mrf.mxu0
      %2553 = vmatprep.mubr.f32.mxu0 0.0
      %2554 = vmatmul.mubr.f32.gmra.mxu0 %v2482
      %v2555 = vpop.f32.mrf.mxu0
      %v2556 = vadd.f32 %v2476, %v2555
      %v2557 = vpop.f32.mrf.mxu0
      %2558 = vdwg.mxu0
      %v2559 = vmax.f32 %v2551, 0.0
      %v2560 = vmax.f32 %v2556, 0.0
      %v2561 = vld [vmem:[%s6] sm:$0xff]
      %v2562 = vld [vmem:[%s6 + $0x8] sm:$0xff]
      %v2563 = vld [vmem:[%s6 + $0x10] sm:$0xff]
      %v2564 = vld [vmem:[%s6 + $0x18] sm:$0xff]
      %v2565 = vld [vmem:[%s10 + $0x2] sm:$0x1]
      %v2567 = vlaneseq
      %v2568 = vshrl.u32 %v2567, 7
      %v2569 = vsub.s32 0, %v2568
      %v2570 = vrot.slane %v2565, %v2569
      %v2573 = vsel %vm855, %v2559, 0
      %v2576 = vsel %vm855, %v2560, 0
      %2578 = vmatprep.subr.mxu0 0.0
      %2579 = vmatpush1.msra.mxu0 0.0
      %2580 = vmatprep.subr.mxu0 0.0
      %2581 = vmatpush1.msra.mxu0 0.0
      %2582 = vmatprep.subr.mxu0 0.0
      %2583 = vmatpush1.msra.mxu0 0.0
      %2584 = vmatprep.subr.mxu0 0.0
      %2585 = vmatpush1.msra.mxu0 0.0
      %2586 = vmatprep.subr.mxu0 0.0
      %2587 = vmatpush1.msra.mxu0 0.0
      %2588 = vmatprep.subr.mxu0 0.0
      %2589 = vmatpush1.msra.mxu0 0.0
      %2590 = vmatprep.subr.mxu0 0.0
      %2591 = vmatpush1.msra.mxu0 0.0
      %2592 = vmatprep.subr.mxu0 0.0
      %2593 = vmatpush1.msra.mxu0 0.0
      %2594 = vmatprep.subr.mxu0 0.0
      %2595 = vmatpush1.msra.mxu0 0.0
      %2596 = vmatprep.subr.mxu0 0.0
      %2597 = vmatpush1.msra.mxu0 0.0
      %2598 = vmatprep.subr.mxu0 0.0
      %2599 = vmatpush1.msra.mxu0 0.0
      %2600 = vmatprep.subr.mxu0 0.0
      %2601 = vmatpush1.msra.mxu0 0.0
      %2602 = vmatprep.subr.mxu0 0.0
      %2603 = vmatpush1.msra.mxu0 %v2564
      %2604 = vmatprep.subr.mxu0 0.0
      %2605 = vmatpush1.msra.mxu0 %v2563
      %2606 = vmatprep.subr.mxu0 0.0
      %2607 = vmatpush1.msra.mxu0 %v2562
      %2608 = vmatprep.subr.mxu0 0.0
      %2609 = vmatpush1.msra.mxu0 %v2561
      %2610 = vmatprep.subr.mxu0 0.0
      %2611 = vmatpush2.msra.mxu0 0.0
      %2612 = vmatprep.subr.mxu0 0.0
      %2613 = vmatpush2.msra.mxu0 0.0
      %2614 = vmatprep.subr.mxu0 0.0
      %2615 = vmatpush2.msra.mxu0 0.0
      %2616 = vmatprep.subr.mxu0 0.0
      %2617 = vmatpush2.msra.mxu0 0.0
      %2618 = vmatprep.subr.mxu0 0.0
      %2619 = vmatpush2.msra.mxu0 0.0
      %2620 = vmatprep.subr.mxu0 0.0
      %2621 = vmatpush2.msra.mxu0 0.0
      %2622 = vmatprep.subr.mxu0 0.0
      %2623 = vmatpush2.msra.mxu0 0.0
      %2624 = vmatprep.subr.mxu0 0.0
      %2625 = vmatpush2.msra.mxu0 0.0
      %2626 = vmatprep.subr.mxu0 0.0
      %2627 = vmatpush2.msra.mxu0 0.0
      %2628 = vmatprep.subr.mxu0 0.0
      %2629 = vmatpush2.msra.mxu0 0.0
      %2630 = vmatprep.subr.mxu0 0.0
      %2631 = vmatpush2.msra.mxu0 0.0
      %2632 = vmatprep.subr.mxu0 0.0
      %2633 = vmatpush2.msra.mxu0 0.0
      %2634 = vmatprep.subr.mxu0 0.0
      %2635 = vmatpush2.msra.mxu0 0.0
      %2636 = vmatprep.subr.mxu0 0.0
      %2637 = vmatpush2.msra.mxu0 0.0
      %2638 = vmatprep.subr.mxu0 0.0
      %2639 = vmatpush2.msra.mxu0 0.0
      %2640 = vmatprep.subr.mxu0 0.0
      %2641 = vmatpush2.msra.mxu0 0.0
      %2642 = vmatprep.mubr.f32.mxu0 0.0
      %2643 = vmatmul.mubr.f32.gmra.mxu0 %v2573
      %v2644 = vpop.f32.mrf.mxu0
      %v2645 = vadd.f32 %v2570, %v2644
      %v2646 = vpop.f32.mrf.mxu0
      %2647 = vmatprep.mubr.f32.mxu0 0.0
      %2648 = vmatmul.mubr.f32.gmra.mxu0 %v2576
      %v2649 = vpop.f32.mrf.mxu0
      %v2650 = vadd.f32 %v2570, %v2649
      %v2651 = vpop.f32.mrf.mxu0
      %2652 = vdwg.mxu0
      %v2653 = vmax.f32 %v2645, 0.0
      %v2654 = vmax.f32 %v2650, 0.0
      %v2655 = vand.u32 2147483647, %v2645
      %v2656 = vand.u32 2147483647, %v2650
      %v2657 = vsub.f32 0.0, %v2655
      %v2658 = vsub.f32 0.0, %v2656
      %v2659 = vmul.f32 %v2657, 1.442695
      %v2660 = vpow.pop %v2659
      %v2661 = vmul.f32 %v2658, 1.442695
      %v2662 = vpow.pop %v2661
      %v2663 = vadd.f32 %v2660, 1.0
      %v2664 = vadd.f32 %v2662, 1.0
      %v2665 = vlog2.pop %v2663
      %v2666 = vmul.f32 %v2665, 0.6931472
      %v2667 = vlog2.pop %v2664
      %v2668 = vmul.f32 %v2667, 0.6931472
      %v2669 = vadd.f32 %v2653, %v2666
      %v2670 = vadd.f32 %v2654, %v2668
      %v2671 = vmul.f32 %v2669, 0.9
      %v2672 = vmul.f32 %v2670, 0.9
      %v2673 = vadd.f32 %v2671, 0.1
      %v2674 = vadd.f32 %v2672, 0.1
      %vm2675 = vcmask 7168
      %v2676 = vsel %vm2675, %v2645, %v2673
      %v2677 = vsel %vm2675, %v2650, %v2674
      %vm2678 = vcmask 15360
      %2679 = vst.msk [vmem:[%s449] sm:$0xff] %vm2678, %v2676
      %2680 = vst.msk [vmem:[%s449 + $0x8] sm:$0xff] %vm2678, %v2677
      %s2681 = smul.u32 2, %s22
      %p2682 = scmp.lt.s32.totalorder %s2681, 3
      %s2683 = scalar_select %p2682, %s2681, 3
      %s2684 = smul.addr %s2683, 8
      %s2685 = scalar_lea.vmem %s11, %s2684
      // Predicated region
      $region65: #{_lambda_.1} parent=63 // pred_check
        %p2686 = pneg %p291
      $region66: #{_lambda_.1} parent=63 // pred_check_branch
        %2688 = sbr.rel (%p2686) target = $region68
      $region67: #{_lambda_.1} parent=63 // pred_region
        %s2689 = smul.u32 2, %s22
      $region68: #{_lambda_.1} parent=63 // pred_fallthru
        _
    $region64: #{_lambda_.1} parent=5 // pred_fallthru
      _
    %p2690 = scmp.le.s32.totalorder 2, %s17
    // Predicated region
    $region69: #{_lambda_.1} parent=5 // pred_check
      %p2691 = pneg %p2690
    $region70: #{_lambda_.1} parent=5 // pred_check_branch
      %2693 = sbr.rel (%p2691) target = $region72
    $region71: #{_lambda_.1} parent=5 // pred_region
      %s2694 = ssub.s32 %s17, 2
      // Predicated region
      $region73: #{_lambda_.1} parent=71 // pred_check
        %p2695 = pneg %p297
      $region74: #{_lambda_.1} parent=71 // pred_check_branch
        %2697 = sbr.rel (%p2695) target = $region76
      $region75: #{_lambda_.1} parent=71 // pred_region
        %s2698 = smul.u32 2, %s23
        %p2699 = scmp.lt.s32.totalorder %s2698, 3
        %s2700 = scalar_select %p2699, %s2698, 3
        %s2701 = smul.addr %s2700, 8
        %s2702 = scalar_lea.vmem %s11, %s2701
      $region76: #{_lambda_.1} parent=71 // pred_fallthru
        _
    $region72: #{_lambda_.1} parent=5 // pred_fallthru
      _
  $region6: #{_lambda_.1} parent=0 // loop_footer
    %s21 = sadd.s32 1, %s17
  $region7: #{_lambda_.1} parent=0 // loop_footer_branch
    %16 = sbr.rel target = $region3
  $region8: #{_lambda_.1} parent=0 // loop_exit
    _

</llo_original>
